<compile_context>
chip_gen: v7x
topology: tpu7x:2x2x1
jax: 0.10.0
libtpu: 0.0.40
codegen_flags: <defaults>
</compile_context>

<pallas_src>
import jax
import jax.numpy as jnp
from jax.experimental import pallas as pl
from jax.experimental.pallas import tpu as pltpu


# ----------------------------------------------------------------------------
# Fused Pallas kernel: both bidirectional LSTM layers + tanh + FC head
# ----------------------------------------------------------------------------
def _textrnn_kernel(xx_ref, wih0_ref, b0_ref, whh0_ref,
                    wih1f_ref, wih1b_ref, b1_ref, whh1f_ref,
                    wfc_ref, bfc_ref, out_ref, l0f_scr, l0b_scr):
    f32 = jnp.float32
    TB, H2 = xx_ref.shape
    H = H2 // 2
    B = out_ref.shape[0]
    T = TB // B
    G2, G4, G8 = 2 * H, 4 * H, 8 * H

    # ---- Gate-activation helpers: iota/mask built ONCE (hoisted), not per cell.
    def make_act(width, g_lo, g_hi):
        if H < 128:
            # Tiny H: slices would be sub-vreg; one full-width sigmoid + tanh
            # (EUP) and a lane-mask select is cheaper.
            lane = jax.lax.broadcasted_iota(jnp.int32, (B, width), 1)
            g_mask = (lane >= g_lo) & (lane < g_hi)

            def act(gates):
                return jnp.where(g_mask, jnp.tanh(gates), jax.nn.sigmoid(gates))
        else:
            # Realistic H (multiple of 128): sliced activations -- sigmoid over
            # the contiguous i/f lanes and o lanes, tanh over g (half the EUP
            # work of the mask trick).
            def act(gates):
                return jnp.concatenate(
                    [jax.nn.sigmoid(gates[:, :g_lo]),
                     jnp.tanh(gates[:, g_lo:g_hi]),
                     jax.nn.sigmoid(gates[:, g_hi:])], axis=1)
        return act

    act0 = make_act(G8, 2 * G2, 3 * G2)   # layer 0 (both dirs): g lanes [4H, 6H)
    act1 = make_act(G4, 2 * H, 3 * H)     # layer 1 (one dir):   g lanes [2H, 3H)

    def lstm_step(gates, c_prev, hd, act):
        """Gate layout along lanes: [i | f | g | o], each `hd` wide."""
        a = act(gates)
        i_g = a[:, 0 * hd:1 * hd]
        f_g = a[:, 1 * hd:2 * hd]
        g_g = a[:, 2 * hd:3 * hd]
        o_g = a[:, 3 * hd:4 * hd]
        c_new = f_g * c_prev + i_g * g_g
        return o_g * jnp.tanh(c_new), c_new

    # ---- Layer-0 input projection for BOTH directions: one stacked matmul.
    # Row block s of the result holds, gate-interleaved
    # [i_f i_b | f_f f_b | g_f g_b | o_f o_b], the fwd gates at time s and the
    # bwd gates at time T-1-s.
    gx0 = (jnp.dot(xx_ref[...], wih0_ref[...], preferred_element_type=f32)
           + b0_ref[...])                                          # (T*B, 8H)

    # ---- Layer 0: fwd + bwd recurrences fused; one block-diag dot per step.
    whh0 = whh0_ref[...]                                           # (2H, 8H) resident
    h = jnp.zeros((B, G2), f32)                                    # [h_fwd | h_bwd]
    c = jnp.zeros((B, G2), f32)
    for s in range(T):
        gates = (gx0[s * B:(s + 1) * B, :]
                 + jnp.dot(h, whh0, preferred_element_type=f32))
        h, c = lstm_step(gates, c, G2, act0)
        # Stash outputs in TIME order into the slabs feeding the stacked
        # layer-1 projection (off the recurrent critical path).
        l0f_scr[s * B:(s + 1) * B, :] = h[:, :H]                   # fwd, time s
        l0b_scr[(T - 1 - s) * B:(T - s) * B, :] = h[:, H:]         # bwd, time T-1-s

    # ---- Layer-1 input projection: TWO stacked (T*B,H)@(H,8H) matmuls.
    # Lane layout: [layer-1-fwd gates 4H | layer-1-bwd gates 4H], time-ordered.
    gx1 = (jnp.dot(l0f_scr[...], wih1f_ref[...], preferred_element_type=f32)
           + jnp.dot(l0b_scr[...], wih1b_ref[...], preferred_element_type=f32)
           + b1_ref[...])                                          # (T*B, 8H)

    # ---- Layer 1, forward direction: full recurrence.
    whh1f = whh1f_ref[...]                                         # (H, 4H) resident
    h1f = jnp.zeros((B, H), f32)
    c1f = jnp.zeros((B, H), f32)
    for s in range(T):
        gates = (gx1[s * B:(s + 1) * B, :G4]
                 + jnp.dot(h1f, whh1f, preferred_element_type=f32))
        h1f, c1f = lstm_step(gates, c1f, H, act1)

    # ---- Layer 1, backward direction: single cell at t = T-1 (zero state).
    h1b, _ = lstm_step(gx1[(T - 1) * B:T * B, G4:],
                       jnp.zeros((B, H), f32), H, act1)

    # ---- tanh + Linear head (FC weight split avoids an unaligned lane concat).
    wfc = wfc_ref[...]                                             # (2H, C)
    logits = (jnp.dot(jnp.tanh(h1f), wfc[:H, :], preferred_element_type=f32)
              + jnp.dot(jnp.tanh(h1b), wfc[H:, :], preferred_element_type=f32)
              + bfc_ref[...])
    out_ref[...] = logits.astype(out_ref.dtype)


# ----------------------------------------------------------------------------
# Wrapper
# ----------------------------------------------------------------------------
@jax.jit
def text_rnn_forward(x, packed):
    """x: (B, T, H) batch-first (matches PyTorch). Returns logits (B, C)."""
    B, T, H = x.shape
    C = packed["w_fc"].shape[1]

    # Time-major slab whose row block t is [x(t) | x(T-1-t)]: pure layout work
    # (transpose + flip + concat) that XLA fuses with the transpose it already
    # performs; the wide 8H-gate projection itself happens inside the kernel,
    # so gx0 never round-trips through HBM.
    xs = jnp.transpose(x, (1, 0, 2))                               # (T, B, H)
    xx = jnp.concatenate([xs, jnp.flip(xs, axis=0)], axis=-1).reshape(T * B, 2 * H)

    args = (xx, packed["wih0"], packed["b0"], packed["whh0"],
            packed["wih1_f"], packed["wih1_b"], packed["b1"], packed["whh1_f"],
            packed["w_fc"], packed["b_fc"])

    flops = (2 * T * B * (2 * H) * (8 * H)       # layer-0 input projection
             + T * 2 * B * (2 * H) * (8 * H)     # layer-0 fused recurrence
             + 2 * 2 * T * B * H * (8 * H)       # layer-1 input projection
             + T * 2 * B * H * (4 * H)           # layer-1 forward recurrence
             + 2 * 2 * B * H * C)                # head
    transcendentals = (T * B * (2 * 8 * H + 2 * H)
                       + (T + 1) * B * (2 * 4 * H + H)
                       + B * 2 * H)
    bytes_accessed = sum(int(a.size) * 4 for a in args) + B * C * 4

    vmem = pltpu.MemorySpace.VMEM
    return pl.pallas_call(
        _textrnn_kernel,
        out_shape=jax.ShapeDtypeStruct((B, C), jnp.float32),
        in_specs=[pl.BlockSpec(memory_space=vmem) for _ in args],
        out_specs=pl.BlockSpec(memory_space=vmem),
        scratch_shapes=[pltpu.VMEM((T * B, H), jnp.float32),   # layer-0 fwd outputs
                        pltpu.VMEM((T * B, H), jnp.float32)],  # layer-0 bwd outputs
        compiler_params=pltpu.CompilerParams(vmem_limit_bytes=32 * 1024 * 1024),
        cost_estimate=pl.CostEstimate(flops=int(flops),
                                      transcendentals=int(transcendentals),
                                      bytes_accessed=int(bytes_accessed)),
    )(*args)


# ----------------------------------------------------------------------------
# Parameter construction (PyTorch-style uniform(-1/sqrt(H), 1/sqrt(H)))
# ----------------------------------------------------------------------------
def init_params(key, hidden_size, num_classes):
    H = hidden_size
    bound = 1.0 / jnp.sqrt(jnp.float32(H))
    keys = iter(jax.random.split(key, 32))

    def uni(shape):
        return jax.random.uniform(next(keys), shape, jnp.float32, -bound, bound)

    def lstm_dir(d_in):
        # Stored transposed vs PyTorch: w_ih (d_in, 4H), w_hh (H, 4H),
        # bias = b_ih + b_hh (1, 4H); gate order [i | f | g | o].
        return {"w_ih": uni((d_in, 4 * H)), "w_hh": uni((H, 4 * H)),
                "b": uni((1, 4 * H)) + uni((1, 4 * H))}

    return {"l0f": lstm_dir(H), "l0b": lstm_dir(H),
            "l1f": lstm_dir(2 * H), "l1b": lstm_dir(2 * H),
            "w_fc": uni((2 * H, num_classes)), "b_fc": uni((1, num_classes))}


def pack_params(raw, H):
    """Rearrange per-direction LSTM weights into the kernel's fused layouts."""

    def interleave_gates(wf, wb):
        # (R,4H) x2, gate blocks [i|f|g|o] -> (R,8H) per-gate interleaved
        # [i_f i_b | f_f f_b | g_f g_b | o_f o_b].
        cols = []
        for k in range(4):
            cols.append(wf[:, k * H:(k + 1) * H])
            cols.append(wb[:, k * H:(k + 1) * H])
        return jnp.concatenate(cols, axis=1)

    def blockdiag_interleave(wf, wb):
        # (R,4H) x2 -> (2R,8H): rows [0:R] feed only the fwd lanes, rows [R:2R]
        # only the bwd lanes (zeros elsewhere), gate-interleaved as above.
        R = wf.shape[0]
        z = jnp.zeros((R, H), wf.dtype)
        cols = []
        for k in range(4):
            cols.append(jnp.concatenate([wf[:, k * H:(k + 1) * H], z], axis=0))
            cols.append(jnp.concatenate([z, wb[:, k * H:(k + 1) * H]], axis=0))
        return jnp.concatenate(cols, axis=1)

    l0f, l0b, l1f, l1b = raw["l0f"], raw["l0b"], raw["l1f"], raw["l1b"]
    return {
        # Layer 0: fused input weight for the [x(t) | x(T-1-t)] slab and fused
        # block-diagonal recurrent weight for the [h_fwd | h_bwd] state.
        "wih0": blockdiag_interleave(l0f["w_ih"], l0b["w_ih"]),   # (2H, 8H)
        "b0":   interleave_gates(l0f["b"], l0b["b"]),             # (1, 8H)
        "whh0": blockdiag_interleave(l0f["w_hh"], l0b["w_hh"]),   # (2H, 8H)
        # Layer 1: input weights split by which half of the layer-0 output they
        # multiply, fused along the gate axis [l1-fwd 4H | l1-bwd 4H].
        "wih1_f": jnp.concatenate([l1f["w_ih"][:H], l1b["w_ih"][:H]], axis=1),  # (H, 8H)
        "wih1_b": jnp.concatenate([l1f["w_ih"][H:], l1b["w_ih"][H:]], axis=1),  # (H, 8H)
        "b1":     jnp.concatenate([l1f["b"], l1b["b"]], axis=1),                # (1, 8H)
        "whh1_f": l1f["w_hh"],                                                  # (H, 4H)
        # l1b["w_hh"] intentionally absent: the head reads only the last
        # timestep, for which the backward direction starts from a zero state.
        "w_fc": raw["w_fc"],                                                    # (2H, C)
        "b_fc": raw["b_fc"],                                                    # (1, C)
    }


# ----------------------------------------------------------------------------
# Pure-JAX reference (from the RAW per-direction weights), for validation
# ----------------------------------------------------------------------------
def _reference_forward(x, raw):
    B, T, H = x.shape

    def cell(gates, c):
        i = jax.nn.sigmoid(gates[:, 0 * H:1 * H])
        f = jax.nn.sigmoid(gates[:, 1 * H:2 * H])
        g = jnp.tanh(gates[:, 2 * H:3 * H])
        o = jax.nn.sigmoid(gates[:, 3 * H:4 * H])
        c = f * c + i * g
        return o * jnp.tanh(c), c

    def run_dir(seq, p, reverse):
        order = list(reversed(range(T))) if reverse else list(range(T))
        h = jnp.zeros((B, H), jnp.float32)
        c = jnp.zeros((B, H), jnp.float32)
        out = [None] * T
        for t in order:
            h, c = cell(seq[t] @ p["w_ih"] + h @ p["w_hh"] + p["b"], c)
            out[t] = h
        return out

    xs = [x[:, t, :] for t in range(T)]
    of = run_dir(xs, raw["l0f"], False)
    ob = run_dir(xs, raw["l0b"], True)
    l0 = [jnp.concatenate([of[t], ob[t]], axis=1) for t in range(T)]
    o1f = run_dir(l0, raw["l1f"], False)
    o1b = run_dir(l0, raw["l1b"], True)        # full bwd recurrence (validates shortcut)
    feat = jnp.tanh(jnp.concatenate([o1f[T - 1], o1b[T - 1]], axis=1))
    return feat @ raw["w_fc"] + raw["b_fc"]


# ----------------------------------------------------------------------------
# Main
# ----------------------------------------------------------------------------
if __name__ == "__main__":
    B, T, H, C = 2, 8, 32, 4   # batch, seq_len, hidden_size, num_labels

    root = jax.random.PRNGKey(0)
    k_x, k_p = jax.random.split(root)

    x = jax.random.normal(k_x, (B, T, H), dtype=jnp.float32)
    raw = init_params(k_p, H, C)
    packed = pack_params(raw, H)

    logits = jax.block_until_ready(text_rnn_forward(x, packed))
    assert logits.shape == (B, C), logits.shape
    assert bool(jnp.all(jnp.isfinite(logits)))

    ref = jax.block_until_ready(_reference_forward(x, raw))
    assert jnp.allclose(logits, ref, atol=1e-3, rtol=1e-3), (
        float(jnp.max(jnp.abs(logits - ref))))

    print("KERNEL_OK")
</pallas_src>

<mosaic_0001>
module attributes {stable_mosaic.version = 11 : i64} {
  func.func @_textrnn_kernel(%arg0: memref<16x64xf32, #tpu.memory_space<vmem>>, %arg1: memref<64x256xf32, #tpu.memory_space<vmem>>, %arg2: memref<1x256xf32, #tpu.memory_space<vmem>>, %arg3: memref<64x256xf32, #tpu.memory_space<vmem>>, %arg4: memref<32x256xf32, #tpu.memory_space<vmem>>, %arg5: memref<32x256xf32, #tpu.memory_space<vmem>>, %arg6: memref<1x256xf32, #tpu.memory_space<vmem>>, %arg7: memref<32x128xf32, #tpu.memory_space<vmem>>, %arg8: memref<64x4xf32, #tpu.memory_space<vmem>>, %arg9: memref<1x4xf32, #tpu.memory_space<vmem>>, %arg10: memref<2x4xf32, #tpu.memory_space<vmem>>, %arg11: memref<16x32xf32, #tpu.memory_space<vmem>>, %arg12: memref<16x32xf32, #tpu.memory_space<vmem>>) attributes {dimension_semantics = [], scalar_prefetch = 0 : i64, scratch_operands = 2 : i64, tpu.core_type = #tpu.core_type<tc>} {
    %0 = tpu.iota {dimensions = array<i32: 1>} : vector<2x256xi32>
    %c128_i32 = arith.constant 128 : i32
    %1 = vector.broadcast %c128_i32 : i32 to vector<2x256xi32>
    %2 = arith.cmpi sge, %0, %1 : vector<2x256xi32>
    %c192_i32 = arith.constant 192 : i32
    %3 = vector.broadcast %c192_i32 : i32 to vector<2x256xi32>
    %4 = arith.cmpi slt, %0, %3 : vector<2x256xi32>
    %5 = arith.andi %2, %4 : vector<2x256xi1>
    %6 = tpu.iota {dimensions = array<i32: 1>} : vector<2x128xi32>
    %c64_i32 = arith.constant 64 : i32
    %7 = vector.broadcast %c64_i32 : i32 to vector<2x128xi32>
    %8 = arith.cmpi sge, %6, %7 : vector<2x128xi32>
    %c96_i32 = arith.constant 96 : i32
    %9 = vector.broadcast %c96_i32 : i32 to vector<2x128xi32>
    %10 = arith.cmpi slt, %6, %9 : vector<2x128xi32>
    %11 = arith.andi %8, %10 : vector<2x128xi1>
    %c0 = arith.constant 0 : index
    %c0_0 = arith.constant 0 : index
    %12 = vector.load %arg0[%c0, %c0_0] : memref<16x64xf32, #tpu.memory_space<vmem>>, vector<16x64xf32>
    %c0_1 = arith.constant 0 : index
    %c0_2 = arith.constant 0 : index
    %13 = vector.load %arg1[%c0_1, %c0_2] : memref<64x256xf32, #tpu.memory_space<vmem>>, vector<64x256xf32>
    %cst = arith.constant dense<0.000000e+00> : vector<16x256xf32>
    %14 = tpu.matmul %12, %13, %cst {dimension_numbers = #tpu.dot_dimension_numbers<[1], [0], [0], [1], [0, 0, 1, 1], [], []>} : vector<16x64xf32>, vector<64x256xf32>, vector<16x256xf32> -> vector<16x256xf32>
    %c0_3 = arith.constant 0 : index
    %c0_4 = arith.constant 0 : index
    %15 = vector.load %arg2[%c0_3, %c0_4] : memref<1x256xf32, #tpu.memory_space<vmem>>, vector<1x256xf32>
    %16 = vector.broadcast %15 : vector<1x256xf32> to vector<16x256xf32>
    %17 = arith.addf %14, %16 : vector<16x256xf32>
    %c0_5 = arith.constant 0 : index
    %c0_6 = arith.constant 0 : index
    %18 = vector.load %arg3[%c0_5, %c0_6] : memref<64x256xf32, #tpu.memory_space<vmem>>, vector<64x256xf32>
    %cst_7 = arith.constant 0.000000e+00 : f32
    %19 = vector.broadcast %cst_7 : f32 to vector<2x64xf32>
    %cst_8 = arith.constant 0.000000e+00 : f32
    %20 = vector.broadcast %cst_8 : f32 to vector<2x64xf32>
    %21 = vector.extract_strided_slice %17 {offsets = [0, 0], sizes = [2, 256], strides = [1, 1]} : vector<16x256xf32> to vector<2x256xf32>
    %cst_9 = arith.constant dense<0.000000e+00> : vector<2x256xf32>
    %22 = tpu.matmul %19, %18, %cst_9 {dimension_numbers = #tpu.dot_dimension_numbers<[1], [0], [0], [1], [0, 0, 1, 1], [], []>} : vector<2x64xf32>, vector<64x256xf32>, vector<2x256xf32> -> vector<2x256xf32>
    %23 = arith.addf %21, %22 : vector<2x256xf32>
    %24 = math.tanh %23 : vector<2x256xf32>
    %25 = arith.negf %23 : vector<2x256xf32>
    %26 = math.exp %25 : vector<2x256xf32>
    %cst_10 = arith.constant 1.000000e+00 : f32
    %27 = vector.broadcast %cst_10 : f32 to vector<2x256xf32>
    %28 = arith.addf %27, %26 : vector<2x256xf32>
    %29 = arith.divf %27, %28 : vector<2x256xf32>
    %30 = arith.select %5, %24, %29 : vector<2x256xi1>, vector<2x256xf32>
    %31 = vector.extract_strided_slice %30 {offsets = [0, 0], sizes = [2, 64], strides = [1, 1]} : vector<2x256xf32> to vector<2x64xf32>
    %32 = vector.extract_strided_slice %30 {offsets = [0, 64], sizes = [2, 64], strides = [1, 1]} : vector<2x256xf32> to vector<2x64xf32>
    %33 = vector.extract_strided_slice %30 {offsets = [0, 128], sizes = [2, 64], strides = [1, 1]} : vector<2x256xf32> to vector<2x64xf32>
    %34 = vector.extract_strided_slice %30 {offsets = [0, 192], sizes = [2, 64], strides = [1, 1]} : vector<2x256xf32> to vector<2x64xf32>
    %35 = arith.mulf %32, %20 : vector<2x64xf32>
    %36 = arith.mulf %31, %33 : vector<2x64xf32>
    %37 = arith.addf %35, %36 : vector<2x64xf32>
    %38 = math.tanh %37 : vector<2x64xf32>
    %39 = arith.mulf %34, %38 : vector<2x64xf32>
    %40 = vector.extract_strided_slice %39 {offsets = [0, 0], sizes = [2, 32], strides = [1, 1]} : vector<2x64xf32> to vector<2x32xf32>
    %c0_11 = arith.constant 0 : index
    %c0_12 = arith.constant 0 : index
    %41 = vector.load %arg11[%c0_11, %c0_12] : memref<16x32xf32, #tpu.memory_space<vmem>>, vector<2x32xf32>
    tpu.vector_store %arg11[%c0_11, %c0_12], %40 {strides = array<i32>} : memref<16x32xf32, #tpu.memory_space<vmem>>, vector<2x32xf32>,
    %42 = vector.extract_strided_slice %39 {offsets = [0, 32], sizes = [2, 32], strides = [1, 1]} : vector<2x64xf32> to vector<2x32xf32>
    %c14 = arith.constant 14 : index
    %c0_13 = arith.constant 0 : index
    %43 = vector.load %arg12[%c14, %c0_13] : memref<16x32xf32, #tpu.memory_space<vmem>>, vector<2x32xf32>
    tpu.vector_store %arg12[%c14, %c0_13], %42 {strides = array<i32>} : memref<16x32xf32, #tpu.memory_space<vmem>>, vector<2x32xf32>,
    %44 = vector.extract_strided_slice %17 {offsets = [2, 0], sizes = [2, 256], strides = [1, 1]} : vector<16x256xf32> to vector<2x256xf32>
    %cst_14 = arith.constant dense<0.000000e+00> : vector<2x256xf32>
    %45 = tpu.matmul %39, %18, %cst_14 {dimension_numbers = #tpu.dot_dimension_numbers<[1], [0], [0], [1], [0, 0, 1, 1], [], []>} : vector<2x64xf32>, vector<64x256xf32>, vector<2x256xf32> -> vector<2x256xf32>
    %46 = arith.addf %44, %45 : vector<2x256xf32>
    %47 = math.tanh %46 : vector<2x256xf32>
    %48 = arith.negf %46 : vector<2x256xf32>
    %49 = math.exp %48 : vector<2x256xf32>
    %cst_15 = arith.constant 1.000000e+00 : f32
    %50 = vector.broadcast %cst_15 : f32 to vector<2x256xf32>
    %51 = arith.addf %50, %49 : vector<2x256xf32>
    %52 = arith.divf %50, %51 : vector<2x256xf32>
    %53 = arith.select %5, %47, %52 : vector<2x256xi1>, vector<2x256xf32>
    %54 = vector.extract_strided_slice %53 {offsets = [0, 0], sizes = [2, 64], strides = [1, 1]} : vector<2x256xf32> to vector<2x64xf32>
    %55 = vector.extract_strided_slice %53 {offsets = [0, 64], sizes = [2, 64], strides = [1, 1]} : vector<2x256xf32> to vector<2x64xf32>
    %56 = vector.extract_strided_slice %53 {offsets = [0, 128], sizes = [2, 64], strides = [1, 1]} : vector<2x256xf32> to vector<2x64xf32>
    %57 = vector.extract_strided_slice %53 {offsets = [0, 192], sizes = [2, 64], strides = [1, 1]} : vector<2x256xf32> to vector<2x64xf32>
    %58 = arith.mulf %55, %37 : vector<2x64xf32>
    %59 = arith.mulf %54, %56 : vector<2x64xf32>
    %60 = arith.addf %58, %59 : vector<2x64xf32>
    %61 = math.tanh %60 : vector<2x64xf32>
    %62 = arith.mulf %57, %61 : vector<2x64xf32>
    %63 = vector.extract_strided_slice %62 {offsets = [0, 0], sizes = [2, 32], strides = [1, 1]} : vector<2x64xf32> to vector<2x32xf32>
    %c2 = arith.constant 2 : index
    %c0_16 = arith.constant 0 : index
    %64 = vector.load %arg11[%c2, %c0_16] : memref<16x32xf32, #tpu.memory_space<vmem>>, vector<2x32xf32>
    tpu.vector_store %arg11[%c2, %c0_16], %63 {strides = array<i32>} : memref<16x32xf32, #tpu.memory_space<vmem>>, vector<2x32xf32>,
    %65 = vector.extract_strided_slice %62 {offsets = [0, 32], sizes = [2, 32], strides = [1, 1]} : vector<2x64xf32> to vector<2x32xf32>
    %c12 = arith.constant 12 : index
    %c0_17 = arith.constant 0 : index
    %66 = vector.load %arg12[%c12, %c0_17] : memref<16x32xf32, #tpu.memory_space<vmem>>, vector<2x32xf32>
    tpu.vector_store %arg12[%c12, %c0_17], %65 {strides = array<i32>} : memref<16x32xf32, #tpu.memory_space<vmem>>, vector<2x32xf32>,
    %67 = vector.extract_strided_slice %17 {offsets = [4, 0], sizes = [2, 256], strides = [1, 1]} : vector<16x256xf32> to vector<2x256xf32>
    %cst_18 = arith.constant dense<0.000000e+00> : vector<2x256xf32>
    %68 = tpu.matmul %62, %18, %cst_18 {dimension_numbers = #tpu.dot_dimension_numbers<[1], [0], [0], [1], [0, 0, 1, 1], [], []>} : vector<2x64xf32>, vector<64x256xf32>, vector<2x256xf32> -> vector<2x256xf32>
    %69 = arith.addf %67, %68 : vector<2x256xf32>
    %70 = math.tanh %69 : vector<2x256xf32>
    %71 = arith.negf %69 : vector<2x256xf32>
    %72 = math.exp %71 : vector<2x256xf32>
    %cst_19 = arith.constant 1.000000e+00 : f32
    %73 = vector.broadcast %cst_19 : f32 to vector<2x256xf32>
    %74 = arith.addf %73, %72 : vector<2x256xf32>
    %75 = arith.divf %73, %74 : vector<2x256xf32>
    %76 = arith.select %5, %70, %75 : vector<2x256xi1>, vector<2x256xf32>
    %77 = vector.extract_strided_slice %76 {offsets = [0, 0], sizes = [2, 64], strides = [1, 1]} : vector<2x256xf32> to vector<2x64xf32>
    %78 = vector.extract_strided_slice %76 {offsets = [0, 64], sizes = [2, 64], strides = [1, 1]} : vector<2x256xf32> to vector<2x64xf32>
    %79 = vector.extract_strided_slice %76 {offsets = [0, 128], sizes = [2, 64], strides = [1, 1]} : vector<2x256xf32> to vector<2x64xf32>
    %80 = vector.extract_strided_slice %76 {offsets = [0, 192], sizes = [2, 64], strides = [1, 1]} : vector<2x256xf32> to vector<2x64xf32>
    %81 = arith.mulf %78, %60 : vector<2x64xf32>
    %82 = arith.mulf %77, %79 : vector<2x64xf32>
    %83 = arith.addf %81, %82 : vector<2x64xf32>
    %84 = math.tanh %83 : vector<2x64xf32>
    %85 = arith.mulf %80, %84 : vector<2x64xf32>
    %86 = vector.extract_strided_slice %85 {offsets = [0, 0], sizes = [2, 32], strides = [1, 1]} : vector<2x64xf32> to vector<2x32xf32>
    %c4 = arith.constant 4 : index
    %c0_20 = arith.constant 0 : index
    %87 = vector.load %arg11[%c4, %c0_20] : memref<16x32xf32, #tpu.memory_space<vmem>>, vector<2x32xf32>
    tpu.vector_store %arg11[%c4, %c0_20], %86 {strides = array<i32>} : memref<16x32xf32, #tpu.memory_space<vmem>>, vector<2x32xf32>,
    %88 = vector.extract_strided_slice %85 {offsets = [0, 32], sizes = [2, 32], strides = [1, 1]} : vector<2x64xf32> to vector<2x32xf32>
    %c10 = arith.constant 10 : index
    %c0_21 = arith.constant 0 : index
    %89 = vector.load %arg12[%c10, %c0_21] : memref<16x32xf32, #tpu.memory_space<vmem>>, vector<2x32xf32>
    tpu.vector_store %arg12[%c10, %c0_21], %88 {strides = array<i32>} : memref<16x32xf32, #tpu.memory_space<vmem>>, vector<2x32xf32>,
    %90 = vector.extract_strided_slice %17 {offsets = [6, 0], sizes = [2, 256], strides = [1, 1]} : vector<16x256xf32> to vector<2x256xf32>
    %cst_22 = arith.constant dense<0.000000e+00> : vector<2x256xf32>
    %91 = tpu.matmul %85, %18, %cst_22 {dimension_numbers = #tpu.dot_dimension_numbers<[1], [0], [0], [1], [0, 0, 1, 1], [], []>} : vector<2x64xf32>, vector<64x256xf32>, vector<2x256xf32> -> vector<2x256xf32>
    %92 = arith.addf %90, %91 : vector<2x256xf32>
    %93 = math.tanh %92 : vector<2x256xf32>
    %94 = arith.negf %92 : vector<2x256xf32>
    %95 = math.exp %94 : vector<2x256xf32>
    %cst_23 = arith.constant 1.000000e+00 : f32
    %96 = vector.broadcast %cst_23 : f32 to vector<2x256xf32>
    %97 = arith.addf %96, %95 : vector<2x256xf32>
    %98 = arith.divf %96, %97 : vector<2x256xf32>
    %99 = arith.select %5, %93, %98 : vector<2x256xi1>, vector<2x256xf32>
    %100 = vector.extract_strided_slice %99 {offsets = [0, 0], sizes = [2, 64], strides = [1, 1]} : vector<2x256xf32> to vector<2x64xf32>
    %101 = vector.extract_strided_slice %99 {offsets = [0, 64], sizes = [2, 64], strides = [1, 1]} : vector<2x256xf32> to vector<2x64xf32>
    %102 = vector.extract_strided_slice %99 {offsets = [0, 128], sizes = [2, 64], strides = [1, 1]} : vector<2x256xf32> to vector<2x64xf32>
    %103 = vector.extract_strided_slice %99 {offsets = [0, 192], sizes = [2, 64], strides = [1, 1]} : vector<2x256xf32> to vector<2x64xf32>
    %104 = arith.mulf %101, %83 : vector<2x64xf32>
    %105 = arith.mulf %100, %102 : vector<2x64xf32>
    %106 = arith.addf %104, %105 : vector<2x64xf32>
    %107 = math.tanh %106 : vector<2x64xf32>
    %108 = arith.mulf %103, %107 : vector<2x64xf32>
    %109 = vector.extract_strided_slice %108 {offsets = [0, 0], sizes = [2, 32], strides = [1, 1]} : vector<2x64xf32> to vector<2x32xf32>
    %c6 = arith.constant 6 : index
    %c0_24 = arith.constant 0 : index
    %110 = vector.load %arg11[%c6, %c0_24] : memref<16x32xf32, #tpu.memory_space<vmem>>, vector<2x32xf32>
    tpu.vector_store %arg11[%c6, %c0_24], %109 {strides = array<i32>} : memref<16x32xf32, #tpu.memory_space<vmem>>, vector<2x32xf32>,
    %111 = vector.extract_strided_slice %108 {offsets = [0, 32], sizes = [2, 32], strides = [1, 1]} : vector<2x64xf32> to vector<2x32xf32>
    %c8 = arith.constant 8 : index
    %c0_25 = arith.constant 0 : index
    %112 = vector.load %arg12[%c8, %c0_25] : memref<16x32xf32, #tpu.memory_space<vmem>>, vector<2x32xf32>
    tpu.vector_store %arg12[%c8, %c0_25], %111 {strides = array<i32>} : memref<16x32xf32, #tpu.memory_space<vmem>>, vector<2x32xf32>,
    %113 = vector.extract_strided_slice %17 {offsets = [8, 0], sizes = [2, 256], strides = [1, 1]} : vector<16x256xf32> to vector<2x256xf32>
    %cst_26 = arith.constant dense<0.000000e+00> : vector<2x256xf32>
    %114 = tpu.matmul %108, %18, %cst_26 {dimension_numbers = #tpu.dot_dimension_numbers<[1], [0], [0], [1], [0, 0, 1, 1], [], []>} : vector<2x64xf32>, vector<64x256xf32>, vector<2x256xf32> -> vector<2x256xf32>
    %115 = arith.addf %113, %114 : vector<2x256xf32>
    %116 = math.tanh %115 : vector<2x256xf32>
    %117 = arith.negf %115 : vector<2x256xf32>
    %118 = math.exp %117 : vector<2x256xf32>
    %cst_27 = arith.constant 1.000000e+00 : f32
    %119 = vector.broadcast %cst_27 : f32 to vector<2x256xf32>
    %120 = arith.addf %119, %118 : vector<2x256xf32>
    %121 = arith.divf %119, %120 : vector<2x256xf32>
    %122 = arith.select %5, %116, %121 : vector<2x256xi1>, vector<2x256xf32>
    %123 = vector.extract_strided_slice %122 {offsets = [0, 0], sizes = [2, 64], strides = [1, 1]} : vector<2x256xf32> to vector<2x64xf32>
    %124 = vector.extract_strided_slice %122 {offsets = [0, 64], sizes = [2, 64], strides = [1, 1]} : vector<2x256xf32> to vector<2x64xf32>
    %125 = vector.extract_strided_slice %122 {offsets = [0, 128], sizes = [2, 64], strides = [1, 1]} : vector<2x256xf32> to vector<2x64xf32>
    %126 = vector.extract_strided_slice %122 {offsets = [0, 192], sizes = [2, 64], strides = [1, 1]} : vector<2x256xf32> to vector<2x64xf32>
    %127 = arith.mulf %124, %106 : vector<2x64xf32>
    %128 = arith.mulf %123, %125 : vector<2x64xf32>
    %129 = arith.addf %127, %128 : vector<2x64xf32>
    %130 = math.tanh %129 : vector<2x64xf32>
    %131 = arith.mulf %126, %130 : vector<2x64xf32>
    %132 = vector.extract_strided_slice %131 {offsets = [0, 0], sizes = [2, 32], strides = [1, 1]} : vector<2x64xf32> to vector<2x32xf32>
    %c8_28 = arith.constant 8 : index
    %c0_29 = arith.constant 0 : index
    %133 = vector.load %arg11[%c8_28, %c0_29] : memref<16x32xf32, #tpu.memory_space<vmem>>, vector<2x32xf32>
    tpu.vector_store %arg11[%c8_28, %c0_29], %132 {strides = array<i32>} : memref<16x32xf32, #tpu.memory_space<vmem>>, vector<2x32xf32>,
    %134 = vector.extract_strided_slice %131 {offsets = [0, 32], sizes = [2, 32], strides = [1, 1]} : vector<2x64xf32> to vector<2x32xf32>
    %c6_30 = arith.constant 6 : index
    %c0_31 = arith.constant 0 : index
    %135 = vector.load %arg12[%c6_30, %c0_31] : memref<16x32xf32, #tpu.memory_space<vmem>>, vector<2x32xf32>
    tpu.vector_store %arg12[%c6_30, %c0_31], %134 {strides = array<i32>} : memref<16x32xf32, #tpu.memory_space<vmem>>, vector<2x32xf32>,
    %136 = vector.extract_strided_slice %17 {offsets = [10, 0], sizes = [2, 256], strides = [1, 1]} : vector<16x256xf32> to vector<2x256xf32>
    %cst_32 = arith.constant dense<0.000000e+00> : vector<2x256xf32>
    %137 = tpu.matmul %131, %18, %cst_32 {dimension_numbers = #tpu.dot_dimension_numbers<[1], [0], [0], [1], [0, 0, 1, 1], [], []>} : vector<2x64xf32>, vector<64x256xf32>, vector<2x256xf32> -> vector<2x256xf32>
    %138 = arith.addf %136, %137 : vector<2x256xf32>
    %139 = math.tanh %138 : vector<2x256xf32>
    %140 = arith.negf %138 : vector<2x256xf32>
    %141 = math.exp %140 : vector<2x256xf32>
    %cst_33 = arith.constant 1.000000e+00 : f32
    %142 = vector.broadcast %cst_33 : f32 to vector<2x256xf32>
    %143 = arith.addf %142, %141 : vector<2x256xf32>
    %144 = arith.divf %142, %143 : vector<2x256xf32>
    %145 = arith.select %5, %139, %144 : vector<2x256xi1>, vector<2x256xf32>
    %146 = vector.extract_strided_slice %145 {offsets = [0, 0], sizes = [2, 64], strides = [1, 1]} : vector<2x256xf32> to vector<2x64xf32>
    %147 = vector.extract_strided_slice %145 {offsets = [0, 64], sizes = [2, 64], strides = [1, 1]} : vector<2x256xf32> to vector<2x64xf32>
    %148 = vector.extract_strided_slice %145 {offsets = [0, 128], sizes = [2, 64], strides = [1, 1]} : vector<2x256xf32> to vector<2x64xf32>
    %149 = vector.extract_strided_slice %145 {offsets = [0, 192], sizes = [2, 64], strides = [1, 1]} : vector<2x256xf32> to vector<2x64xf32>
    %150 = arith.mulf %147, %129 : vector<2x64xf32>
    %151 = arith.mulf %146, %148 : vector<2x64xf32>
    %152 = arith.addf %150, %151 : vector<2x64xf32>
    %153 = math.tanh %152 : vector<2x64xf32>
    %154 = arith.mulf %149, %153 : vector<2x64xf32>
    %155 = vector.extract_strided_slice %154 {offsets = [0, 0], sizes = [2, 32], strides = [1, 1]} : vector<2x64xf32> to vector<2x32xf32>
    %c10_34 = arith.constant 10 : index
    %c0_35 = arith.constant 0 : index
    %156 = vector.load %arg11[%c10_34, %c0_35] : memref<16x32xf32, #tpu.memory_space<vmem>>, vector<2x32xf32>
    tpu.vector_store %arg11[%c10_34, %c0_35], %155 {strides = array<i32>} : memref<16x32xf32, #tpu.memory_space<vmem>>, vector<2x32xf32>,
    %157 = vector.extract_strided_slice %154 {offsets = [0, 32], sizes = [2, 32], strides = [1, 1]} : vector<2x64xf32> to vector<2x32xf32>
    %c4_36 = arith.constant 4 : index
    %c0_37 = arith.constant 0 : index
    %158 = vector.load %arg12[%c4_36, %c0_37] : memref<16x32xf32, #tpu.memory_space<vmem>>, vector<2x32xf32>
    tpu.vector_store %arg12[%c4_36, %c0_37], %157 {strides = array<i32>} : memref<16x32xf32, #tpu.memory_space<vmem>>, vector<2x32xf32>,
    %159 = vector.extract_strided_slice %17 {offsets = [12, 0], sizes = [2, 256], strides = [1, 1]} : vector<16x256xf32> to vector<2x256xf32>
    %cst_38 = arith.constant dense<0.000000e+00> : vector<2x256xf32>
    %160 = tpu.matmul %154, %18, %cst_38 {dimension_numbers = #tpu.dot_dimension_numbers<[1], [0], [0], [1], [0, 0, 1, 1], [], []>} : vector<2x64xf32>, vector<64x256xf32>, vector<2x256xf32> -> vector<2x256xf32>
    %161 = arith.addf %159, %160 : vector<2x256xf32>
    %162 = math.tanh %161 : vector<2x256xf32>
    %163 = arith.negf %161 : vector<2x256xf32>
    %164 = math.exp %163 : vector<2x256xf32>
    %cst_39 = arith.constant 1.000000e+00 : f32
    %165 = vector.broadcast %cst_39 : f32 to vector<2x256xf32>
    %166 = arith.addf %165, %164 : vector<2x256xf32>
    %167 = arith.divf %165, %166 : vector<2x256xf32>
    %168 = arith.select %5, %162, %167 : vector<2x256xi1>, vector<2x256xf32>
    %169 = vector.extract_strided_slice %168 {offsets = [0, 0], sizes = [2, 64], strides = [1, 1]} : vector<2x256xf32> to vector<2x64xf32>
    %170 = vector.extract_strided_slice %168 {offsets = [0, 64], sizes = [2, 64], strides = [1, 1]} : vector<2x256xf32> to vector<2x64xf32>
    %171 = vector.extract_strided_slice %168 {offsets = [0, 128], sizes = [2, 64], strides = [1, 1]} : vector<2x256xf32> to vector<2x64xf32>
    %172 = vector.extract_strided_slice %168 {offsets = [0, 192], sizes = [2, 64], strides = [1, 1]} : vector<2x256xf32> to vector<2x64xf32>
    %173 = arith.mulf %170, %152 : vector<2x64xf32>
    %174 = arith.mulf %169, %171 : vector<2x64xf32>
    %175 = arith.addf %173, %174 : vector<2x64xf32>
    %176 = math.tanh %175 : vector<2x64xf32>
    %177 = arith.mulf %172, %176 : vector<2x64xf32>
    %178 = vector.extract_strided_slice %177 {offsets = [0, 0], sizes = [2, 32], strides = [1, 1]} : vector<2x64xf32> to vector<2x32xf32>
    %c12_40 = arith.constant 12 : index
    %c0_41 = arith.constant 0 : index
    %179 = vector.load %arg11[%c12_40, %c0_41] : memref<16x32xf32, #tpu.memory_space<vmem>>, vector<2x32xf32>
    tpu.vector_store %arg11[%c12_40, %c0_41], %178 {strides = array<i32>} : memref<16x32xf32, #tpu.memory_space<vmem>>, vector<2x32xf32>,
    %180 = vector.extract_strided_slice %177 {offsets = [0, 32], sizes = [2, 32], strides = [1, 1]} : vector<2x64xf32> to vector<2x32xf32>
    %c2_42 = arith.constant 2 : index
    %c0_43 = arith.constant 0 : index
    %181 = vector.load %arg12[%c2_42, %c0_43] : memref<16x32xf32, #tpu.memory_space<vmem>>, vector<2x32xf32>
    tpu.vector_store %arg12[%c2_42, %c0_43], %180 {strides = array<i32>} : memref<16x32xf32, #tpu.memory_space<vmem>>, vector<2x32xf32>,
    %182 = vector.extract_strided_slice %17 {offsets = [14, 0], sizes = [2, 256], strides = [1, 1]} : vector<16x256xf32> to vector<2x256xf32>
    %cst_44 = arith.constant dense<0.000000e+00> : vector<2x256xf32>
    %183 = tpu.matmul %177, %18, %cst_44 {dimension_numbers = #tpu.dot_dimension_numbers<[1], [0], [0], [1], [0, 0, 1, 1], [], []>} : vector<2x64xf32>, vector<64x256xf32>, vector<2x256xf32> -> vector<2x256xf32>
    %184 = arith.addf %182, %183 : vector<2x256xf32>
    %185 = math.tanh %184 : vector<2x256xf32>
    %186 = arith.negf %184 : vector<2x256xf32>
    %187 = math.exp %186 : vector<2x256xf32>
    %cst_45 = arith.constant 1.000000e+00 : f32
    %188 = vector.broadcast %cst_45 : f32 to vector<2x256xf32>
    %189 = arith.addf %188, %187 : vector<2x256xf32>
    %190 = arith.divf %188, %189 : vector<2x256xf32>
    %191 = arith.select %5, %185, %190 : vector<2x256xi1>, vector<2x256xf32>
    %192 = vector.extract_strided_slice %191 {offsets = [0, 0], sizes = [2, 64], strides = [1, 1]} : vector<2x256xf32> to vector<2x64xf32>
    %193 = vector.extract_strided_slice %191 {offsets = [0, 64], sizes = [2, 64], strides = [1, 1]} : vector<2x256xf32> to vector<2x64xf32>
    %194 = vector.extract_strided_slice %191 {offsets = [0, 128], sizes = [2, 64], strides = [1, 1]} : vector<2x256xf32> to vector<2x64xf32>
    %195 = vector.extract_strided_slice %191 {offsets = [0, 192], sizes = [2, 64], strides = [1, 1]} : vector<2x256xf32> to vector<2x64xf32>
    %196 = arith.mulf %193, %175 : vector<2x64xf32>
    %197 = arith.mulf %192, %194 : vector<2x64xf32>
    %198 = arith.addf %196, %197 : vector<2x64xf32>
    %199 = math.tanh %198 : vector<2x64xf32>
    %200 = arith.mulf %195, %199 : vector<2x64xf32>
    %201 = vector.extract_strided_slice %200 {offsets = [0, 0], sizes = [2, 32], strides = [1, 1]} : vector<2x64xf32> to vector<2x32xf32>
    %c14_46 = arith.constant 14 : index
    %c0_47 = arith.constant 0 : index
    %202 = vector.load %arg11[%c14_46, %c0_47] : memref<16x32xf32, #tpu.memory_space<vmem>>, vector<2x32xf32>
    tpu.vector_store %arg11[%c14_46, %c0_47], %201 {strides = array<i32>} : memref<16x32xf32, #tpu.memory_space<vmem>>, vector<2x32xf32>,
    %203 = vector.extract_strided_slice %200 {offsets = [0, 32], sizes = [2, 32], strides = [1, 1]} : vector<2x64xf32> to vector<2x32xf32>
    %c0_48 = arith.constant 0 : index
    %c0_49 = arith.constant 0 : index
    %204 = vector.load %arg12[%c0_48, %c0_49] : memref<16x32xf32, #tpu.memory_space<vmem>>, vector<2x32xf32>
    tpu.vector_store %arg12[%c0_48, %c0_49], %203 {strides = array<i32>} : memref<16x32xf32, #tpu.memory_space<vmem>>, vector<2x32xf32>,
    %c0_50 = arith.constant 0 : index
    %c0_51 = arith.constant 0 : index
    %205 = vector.load %arg11[%c0_50, %c0_51] : memref<16x32xf32, #tpu.memory_space<vmem>>, vector<16x32xf32>
    %c0_52 = arith.constant 0 : index
    %c0_53 = arith.constant 0 : index
    %206 = vector.load %arg4[%c0_52, %c0_53] : memref<32x256xf32, #tpu.memory_space<vmem>>, vector<32x256xf32>
    %cst_54 = arith.constant dense<0.000000e+00> : vector<16x256xf32>
    %207 = tpu.matmul %205, %206, %cst_54 {dimension_numbers = #tpu.dot_dimension_numbers<[1], [0], [0], [1], [0, 0, 1, 1], [], []>} : vector<16x32xf32>, vector<32x256xf32>, vector<16x256xf32> -> vector<16x256xf32>
    %c0_55 = arith.constant 0 : index
    %c0_56 = arith.constant 0 : index
    %208 = vector.load %arg12[%c0_55, %c0_56] : memref<16x32xf32, #tpu.memory_space<vmem>>, vector<16x32xf32>
    %c0_57 = arith.constant 0 : index
    %c0_58 = arith.constant 0 : index
    %209 = vector.load %arg5[%c0_57, %c0_58] : memref<32x256xf32, #tpu.memory_space<vmem>>, vector<32x256xf32>
    %cst_59 = arith.constant dense<0.000000e+00> : vector<16x256xf32>
    %210 = tpu.matmul %208, %209, %cst_59 {dimension_numbers = #tpu.dot_dimension_numbers<[1], [0], [0], [1], [0, 0, 1, 1], [], []>} : vector<16x32xf32>, vector<32x256xf32>, vector<16x256xf32> -> vector<16x256xf32>
    %211 = arith.addf %207, %210 : vector<16x256xf32>
    %c0_60 = arith.constant 0 : index
    %c0_61 = arith.constant 0 : index
    %212 = vector.load %arg6[%c0_60, %c0_61] : memref<1x256xf32, #tpu.memory_space<vmem>>, vector<1x256xf32>
    %213 = vector.broadcast %212 : vector<1x256xf32> to vector<16x256xf32>
    %214 = arith.addf %211, %213 : vector<16x256xf32>
    %c0_62 = arith.constant 0 : index
    %c0_63 = arith.constant 0 : index
    %215 = vector.load %arg7[%c0_62, %c0_63] : memref<32x128xf32, #tpu.memory_space<vmem>>, vector<32x128xf32>
    %cst_64 = arith.constant 0.000000e+00 : f32
    %216 = vector.broadcast %cst_64 : f32 to vector<2x32xf32>
    %cst_65 = arith.constant 0.000000e+00 : f32
    %217 = vector.broadcast %cst_65 : f32 to vector<2x32xf32>
    %218 = vector.extract_strided_slice %214 {offsets = [0, 0], sizes = [2, 128], strides = [1, 1]} : vector<16x256xf32> to vector<2x128xf32>
    %cst_66 = arith.constant dense<0.000000e+00> : vector<2x128xf32>
    %219 = tpu.matmul %216, %215, %cst_66 {dimension_numbers = #tpu.dot_dimension_numbers<[1], [0], [0], [1], [0, 0, 1, 1], [], []>} : vector<2x32xf32>, vector<32x128xf32>, vector<2x128xf32> -> vector<2x128xf32>
    %220 = arith.addf %218, %219 : vector<2x128xf32>
    %221 = math.tanh %220 : vector<2x128xf32>
    %222 = arith.negf %220 : vector<2x128xf32>
    %223 = math.exp %222 : vector<2x128xf32>
    %cst_67 = arith.constant 1.000000e+00 : f32
    %224 = vector.broadcast %cst_67 : f32 to vector<2x128xf32>
    %225 = arith.addf %224, %223 : vector<2x128xf32>
    %226 = arith.divf %224, %225 : vector<2x128xf32>
    %227 = arith.select %11, %221, %226 : vector<2x128xi1>, vector<2x128xf32>
    %228 = vector.extract_strided_slice %227 {offsets = [0, 0], sizes = [2, 32], strides = [1, 1]} : vector<2x128xf32> to vector<2x32xf32>
    %229 = vector.extract_strided_slice %227 {offsets = [0, 32], sizes = [2, 32], strides = [1, 1]} : vector<2x128xf32> to vector<2x32xf32>
    %230 = vector.extract_strided_slice %227 {offsets = [0, 64], sizes = [2, 32], strides = [1, 1]} : vector<2x128xf32> to vector<2x32xf32>
    %231 = vector.extract_strided_slice %227 {offsets = [0, 96], sizes = [2, 32], strides = [1, 1]} : vector<2x128xf32> to vector<2x32xf32>
    %232 = arith.mulf %229, %217 : vector<2x32xf32>
    %233 = arith.mulf %228, %230 : vector<2x32xf32>
    %234 = arith.addf %232, %233 : vector<2x32xf32>
    %235 = math.tanh %234 : vector<2x32xf32>
    %236 = arith.mulf %231, %235 : vector<2x32xf32>
    %237 = vector.extract_strided_slice %214 {offsets = [2, 0], sizes = [2, 128], strides = [1, 1]} : vector<16x256xf32> to vector<2x128xf32>
    %cst_68 = arith.constant dense<0.000000e+00> : vector<2x128xf32>
    %238 = tpu.matmul %236, %215, %cst_68 {dimension_numbers = #tpu.dot_dimension_numbers<[1], [0], [0], [1], [0, 0, 1, 1], [], []>} : vector<2x32xf32>, vector<32x128xf32>, vector<2x128xf32> -> vector<2x128xf32>
    %239 = arith.addf %237, %238 : vector<2x128xf32>
    %240 = math.tanh %239 : vector<2x128xf32>
    %241 = arith.negf %239 : vector<2x128xf32>
    %242 = math.exp %241 : vector<2x128xf32>
    %cst_69 = arith.constant 1.000000e+00 : f32
    %243 = vector.broadcast %cst_69 : f32 to vector<2x128xf32>
    %244 = arith.addf %243, %242 : vector<2x128xf32>
    %245 = arith.divf %243, %244 : vector<2x128xf32>
    %246 = arith.select %11, %240, %245 : vector<2x128xi1>, vector<2x128xf32>
    %247 = vector.extract_strided_slice %246 {offsets = [0, 0], sizes = [2, 32], strides = [1, 1]} : vector<2x128xf32> to vector<2x32xf32>
    %248 = vector.extract_strided_slice %246 {offsets = [0, 32], sizes = [2, 32], strides = [1, 1]} : vector<2x128xf32> to vector<2x32xf32>
    %249 = vector.extract_strided_slice %246 {offsets = [0, 64], sizes = [2, 32], strides = [1, 1]} : vector<2x128xf32> to vector<2x32xf32>
    %250 = vector.extract_strided_slice %246 {offsets = [0, 96], sizes = [2, 32], strides = [1, 1]} : vector<2x128xf32> to vector<2x32xf32>
    %251 = arith.mulf %248, %234 : vector<2x32xf32>
    %252 = arith.mulf %247, %249 : vector<2x32xf32>
    %253 = arith.addf %251, %252 : vector<2x32xf32>
    %254 = math.tanh %253 : vector<2x32xf32>
    %255 = arith.mulf %250, %254 : vector<2x32xf32>
    %256 = vector.extract_strided_slice %214 {offsets = [4, 0], sizes = [2, 128], strides = [1, 1]} : vector<16x256xf32> to vector<2x128xf32>
    %cst_70 = arith.constant dense<0.000000e+00> : vector<2x128xf32>
    %257 = tpu.matmul %255, %215, %cst_70 {dimension_numbers = #tpu.dot_dimension_numbers<[1], [0], [0], [1], [0, 0, 1, 1], [], []>} : vector<2x32xf32>, vector<32x128xf32>, vector<2x128xf32> -> vector<2x128xf32>
    %258 = arith.addf %256, %257 : vector<2x128xf32>
    %259 = math.tanh %258 : vector<2x128xf32>
    %260 = arith.negf %258 : vector<2x128xf32>
    %261 = math.exp %260 : vector<2x128xf32>
    %cst_71 = arith.constant 1.000000e+00 : f32
    %262 = vector.broadcast %cst_71 : f32 to vector<2x128xf32>
    %263 = arith.addf %262, %261 : vector<2x128xf32>
    %264 = arith.divf %262, %263 : vector<2x128xf32>
    %265 = arith.select %11, %259, %264 : vector<2x128xi1>, vector<2x128xf32>
    %266 = vector.extract_strided_slice %265 {offsets = [0, 0], sizes = [2, 32], strides = [1, 1]} : vector<2x128xf32> to vector<2x32xf32>
    %267 = vector.extract_strided_slice %265 {offsets = [0, 32], sizes = [2, 32], strides = [1, 1]} : vector<2x128xf32> to vector<2x32xf32>
    %268 = vector.extract_strided_slice %265 {offsets = [0, 64], sizes = [2, 32], strides = [1, 1]} : vector<2x128xf32> to vector<2x32xf32>
    %269 = vector.extract_strided_slice %265 {offsets = [0, 96], sizes = [2, 32], strides = [1, 1]} : vector<2x128xf32> to vector<2x32xf32>
    %270 = arith.mulf %267, %253 : vector<2x32xf32>
    %271 = arith.mulf %266, %268 : vector<2x32xf32>
    %272 = arith.addf %270, %271 : vector<2x32xf32>
    %273 = math.tanh %272 : vector<2x32xf32>
    %274 = arith.mulf %269, %273 : vector<2x32xf32>
    %275 = vector.extract_strided_slice %214 {offsets = [6, 0], sizes = [2, 128], strides = [1, 1]} : vector<16x256xf32> to vector<2x128xf32>
    %cst_72 = arith.constant dense<0.000000e+00> : vector<2x128xf32>
    %276 = tpu.matmul %274, %215, %cst_72 {dimension_numbers = #tpu.dot_dimension_numbers<[1], [0], [0], [1], [0, 0, 1, 1], [], []>} : vector<2x32xf32>, vector<32x128xf32>, vector<2x128xf32> -> vector<2x128xf32>
    %277 = arith.addf %275, %276 : vector<2x128xf32>
    %278 = math.tanh %277 : vector<2x128xf32>
    %279 = arith.negf %277 : vector<2x128xf32>
    %280 = math.exp %279 : vector<2x128xf32>
    %cst_73 = arith.constant 1.000000e+00 : f32
    %281 = vector.broadcast %cst_73 : f32 to vector<2x128xf32>
    %282 = arith.addf %281, %280 : vector<2x128xf32>
    %283 = arith.divf %281, %282 : vector<2x128xf32>
    %284 = arith.select %11, %278, %283 : vector<2x128xi1>, vector<2x128xf32>
    %285 = vector.extract_strided_slice %284 {offsets = [0, 0], sizes = [2, 32], strides = [1, 1]} : vector<2x128xf32> to vector<2x32xf32>
    %286 = vector.extract_strided_slice %284 {offsets = [0, 32], sizes = [2, 32], strides = [1, 1]} : vector<2x128xf32> to vector<2x32xf32>
    %287 = vector.extract_strided_slice %284 {offsets = [0, 64], sizes = [2, 32], strides = [1, 1]} : vector<2x128xf32> to vector<2x32xf32>
    %288 = vector.extract_strided_slice %284 {offsets = [0, 96], sizes = [2, 32], strides = [1, 1]} : vector<2x128xf32> to vector<2x32xf32>
    %289 = arith.mulf %286, %272 : vector<2x32xf32>
    %290 = arith.mulf %285, %287 : vector<2x32xf32>
    %291 = arith.addf %289, %290 : vector<2x32xf32>
    %292 = math.tanh %291 : vector<2x32xf32>
    %293 = arith.mulf %288, %292 : vector<2x32xf32>
    %294 = vector.extract_strided_slice %214 {offsets = [8, 0], sizes = [2, 128], strides = [1, 1]} : vector<16x256xf32> to vector<2x128xf32>
    %cst_74 = arith.constant dense<0.000000e+00> : vector<2x128xf32>
    %295 = tpu.matmul %293, %215, %cst_74 {dimension_numbers = #tpu.dot_dimension_numbers<[1], [0], [0], [1], [0, 0, 1, 1], [], []>} : vector<2x32xf32>, vector<32x128xf32>, vector<2x128xf32> -> vector<2x128xf32>
    %296 = arith.addf %294, %295 : vector<2x128xf32>
    %297 = math.tanh %296 : vector<2x128xf32>
    %298 = arith.negf %296 : vector<2x128xf32>
    %299 = math.exp %298 : vector<2x128xf32>
    %cst_75 = arith.constant 1.000000e+00 : f32
    %300 = vector.broadcast %cst_75 : f32 to vector<2x128xf32>
    %301 = arith.addf %300, %299 : vector<2x128xf32>
    %302 = arith.divf %300, %301 : vector<2x128xf32>
    %303 = arith.select %11, %297, %302 : vector<2x128xi1>, vector<2x128xf32>
    %304 = vector.extract_strided_slice %303 {offsets = [0, 0], sizes = [2, 32], strides = [1, 1]} : vector<2x128xf32> to vector<2x32xf32>
    %305 = vector.extract_strided_slice %303 {offsets = [0, 32], sizes = [2, 32], strides = [1, 1]} : vector<2x128xf32> to vector<2x32xf32>
    %306 = vector.extract_strided_slice %303 {offsets = [0, 64], sizes = [2, 32], strides = [1, 1]} : vector<2x128xf32> to vector<2x32xf32>
    %307 = vector.extract_strided_slice %303 {offsets = [0, 96], sizes = [2, 32], strides = [1, 1]} : vector<2x128xf32> to vector<2x32xf32>
    %308 = arith.mulf %305, %291 : vector<2x32xf32>
    %309 = arith.mulf %304, %306 : vector<2x32xf32>
    %310 = arith.addf %308, %309 : vector<2x32xf32>
    %311 = math.tanh %310 : vector<2x32xf32>
    %312 = arith.mulf %307, %311 : vector<2x32xf32>
    %313 = vector.extract_strided_slice %214 {offsets = [10, 0], sizes = [2, 128], strides = [1, 1]} : vector<16x256xf32> to vector<2x128xf32>
    %cst_76 = arith.constant dense<0.000000e+00> : vector<2x128xf32>
    %314 = tpu.matmul %312, %215, %cst_76 {dimension_numbers = #tpu.dot_dimension_numbers<[1], [0], [0], [1], [0, 0, 1, 1], [], []>} : vector<2x32xf32>, vector<32x128xf32>, vector<2x128xf32> -> vector<2x128xf32>
    %315 = arith.addf %313, %314 : vector<2x128xf32>
    %316 = math.tanh %315 : vector<2x128xf32>
    %317 = arith.negf %315 : vector<2x128xf32>
    %318 = math.exp %317 : vector<2x128xf32>
    %cst_77 = arith.constant 1.000000e+00 : f32
    %319 = vector.broadcast %cst_77 : f32 to vector<2x128xf32>
    %320 = arith.addf %319, %318 : vector<2x128xf32>
    %321 = arith.divf %319, %320 : vector<2x128xf32>
    %322 = arith.select %11, %316, %321 : vector<2x128xi1>, vector<2x128xf32>
    %323 = vector.extract_strided_slice %322 {offsets = [0, 0], sizes = [2, 32], strides = [1, 1]} : vector<2x128xf32> to vector<2x32xf32>
    %324 = vector.extract_strided_slice %322 {offsets = [0, 32], sizes = [2, 32], strides = [1, 1]} : vector<2x128xf32> to vector<2x32xf32>
    %325 = vector.extract_strided_slice %322 {offsets = [0, 64], sizes = [2, 32], strides = [1, 1]} : vector<2x128xf32> to vector<2x32xf32>
    %326 = vector.extract_strided_slice %322 {offsets = [0, 96], sizes = [2, 32], strides = [1, 1]} : vector<2x128xf32> to vector<2x32xf32>
    %327 = arith.mulf %324, %310 : vector<2x32xf32>
    %328 = arith.mulf %323, %325 : vector<2x32xf32>
    %329 = arith.addf %327, %328 : vector<2x32xf32>
    %330 = math.tanh %329 : vector<2x32xf32>
    %331 = arith.mulf %326, %330 : vector<2x32xf32>
    %332 = vector.extract_strided_slice %214 {offsets = [12, 0], sizes = [2, 128], strides = [1, 1]} : vector<16x256xf32> to vector<2x128xf32>
    %cst_78 = arith.constant dense<0.000000e+00> : vector<2x128xf32>
    %333 = tpu.matmul %331, %215, %cst_78 {dimension_numbers = #tpu.dot_dimension_numbers<[1], [0], [0], [1], [0, 0, 1, 1], [], []>} : vector<2x32xf32>, vector<32x128xf32>, vector<2x128xf32> -> vector<2x128xf32>
    %334 = arith.addf %332, %333 : vector<2x128xf32>
    %335 = math.tanh %334 : vector<2x128xf32>
    %336 = arith.negf %334 : vector<2x128xf32>
    %337 = math.exp %336 : vector<2x128xf32>
    %cst_79 = arith.constant 1.000000e+00 : f32
    %338 = vector.broadcast %cst_79 : f32 to vector<2x128xf32>
    %339 = arith.addf %338, %337 : vector<2x128xf32>
    %340 = arith.divf %338, %339 : vector<2x128xf32>
    %341 = arith.select %11, %335, %340 : vector<2x128xi1>, vector<2x128xf32>
    %342 = vector.extract_strided_slice %341 {offsets = [0, 0], sizes = [2, 32], strides = [1, 1]} : vector<2x128xf32> to vector<2x32xf32>
    %343 = vector.extract_strided_slice %341 {offsets = [0, 32], sizes = [2, 32], strides = [1, 1]} : vector<2x128xf32> to vector<2x32xf32>
    %344 = vector.extract_strided_slice %341 {offsets = [0, 64], sizes = [2, 32], strides = [1, 1]} : vector<2x128xf32> to vector<2x32xf32>
    %345 = vector.extract_strided_slice %341 {offsets = [0, 96], sizes = [2, 32], strides = [1, 1]} : vector<2x128xf32> to vector<2x32xf32>
    %346 = arith.mulf %343, %329 : vector<2x32xf32>
    %347 = arith.mulf %342, %344 : vector<2x32xf32>
    %348 = arith.addf %346, %347 : vector<2x32xf32>
    %349 = math.tanh %348 : vector<2x32xf32>
    %350 = arith.mulf %345, %349 : vector<2x32xf32>
    %351 = vector.extract_strided_slice %214 {offsets = [14, 0], sizes = [2, 128], strides = [1, 1]} : vector<16x256xf32> to vector<2x128xf32>
    %cst_80 = arith.constant dense<0.000000e+00> : vector<2x128xf32>
    %352 = tpu.matmul %350, %215, %cst_80 {dimension_numbers = #tpu.dot_dimension_numbers<[1], [0], [0], [1], [0, 0, 1, 1], [], []>} : vector<2x32xf32>, vector<32x128xf32>, vector<2x128xf32> -> vector<2x128xf32>
    %353 = arith.addf %351, %352 : vector<2x128xf32>
    %354 = math.tanh %353 : vector<2x128xf32>
    %355 = arith.negf %353 : vector<2x128xf32>
    %356 = math.exp %355 : vector<2x128xf32>
    %cst_81 = arith.constant 1.000000e+00 : f32
    %357 = vector.broadcast %cst_81 : f32 to vector<2x128xf32>
    %358 = arith.addf %357, %356 : vector<2x128xf32>
    %359 = arith.divf %357, %358 : vector<2x128xf32>
    %360 = arith.select %11, %354, %359 : vector<2x128xi1>, vector<2x128xf32>
    %361 = vector.extract_strided_slice %360 {offsets = [0, 0], sizes = [2, 32], strides = [1, 1]} : vector<2x128xf32> to vector<2x32xf32>
    %362 = vector.extract_strided_slice %360 {offsets = [0, 32], sizes = [2, 32], strides = [1, 1]} : vector<2x128xf32> to vector<2x32xf32>
    %363 = vector.extract_strided_slice %360 {offsets = [0, 64], sizes = [2, 32], strides = [1, 1]} : vector<2x128xf32> to vector<2x32xf32>
    %364 = vector.extract_strided_slice %360 {offsets = [0, 96], sizes = [2, 32], strides = [1, 1]} : vector<2x128xf32> to vector<2x32xf32>
    %365 = arith.mulf %362, %348 : vector<2x32xf32>
    %366 = arith.mulf %361, %363 : vector<2x32xf32>
    %367 = arith.addf %365, %366 : vector<2x32xf32>
    %368 = math.tanh %367 : vector<2x32xf32>
    %369 = arith.mulf %364, %368 : vector<2x32xf32>
    %370 = vector.extract_strided_slice %214 {offsets = [14, 128], sizes = [2, 128], strides = [1, 1]} : vector<16x256xf32> to vector<2x128xf32>
    %cst_82 = arith.constant 0.000000e+00 : f32
    %371 = vector.broadcast %cst_82 : f32 to vector<2x32xf32>
    %372 = math.tanh %370 : vector<2x128xf32>
    %373 = arith.negf %370 : vector<2x128xf32>
    %374 = math.exp %373 : vector<2x128xf32>
    %cst_83 = arith.constant 1.000000e+00 : f32
    %375 = vector.broadcast %cst_83 : f32 to vector<2x128xf32>
    %376 = arith.addf %375, %374 : vector<2x128xf32>
    %377 = arith.divf %375, %376 : vector<2x128xf32>
    %378 = arith.select %11, %372, %377 : vector<2x128xi1>, vector<2x128xf32>
    %379 = vector.extract_strided_slice %378 {offsets = [0, 0], sizes = [2, 32], strides = [1, 1]} : vector<2x128xf32> to vector<2x32xf32>
    %380 = vector.extract_strided_slice %378 {offsets = [0, 32], sizes = [2, 32], strides = [1, 1]} : vector<2x128xf32> to vector<2x32xf32>
    %381 = vector.extract_strided_slice %378 {offsets = [0, 64], sizes = [2, 32], strides = [1, 1]} : vector<2x128xf32> to vector<2x32xf32>
    %382 = vector.extract_strided_slice %378 {offsets = [0, 96], sizes = [2, 32], strides = [1, 1]} : vector<2x128xf32> to vector<2x32xf32>
    %383 = arith.mulf %380, %371 : vector<2x32xf32>
    %384 = arith.mulf %379, %381 : vector<2x32xf32>
    %385 = arith.addf %383, %384 : vector<2x32xf32>
    %386 = math.tanh %385 : vector<2x32xf32>
    %387 = arith.mulf %382, %386 : vector<2x32xf32>
    %c0_84 = arith.constant 0 : index
    %c0_85 = arith.constant 0 : index
    %388 = vector.load %arg8[%c0_84, %c0_85] : memref<64x4xf32, #tpu.memory_space<vmem>>, vector<64x4xf32>
    %389 = math.tanh %369 : vector<2x32xf32>
    %390 = vector.extract_strided_slice %388 {offsets = [0, 0], sizes = [32, 4], strides = [1, 1]} : vector<64x4xf32> to vector<32x4xf32>
    %cst_86 = arith.constant dense<0.000000e+00> : vector<2x4xf32>
    %391 = tpu.matmul %389, %390, %cst_86 {dimension_numbers = #tpu.dot_dimension_numbers<[1], [0], [0], [1], [0, 0, 1, 1], [], []>} : vector<2x32xf32>, vector<32x4xf32>, vector<2x4xf32> -> vector<2x4xf32>
    %392 = math.tanh %387 : vector<2x32xf32>
    %393 = vector.extract_strided_slice %388 {offsets = [32, 0], sizes = [32, 4], strides = [1, 1]} : vector<64x4xf32> to vector<32x4xf32>
    %cst_87 = arith.constant dense<0.000000e+00> : vector<2x4xf32>
    %394 = tpu.matmul %392, %393, %cst_87 {dimension_numbers = #tpu.dot_dimension_numbers<[1], [0], [0], [1], [0, 0, 1, 1], [], []>} : vector<2x32xf32>, vector<32x4xf32>, vector<2x4xf32> -> vector<2x4xf32>
    %395 = arith.addf %391, %394 : vector<2x4xf32>
    %c0_88 = arith.constant 0 : index
    %c0_89 = arith.constant 0 : index
    %396 = vector.load %arg9[%c0_88, %c0_89] : memref<1x4xf32, #tpu.memory_space<vmem>>, vector<1x4xf32>
    %397 = vector.broadcast %396 : vector<1x4xf32> to vector<2x4xf32>
    %398 = arith.addf %395, %397 : vector<2x4xf32>
    %c0_90 = arith.constant 0 : index
    %c0_91 = arith.constant 0 : index
    %399 = vector.load %arg10[%c0_90, %c0_91] : memref<2x4xf32, #tpu.memory_space<vmem>>, vector<2x4xf32>
    tpu.vector_store %arg10[%c0_90, %c0_91], %398 {strides = array<i32>} : memref<2x4xf32, #tpu.memory_space<vmem>>, vector<2x4xf32>,
    return
  }
}

</mosaic_0001>

<llo_original>
// kernel: text_rnn_forward.1
$region0: #{text_rnn_forward.1}
  #allocation0 [shape = 'u32[]', space=smem, size = 0x4, offset = 0x4, fixed_abs, tag = 'smem constant byte address 0x4 - core index']
  #allocation1 [shape = 'u32[144,128]{1,0:T(1,128)}', space=vmem, size = 0x12000, scoped, tag = 'internal scratch']
  #allocation2 [shape = 'f32[16,32]{1,0:T(8,128)}', space=vmem, size = 0x2000, scoped, tag = 'scratch operand']
  #allocation3 [shape = 'f32[16,32]{1,0:T(8,128)}', space=vmem, size = 0x2000, scoped, tag = 'scratch operand']
  %s0 = inlined_call_operand.vmem [shape: f32[16,64], index: 0, kind: input, shape index: {}]
  %s1 = inlined_call_operand.vmem [shape: f32[64,256], index: 1, kind: input, shape index: {}]
  %s2 = inlined_call_operand.vmem [shape: f32[1,256], index: 2, kind: input, shape index: {}]
  %s3 = inlined_call_operand.hbm [shape: f32[64,256], index: 3, kind: input, shape index: {}]
  %s4 = inlined_call_operand.vmem [shape: f32[32,256], index: 4, kind: input, shape index: {}]
  %s5 = inlined_call_operand.hbm [shape: f32[32,256], index: 5, kind: input, shape index: {}]
  %s6 = inlined_call_operand.vmem [shape: f32[1,256], index: 6, kind: input, shape index: {}]
  %s7 = inlined_call_operand.hbm [shape: f32[32,128], index: 7, kind: input, shape index: {}]
  %s8 = inlined_call_operand.vmem [shape: f32[64,4], index: 8, kind: input, shape index: {}]
  %s9 = inlined_call_operand.vmem [shape: f32[1,4], index: 9, kind: input, shape index: {}]
  %s10 = inlined_call_operand.hbm [shape: f32[2,4], index: 10, kind: output, shape index: {}]
  %s11 = sld [smem:[#allocation0]]
  $region62: #{text_rnn_forward.1} parent=0
    _
  %s13 = ssub.s32 1, %s11
  %s14 = scalar_select 0, %s13, %s11
  $region1: #{text_rnn_forward.1} parent=0
    #allocation4 [shape = 'u8[65536]{0}', space=vmem, size = 0x10000, scoped, tag = 'input window, operand 3, single buffered']
    #allocation5 [shape = 's32[1]{0}', space=sflag, size = 0x4, scoped, tag = 'scoped memory for text_rnn_forward.1']
    #allocation6 [shape = 's32[1]{0}', space=sflag, size = 0x4, scoped, tag = 'scoped memory for text_rnn_forward.1']
    #allocation7 [shape = 'u8[32768]{0}', space=vmem, size = 0x8000, scoped, tag = 'input window, operand 5, single buffered']
    #allocation8 [shape = 's32[1]{0}', space=sflag, size = 0x4, scoped, tag = 'scoped memory for text_rnn_forward.1']
    #allocation9 [shape = 'u8[16384]{0}', space=vmem, size = 0x4000, scoped, tag = 'input window, operand 7, single buffered']
    #allocation10 [shape = 'u8[1024]{0}', space=vmem, size = 0x400, scoped, tag = 'output window, operand 0, single buffered']
    %15 = vsyncpa [#allocation5], 0
    %16 = vsyncpa [#allocation8], 0
    %17 = vsyncpa [#allocation6], 0
    // Predicated region
    $region2: #{text_rnn_forward.1} parent=1 // pred_check
      _
    $region3: #{text_rnn_forward.1} parent=1 // pred_check_branch
      %19 = sbr.rel (0) target = $region5
    $region4: #{text_rnn_forward.1} parent=1 // pred_region
      _
    $region5: #{text_rnn_forward.1} parent=1 // pred_fallthru
      _
    // Predicated region
    $region6: #{text_rnn_forward.1} parent=1 // pred_check
      _
    $region7: #{text_rnn_forward.1} parent=1 // pred_check_branch
      %21 = sbr.rel (0) target = $region9
    $region8: #{text_rnn_forward.1} parent=1 // pred_region
      _
    $region9: #{text_rnn_forward.1} parent=1 // pred_fallthru
      _
    // Predicated region
    $region10: #{text_rnn_forward.1} parent=1 // pred_check
      _
    $region11: #{text_rnn_forward.1} parent=1 // pred_check_branch
      %23 = sbr.rel (0) target = $region13
    $region12: #{text_rnn_forward.1} parent=1 // pred_region
      _
    $region13: #{text_rnn_forward.1} parent=1 // pred_fallthru
      _
    // Predicated region
    $region14: #{text_rnn_forward.1} parent=1 // pred_check
      _
    $region15: #{text_rnn_forward.1} parent=1 // pred_check_branch
      %25 = sbr.rel (0) target = $region17
    $region16: #{text_rnn_forward.1} parent=1 // pred_region
      %s27 = ssub.s32 2048, 2048
      %28 = vsyncadd [#allocation5], %s27
      %s29 = sshll.u32 [#allocation4], 4
      %s30 = int_to_ptr.vmem [resolvable:$true] %s29
      %35 = dma.hbm_to_vmem [thread:$0]  %s3, 2048, %s30, [#allocation5], 256, 256, 16
    $region17: #{text_rnn_forward.1} parent=1 // pred_fallthru
      _
    // Predicated region
    $region18: #{text_rnn_forward.1} parent=1 // pred_check
      _
    $region19: #{text_rnn_forward.1} parent=1 // pred_check_branch
      %37 = sbr.rel (0) target = $region21
    $region20: #{text_rnn_forward.1} parent=1 // pred_region
      _
    $region21: #{text_rnn_forward.1} parent=1 // pred_fallthru
      _
    // Predicated region
    $region22: #{text_rnn_forward.1} parent=1 // pred_check
      _
    $region23: #{text_rnn_forward.1} parent=1 // pred_check_branch
      %39 = sbr.rel (0) target = $region25
    $region24: #{text_rnn_forward.1} parent=1 // pred_region
      %s41 = ssub.s32 1024, 1024
      %42 = vsyncadd [#allocation8], %s41
      %s43 = sshll.u32 [#allocation7], 4
      %s44 = int_to_ptr.vmem [resolvable:$true] %s43
      %49 = dma.hbm_to_vmem [thread:$0]  %s5, 1024, %s44, [#allocation8], 256, 256, 16
    $region25: #{text_rnn_forward.1} parent=1 // pred_fallthru
      _
    // Predicated region
    $region26: #{text_rnn_forward.1} parent=1 // pred_check
      _
    $region27: #{text_rnn_forward.1} parent=1 // pred_check_branch
      %51 = sbr.rel (0) target = $region29
    $region28: #{text_rnn_forward.1} parent=1 // pred_region
      _
    $region29: #{text_rnn_forward.1} parent=1 // pred_fallthru
      _
    // Predicated region
    $region30: #{text_rnn_forward.1} parent=1 // pred_check
      _
    $region31: #{text_rnn_forward.1} parent=1 // pred_check_branch
      %53 = sbr.rel (0) target = $region33
    $region32: #{text_rnn_forward.1} parent=1 // pred_region
      %s55 = ssub.s32 512, 512
      %56 = vsyncadd [#allocation8], %s55
      %s57 = sshll.u32 [#allocation9], 4
      %s58 = int_to_ptr.vmem [resolvable:$true] %s57
      %63 = dma.hbm_to_vmem [thread:$0]  %s7, 512, %s58, [#allocation8], 128, 128, 8
    $region33: #{text_rnn_forward.1} parent=1 // pred_fallthru
      _
    // Predicated region
    $region34: #{text_rnn_forward.1} parent=1 // pred_check
      _
    $region35: #{text_rnn_forward.1} parent=1 // pred_check_branch
      %65 = sbr.rel (0) target = $region37
    $region36: #{text_rnn_forward.1} parent=1 // pred_region
      _
    $region37: #{text_rnn_forward.1} parent=1 // pred_fallthru
      _
    // Predicated region
    $region38: #{text_rnn_forward.1} parent=1 // pred_check
      _
    $region39: #{text_rnn_forward.1} parent=1 // pred_check_branch
      %67 = sbr.rel (0) target = $region41
    $region40: #{text_rnn_forward.1} parent=1 // pred_region
      _
    $region41: #{text_rnn_forward.1} parent=1 // pred_fallthru
      _
    // Predicated region
    $region42: #{text_rnn_forward.1} parent=1 // pred_check
      _
    $region43: #{text_rnn_forward.1} parent=1 // pred_check_branch
      %69 = sbr.rel (0) target = $region45
    $region44: #{text_rnn_forward.1} parent=1 // pred_region
      %70 = dma.done [#allocation5], 2048
    $region45: #{text_rnn_forward.1} parent=1 // pred_fallthru
      _
    // Predicated region
    $region46: #{text_rnn_forward.1} parent=1 // pred_check
      _
    $region47: #{text_rnn_forward.1} parent=1 // pred_check_branch
      %72 = sbr.rel (0) target = $region49
    $region48: #{text_rnn_forward.1} parent=1 // pred_region
      %73 = dma.done [#allocation8], 1024
    $region49: #{text_rnn_forward.1} parent=1 // pred_fallthru
      _
    // Predicated region
    $region50: #{text_rnn_forward.1} parent=1 // pred_check
      _
    $region51: #{text_rnn_forward.1} parent=1 // pred_check_branch
      %75 = sbr.rel (0) target = $region53
    $region52: #{text_rnn_forward.1} parent=1 // pred_region
      %76 = dma.done [#allocation8], 512
    $region53: #{text_rnn_forward.1} parent=1 // pred_fallthru
      _
    %v77 = vlaneseq
    %v78 = vand.u32 %v77, 127
    %v79 = vadd.s32 %v78, 128
    %vm80 = vcmp.ge.s32.totalorder %v78, 128
    %vm81 = vcmp.ge.s32.totalorder %v79, 128
    %vm82 = vcmp.lt.s32.totalorder %v78, 192
    %vm83 = vcmp.lt.s32.totalorder %v79, 192
    %vm84 = vmand %vm80, %vm82
    %vm85 = vmand %vm81, %vm83
    %vm86 = vcmp.ge.s32.totalorder %v78, 64
    %vm87 = vcmp.lt.s32.totalorder %v78, 96
    %vm88 = vmand %vm86, %vm87
    %v89 = vld [vmem:[%s0] sm:$0xff]
    %v90 = vld [vmem:[%s0 + $0x8] sm:$0xff]
    %v91 = vld [vmem:[%s1] sm:$0xff]
    %v92 = vld [vmem:[%s1 + $0x8] sm:$0xff]
    %v93 = vld [vmem:[%s1 + $0x10] sm:$0xff]
    %v94 = vld [vmem:[%s1 + $0x18] sm:$0xff]
    %v95 = vld [vmem:[%s1 + $0x20] sm:$0xff]
    %v96 = vld [vmem:[%s1 + $0x28] sm:$0xff]
    %v97 = vld [vmem:[%s1 + $0x30] sm:$0xff]
    %v98 = vld [vmem:[%s1 + $0x38] sm:$0xff]
    %v99 = vld [vmem:[%s1 + $0x40] sm:$0xff]
    %v100 = vld [vmem:[%s1 + $0x48] sm:$0xff]
    %v101 = vld [vmem:[%s1 + $0x50] sm:$0xff]
    %v102 = vld [vmem:[%s1 + $0x58] sm:$0xff]
    %v103 = vld [vmem:[%s1 + $0x60] sm:$0xff]
    %v104 = vld [vmem:[%s1 + $0x68] sm:$0xff]
    %v105 = vld [vmem:[%s1 + $0x70] sm:$0xff]
    %v106 = vld [vmem:[%s1 + $0x78] sm:$0xff]
    %v107 = vld [vmem:[%s2] sm:$0x3]
    %v109 = vlaneseq
    %v110 = vshrl.u32 %v109, 7
    %v111 = vsub.s32 0, %v110
    %v112 = vrot.slane %v107, %v111
    %v113 = vlaneseq
    %v114 = vshrl.u32 %v113, 7
    %v115 = vsub.s32 1, %v114
    %v116 = vrot.slane %v107, %v115
    %vm119 = vcmask 523264
    %v121 = vsel %vm119, %v89, 0
    %v124 = vsel %vm119, %v90, 0
    %126 = vmatprep.subr.mxu0 %v92
    %127 = vmatpush1.msra.mxu0 %v91
    %128 = vmatprep.subr.mxu0 %v94
    %129 = vmatpush1.msra.mxu0 %v93
    %130 = vmatprep.subr.mxu0 %v96
    %131 = vmatpush1.msra.mxu0 %v95
    %132 = vmatprep.subr.mxu0 %v98
    %133 = vmatpush1.msra.mxu0 %v97
    %134 = vmatprep.subr.mxu0 %v100
    %135 = vmatpush1.msra.mxu0 %v99
    %136 = vmatprep.subr.mxu0 %v102
    %137 = vmatpush1.msra.mxu0 %v101
    %138 = vmatprep.subr.mxu0 %v104
    %139 = vmatpush1.msra.mxu0 %v103
    %140 = vmatprep.subr.mxu0 %v106
    %141 = vmatpush1.msra.mxu0 %v105
    %142 = vmatprep.subr.mxu0 0.0
    %143 = vmatpush1.msra.mxu0 0.0
    %144 = vmatprep.subr.mxu0 0.0
    %145 = vmatpush1.msra.mxu0 0.0
    %146 = vmatprep.subr.mxu0 0.0
    %147 = vmatpush1.msra.mxu0 0.0
    %148 = vmatprep.subr.mxu0 0.0
    %149 = vmatpush1.msra.mxu0 0.0
    %150 = vmatprep.subr.mxu0 0.0
    %151 = vmatpush1.msra.mxu0 0.0
    %152 = vmatprep.subr.mxu0 0.0
    %153 = vmatpush1.msra.mxu0 0.0
    %154 = vmatprep.subr.mxu0 0.0
    %155 = vmatpush1.msra.mxu0 0.0
    %156 = vmatprep.subr.mxu0 0.0
    %157 = vmatpush1.msra.mxu0 0.0
    %158 = vmatprep.subr.mxu0 0.0
    %159 = vmatpush1.msra.mxu0 0.0
    %160 = vmatprep.subr.mxu0 0.0
    %161 = vmatpush1.msra.mxu0 0.0
    %162 = vmatprep.subr.mxu0 0.0
    %163 = vmatpush1.msra.mxu0 0.0
    %164 = vmatprep.subr.mxu0 0.0
    %165 = vmatpush1.msra.mxu0 0.0
    %166 = vmatprep.subr.mxu0 0.0
    %167 = vmatpush1.msra.mxu0 0.0
    %168 = vmatprep.subr.mxu0 0.0
    %169 = vmatpush1.msra.mxu0 0.0
    %170 = vmatprep.subr.mxu0 0.0
    %171 = vmatpush1.msra.mxu0 0.0
    %172 = vmatprep.subr.mxu0 0.0
    %173 = vmatpush1.msra.mxu0 0.0
    %174 = vmatprep.subr.mxu0 0.0
    %175 = vmatpush1.msra.mxu0 0.0
    %176 = vmatprep.subr.mxu0 0.0
    %177 = vmatpush1.msra.mxu0 0.0
    %178 = vmatprep.subr.mxu0 0.0
    %179 = vmatpush1.msra.mxu0 0.0
    %180 = vmatprep.subr.mxu0 0.0
    %181 = vmatpush1.msra.mxu0 0.0
    %182 = vmatprep.subr.mxu0 0.0
    %183 = vmatpush1.msra.mxu0 0.0
    %184 = vmatprep.subr.mxu0 0.0
    %185 = vmatpush1.msra.mxu0 0.0
    %186 = vmatprep.subr.mxu0 0.0
    %187 = vmatpush1.msra.mxu0 0.0
    %188 = vmatprep.subr.mxu0 0.0
    %189 = vmatpush1.msra.mxu0 0.0
    %190 = vmatprep.mubr.f32.mxu0 0.0
    %191 = vmatmul.mubr.f32.gmra.mrb[0].mxu0 %v121
    %v192 = vpop.f32.mrb[0].mxu0
    %v193 = vadd.f32 %v112, %v192
    %v194 = vpop.f32.mrb[0].mxu0
    %v195 = vadd.f32 %v116, %v194
    %196 = vmatprep.mubr.f32.mxu0 0.0
    %197 = vmatmul.mubr.f32.gmra.mrb[0].mxu0 %v124
    %v198 = vpop.f32.mrb[0].mxu0
    %v199 = vadd.f32 %v112, %v198
    %v200 = vpop.f32.mrb[0].mxu0
    %v201 = vadd.f32 %v116, %v200
    %202 = vdwg.mxu0
    %v203 = vld [vmem:[#allocation4] sm:$0xff]
    %v204 = vld [vmem:[#allocation4 + $0x8] sm:$0xff]
    %v205 = vld [vmem:[#allocation4 + $0x10] sm:$0xff]
    %v206 = vld [vmem:[#allocation4 + $0x18] sm:$0xff]
    %v207 = vld [vmem:[#allocation4 + $0x20] sm:$0xff]
    %v208 = vld [vmem:[#allocation4 + $0x28] sm:$0xff]
    %v209 = vld [vmem:[#allocation4 + $0x30] sm:$0xff]
    %v210 = vld [vmem:[#allocation4 + $0x38] sm:$0xff]
    %v211 = vld [vmem:[#allocation4 + $0x40] sm:$0xff]
    %v212 = vld [vmem:[#allocation4 + $0x48] sm:$0xff]
    %v213 = vld [vmem:[#allocation4 + $0x50] sm:$0xff]
    %v214 = vld [vmem:[#allocation4 + $0x58] sm:$0xff]
    %v215 = vld [vmem:[#allocation4 + $0x60] sm:$0xff]
    %v216 = vld [vmem:[#allocation4 + $0x68] sm:$0xff]
    %v217 = vld [vmem:[#allocation4 + $0x70] sm:$0xff]
    %v218 = vld [vmem:[#allocation4 + $0x78] sm:$0xff]
    %v220 = vsel %vm119, 0.0, 0
    %222 = vmatprep.subr.mxu0 %v204
    %223 = vmatpush1.msra.mxu0 %v203
    %224 = vmatprep.subr.mxu0 %v206
    %225 = vmatpush1.msra.mxu0 %v205
    %226 = vmatprep.subr.mxu0 %v208
    %227 = vmatpush1.msra.mxu0 %v207
    %228 = vmatprep.subr.mxu0 %v210
    %229 = vmatpush1.msra.mxu0 %v209
    %230 = vmatprep.subr.mxu0 %v212
    %231 = vmatpush1.msra.mxu0 %v211
    %232 = vmatprep.subr.mxu0 %v214
    %233 = vmatpush1.msra.mxu0 %v213
    %234 = vmatprep.subr.mxu0 %v216
    %235 = vmatpush1.msra.mxu0 %v215
    %236 = vmatprep.subr.mxu0 %v218
    %237 = vmatpush1.msra.mxu0 %v217
    %238 = vmatprep.subr.mxu0 0.0
    %239 = vmatpush1.msra.mxu0 0.0
    %240 = vmatprep.subr.mxu0 0.0
    %241 = vmatpush1.msra.mxu0 0.0
    %242 = vmatprep.subr.mxu0 0.0
    %243 = vmatpush1.msra.mxu0 0.0
    %244 = vmatprep.subr.mxu0 0.0
    %245 = vmatpush1.msra.mxu0 0.0
    %246 = vmatprep.subr.mxu0 0.0
    %247 = vmatpush1.msra.mxu0 0.0
    %248 = vmatprep.subr.mxu0 0.0
    %249 = vmatpush1.msra.mxu0 0.0
    %250 = vmatprep.subr.mxu0 0.0
    %251 = vmatpush1.msra.mxu0 0.0
    %252 = vmatprep.subr.mxu0 0.0
    %253 = vmatpush1.msra.mxu0 0.0
    %254 = vmatprep.subr.mxu0 0.0
    %255 = vmatpush1.msra.mxu0 0.0
    %256 = vmatprep.subr.mxu0 0.0
    %257 = vmatpush1.msra.mxu0 0.0
    %258 = vmatprep.subr.mxu0 0.0
    %259 = vmatpush1.msra.mxu0 0.0
    %260 = vmatprep.subr.mxu0 0.0
    %261 = vmatpush1.msra.mxu0 0.0
    %262 = vmatprep.subr.mxu0 0.0
    %263 = vmatpush1.msra.mxu0 0.0
    %264 = vmatprep.subr.mxu0 0.0
    %265 = vmatpush1.msra.mxu0 0.0
    %266 = vmatprep.subr.mxu0 0.0
    %267 = vmatpush1.msra.mxu0 0.0
    %268 = vmatprep.subr.mxu0 0.0
    %269 = vmatpush1.msra.mxu0 0.0
    %270 = vmatprep.subr.mxu0 0.0
    %271 = vmatpush1.msra.mxu0 0.0
    %272 = vmatprep.subr.mxu0 0.0
    %273 = vmatpush1.msra.mxu0 0.0
    %274 = vmatprep.subr.mxu0 0.0
    %275 = vmatpush1.msra.mxu0 0.0
    %276 = vmatprep.subr.mxu0 0.0
    %277 = vmatpush1.msra.mxu0 0.0
    %278 = vmatprep.subr.mxu0 0.0
    %279 = vmatpush1.msra.mxu0 0.0
    %280 = vmatprep.subr.mxu0 0.0
    %281 = vmatpush1.msra.mxu0 0.0
    %282 = vmatprep.subr.mxu0 0.0
    %283 = vmatpush1.msra.mxu0 0.0
    %284 = vmatprep.subr.mxu0 0.0
    %285 = vmatpush1.msra.mxu0 0.0
    %286 = vmatprep.mubr.f32.mxu0 0.0
    %287 = vmatmul.mubr.f32.gmra.mrb[0].mxu0 %v220
    %v288 = vpop.f32.mrb[0].mxu0
    %v289 = vadd.f32 0.0, %v288
    %v290 = vpop.f32.mrb[0].mxu0
    %v291 = vadd.f32 0.0, %v290
    %292 = vdwg.mxu0
    %v293 = vadd.f32 %v193, %v289
    %v294 = vadd.f32 %v195, %v291
    %v295 = vtanh.pop %v293
    %v296 = vtanh.pop %v294
    %v297 = vxor.u32 %v293, 2147483648
    %v298 = vxor.u32 %v294, 2147483648
    %v299 = vmul.f32 %v297, 1.442695
    %v300 = vpow.pop %v299
    %v301 = vmul.f32 %v298, 1.442695
    %v302 = vpow.pop %v301
    %v303 = vadd.f32 %v300, 1.0
    %v304 = vadd.f32 %v302, 1.0
    %v305 = vrcp.pop %v303
    %v306 = vmul.f32 1.0, %v305
    %v307 = vrcp.pop %v304
    %v308 = vmul.f32 1.0, %v307
    %v309 = vsel %vm84, %v295, %v306
    %v310 = vsel %vm85, %v296, %v308
    %v311 = vmul.f32 %v309, 0.0
    %v312 = vmul.f32 %v309, %v310
    %314 = vrot.lane.b32.xlu0 %v312, 64
    %v315 = vpop.permute.xlu0 %314
    %v317 = vadd.f32 %v311, %v315
    %v318 = vtanh.pop %v317
    %v319 = vmul.f32 %v310, %v318
    %321 = vrot.lane.b32.xlu0 %v319, 64
    %v322 = vpop.permute.xlu0 %321
    %vm324 = vcmask 254976
    %325 = vst.msk [vmem:[#allocation2] sm:$0x3] %vm324, %v322
    %326 = vrot.lane.b32.xlu0 %v319, 32
    %v327 = vpop.permute.xlu0 %326
    %329 = vst.msk [vmem:[#allocation3 + $0xe] sm:$0x3] %vm324, %v327
    %v330 = vsel %vm119, %v322, 0
    %332 = vmatprep.subr.mxu0 %v204
    %333 = vmatpush1.msra.mxu0 %v203
    %334 = vmatprep.subr.mxu0 %v206
    %335 = vmatpush1.msra.mxu0 %v205
    %336 = vmatprep.subr.mxu0 %v208
    %337 = vmatpush1.msra.mxu0 %v207
    %338 = vmatprep.subr.mxu0 %v210
    %339 = vmatpush1.msra.mxu0 %v209
    %340 = vmatprep.subr.mxu0 %v212
    %341 = vmatpush1.msra.mxu0 %v211
    %342 = vmatprep.subr.mxu0 %v214
    %343 = vmatpush1.msra.mxu0 %v213
    %344 = vmatprep.subr.mxu0 %v216
    %345 = vmatpush1.msra.mxu0 %v215
    %346 = vmatprep.subr.mxu0 %v218
    %347 = vmatpush1.msra.mxu0 %v217
    %348 = vmatprep.subr.mxu0 0.0
    %349 = vmatpush1.msra.mxu0 0.0
    %350 = vmatprep.subr.mxu0 0.0
    %351 = vmatpush1.msra.mxu0 0.0
    %352 = vmatprep.subr.mxu0 0.0
    %353 = vmatpush1.msra.mxu0 0.0
    %354 = vmatprep.subr.mxu0 0.0
    %355 = vmatpush1.msra.mxu0 0.0
    %356 = vmatprep.subr.mxu0 0.0
    %357 = vmatpush1.msra.mxu0 0.0
    %358 = vmatprep.subr.mxu0 0.0
    %359 = vmatpush1.msra.mxu0 0.0
    %360 = vmatprep.subr.mxu0 0.0
    %361 = vmatpush1.msra.mxu0 0.0
    %362 = vmatprep.subr.mxu0 0.0
    %363 = vmatpush1.msra.mxu0 0.0
    %364 = vmatprep.subr.mxu0 0.0
    %365 = vmatpush1.msra.mxu0 0.0
    %366 = vmatprep.subr.mxu0 0.0
    %367 = vmatpush1.msra.mxu0 0.0
    %368 = vmatprep.subr.mxu0 0.0
    %369 = vmatpush1.msra.mxu0 0.0
    %370 = vmatprep.subr.mxu0 0.0
    %371 = vmatpush1.msra.mxu0 0.0
    %372 = vmatprep.subr.mxu0 0.0
    %373 = vmatpush1.msra.mxu0 0.0
    %374 = vmatprep.subr.mxu0 0.0
    %375 = vmatpush1.msra.mxu0 0.0
    %376 = vmatprep.subr.mxu0 0.0
    %377 = vmatpush1.msra.mxu0 0.0
    %378 = vmatprep.subr.mxu0 0.0
    %379 = vmatpush1.msra.mxu0 0.0
    %380 = vmatprep.subr.mxu0 0.0
    %381 = vmatpush1.msra.mxu0 0.0
    %382 = vmatprep.subr.mxu0 0.0
    %383 = vmatpush1.msra.mxu0 0.0
    %384 = vmatprep.subr.mxu0 0.0
    %385 = vmatpush1.msra.mxu0 0.0
    %386 = vmatprep.subr.mxu0 0.0
    %387 = vmatpush1.msra.mxu0 0.0
    %388 = vmatprep.subr.mxu0 0.0
    %389 = vmatpush1.msra.mxu0 0.0
    %390 = vmatprep.subr.mxu0 0.0
    %391 = vmatpush1.msra.mxu0 0.0
    %392 = vmatprep.subr.mxu0 0.0
    %393 = vmatpush1.msra.mxu0 0.0
    %394 = vmatprep.subr.mxu0 0.0
    %395 = vmatpush1.msra.mxu0 0.0
    %396 = vmatprep.mubr.f32.mxu0 0.0
    %397 = vmatmul.mubr.f32.gmra.mrb[0].mxu0 %v330
    %v398 = vpop.f32.mrb[0].mxu0
    %v399 = vadd.f32 0.0, %v398
    %v400 = vpop.f32.mrb[0].mxu0
    %v401 = vadd.f32 0.0, %v400
    %402 = vdwg.mxu0
    %v405 = vrot.slane %v399, 6
    %v406 = vrot.slane %v401, 6
    %v409 = vadd.f32 %v193, %v405
    %v410 = vadd.f32 %v195, %v406
    %v411 = vtanh.pop %v409
    %v412 = vtanh.pop %v410
    %v413 = vxor.u32 %v409, 2147483648
    %v414 = vxor.u32 %v410, 2147483648
    %v415 = vmul.f32 %v413, 1.442695
    %v416 = vpow.pop %v415
    %v417 = vmul.f32 %v414, 1.442695
    %v418 = vpow.pop %v417
    %v419 = vadd.f32 %v416, 1.0
    %v420 = vadd.f32 %v418, 1.0
    %v421 = vrcp.pop %v419
    %v422 = vmul.f32 1.0, %v421
    %v423 = vrcp.pop %v420
    %v424 = vmul.f32 1.0, %v423
    %v425 = vsel %vm84, %v411, %v422
    %v426 = vsel %vm85, %v412, %v424
    %v428 = vrot.slane %v317, 6
    %v430 = vmul.f32 %v425, %v428
    %v431 = vmul.f32 %v425, %v426
    %433 = vrot.lane.b32.xlu0 %v431, 64
    %v434 = vpop.permute.xlu0 %433
    %v436 = vadd.f32 %v430, %v434
    %v437 = vtanh.pop %v436
    %v438 = vmul.f32 %v426, %v437
    %440 = vrot.lane.b32.xlu0 %v438, 64
    %v441 = vpop.permute.xlu0 %440
    %vm443 = vcmask 257026
    %444 = vst.msk [vmem:[#allocation2] sm:$0xc] %vm443, %v441
    %445 = vrot.lane.b32.xlu0 %v438, 32
    %v446 = vpop.permute.xlu0 %445
    %448 = vst.msk [vmem:[#allocation3 + $0xa] sm:$0xc] %vm443, %v446
    %v449 = vrot.slane %v438, 2
    %450 = vrot.lane.b32.xlu0 %v449, 64
    %v451 = vpop.permute.xlu0 %450
    %v452 = vsel %vm119, %v451, 0
    %454 = vmatprep.subr.mxu0 %v204
    %455 = vmatpush1.msra.mxu0 %v203
    %456 = vmatprep.subr.mxu0 %v206
    %457 = vmatpush1.msra.mxu0 %v205
    %458 = vmatprep.subr.mxu0 %v208
    %459 = vmatpush1.msra.mxu0 %v207
    %460 = vmatprep.subr.mxu0 %v210
    %461 = vmatpush1.msra.mxu0 %v209
    %462 = vmatprep.subr.mxu0 %v212
    %463 = vmatpush1.msra.mxu0 %v211
    %464 = vmatprep.subr.mxu0 %v214
    %465 = vmatpush1.msra.mxu0 %v213
    %466 = vmatprep.subr.mxu0 %v216
    %467 = vmatpush1.msra.mxu0 %v215
    %468 = vmatprep.subr.mxu0 %v218
    %469 = vmatpush1.msra.mxu0 %v217
    %470 = vmatprep.subr.mxu0 0.0
    %471 = vmatpush1.msra.mxu0 0.0
    %472 = vmatprep.subr.mxu0 0.0
    %473 = vmatpush1.msra.mxu0 0.0
    %474 = vmatprep.subr.mxu0 0.0
    %475 = vmatpush1.msra.mxu0 0.0
    %476 = vmatprep.subr.mxu0 0.0
    %477 = vmatpush1.msra.mxu0 0.0
    %478 = vmatprep.subr.mxu0 0.0
    %479 = vmatpush1.msra.mxu0 0.0
    %480 = vmatprep.subr.mxu0 0.0
    %481 = vmatpush1.msra.mxu0 0.0
    %482 = vmatprep.subr.mxu0 0.0
    %483 = vmatpush1.msra.mxu0 0.0
    %484 = vmatprep.subr.mxu0 0.0
    %485 = vmatpush1.msra.mxu0 0.0
    %486 = vmatprep.subr.mxu0 0.0
    %487 = vmatpush1.msra.mxu0 0.0
    %488 = vmatprep.subr.mxu0 0.0
    %489 = vmatpush1.msra.mxu0 0.0
    %490 = vmatprep.subr.mxu0 0.0
    %491 = vmatpush1.msra.mxu0 0.0
    %492 = vmatprep.subr.mxu0 0.0
    %493 = vmatpush1.msra.mxu0 0.0
    %494 = vmatprep.subr.mxu0 0.0
    %495 = vmatpush1.msra.mxu0 0.0
    %496 = vmatprep.subr.mxu0 0.0
    %497 = vmatpush1.msra.mxu0 0.0
    %498 = vmatprep.subr.mxu0 0.0
    %499 = vmatpush1.msra.mxu0 0.0
    %500 = vmatprep.subr.mxu0 0.0
    %501 = vmatpush1.msra.mxu0 0.0
    %502 = vmatprep.subr.mxu0 0.0
    %503 = vmatpush1.msra.mxu0 0.0
    %504 = vmatprep.subr.mxu0 0.0
    %505 = vmatpush1.msra.mxu0 0.0
    %506 = vmatprep.subr.mxu0 0.0
    %507 = vmatpush1.msra.mxu0 0.0
    %508 = vmatprep.subr.mxu0 0.0
    %509 = vmatpush1.msra.mxu0 0.0
    %510 = vmatprep.subr.mxu0 0.0
    %511 = vmatpush1.msra.mxu0 0.0
    %512 = vmatprep.subr.mxu0 0.0
    %513 = vmatpush1.msra.mxu0 0.0
    %514 = vmatprep.subr.mxu0 0.0
    %515 = vmatpush1.msra.mxu0 0.0
    %516 = vmatprep.subr.mxu0 0.0
    %517 = vmatpush1.msra.mxu0 0.0
    %518 = vmatprep.mubr.f32.mxu0 0.0
    %519 = vmatmul.mubr.f32.gmra.mrb[0].mxu0 %v452
    %v520 = vpop.f32.mrb[0].mxu0
    %v521 = vadd.f32 0.0, %v520
    %v522 = vpop.f32.mrb[0].mxu0
    %v523 = vadd.f32 0.0, %v522
    %524 = vdwg.mxu0
    %v527 = vrot.slane %v521, 4
    %v528 = vrot.slane %v523, 4
    %v531 = vadd.f32 %v193, %v527
    %v532 = vadd.f32 %v195, %v528
    %v533 = vtanh.pop %v531
    %v534 = vtanh.pop %v532
    %v535 = vxor.u32 %v531, 2147483648
    %v536 = vxor.u32 %v532, 2147483648
    %v537 = vmul.f32 %v535, 1.442695
    %v538 = vpow.pop %v537
    %v539 = vmul.f32 %v536, 1.442695
    %v540 = vpow.pop %v539
    %v541 = vadd.f32 %v538, 1.0
    %v542 = vadd.f32 %v540, 1.0
    %v543 = vrcp.pop %v541
    %v544 = vmul.f32 1.0, %v543
    %v545 = vrcp.pop %v542
    %v546 = vmul.f32 1.0, %v545
    %v547 = vsel %vm84, %v533, %v544
    %v548 = vsel %vm85, %v534, %v546
    %v550 = vrot.slane %v436, 6
    %v552 = vmul.f32 %v547, %v550
    %v553 = vmul.f32 %v547, %v548
    %555 = vrot.lane.b32.xlu0 %v553, 64
    %v556 = vpop.permute.xlu0 %555
    %v558 = vadd.f32 %v552, %v556
    %v559 = vtanh.pop %v558
    %v560 = vmul.f32 %v548, %v559
    %562 = vrot.lane.b32.xlu0 %v560, 64
    %v563 = vpop.permute.xlu0 %562
    %vm565 = vcmask 259076
    %566 = vst.msk [vmem:[#allocation2] sm:$0x30] %vm565, %v563
    %567 = vrot.lane.b32.xlu0 %v560, 32
    %v568 = vpop.permute.xlu0 %567
    %570 = vst.msk [vmem:[#allocation3 + $0x6] sm:$0x30] %vm565, %v568
    %v571 = vrot.slane %v560, 4
    %572 = vrot.lane.b32.xlu0 %v571, 64
    %v573 = vpop.permute.xlu0 %572
    %v574 = vsel %vm119, %v573, 0
    %576 = vmatprep.subr.mxu0 %v204
    %577 = vmatpush1.msra.mxu0 %v203
    %578 = vmatprep.subr.mxu0 %v206
    %579 = vmatpush1.msra.mxu0 %v205
    %580 = vmatprep.subr.mxu0 %v208
    %581 = vmatpush1.msra.mxu0 %v207
    %582 = vmatprep.subr.mxu0 %v210
    %583 = vmatpush1.msra.mxu0 %v209
    %584 = vmatprep.subr.mxu0 %v212
    %585 = vmatpush1.msra.mxu0 %v211
    %586 = vmatprep.subr.mxu0 %v214
    %587 = vmatpush1.msra.mxu0 %v213
    %588 = vmatprep.subr.mxu0 %v216
    %589 = vmatpush1.msra.mxu0 %v215
    %590 = vmatprep.subr.mxu0 %v218
    %591 = vmatpush1.msra.mxu0 %v217
    %592 = vmatprep.subr.mxu0 0.0
    %593 = vmatpush1.msra.mxu0 0.0
    %594 = vmatprep.subr.mxu0 0.0
    %595 = vmatpush1.msra.mxu0 0.0
    %596 = vmatprep.subr.mxu0 0.0
    %597 = vmatpush1.msra.mxu0 0.0
    %598 = vmatprep.subr.mxu0 0.0
    %599 = vmatpush1.msra.mxu0 0.0
    %600 = vmatprep.subr.mxu0 0.0
    %601 = vmatpush1.msra.mxu0 0.0
    %602 = vmatprep.subr.mxu0 0.0
    %603 = vmatpush1.msra.mxu0 0.0
    %604 = vmatprep.subr.mxu0 0.0
    %605 = vmatpush1.msra.mxu0 0.0
    %606 = vmatprep.subr.mxu0 0.0
    %607 = vmatpush1.msra.mxu0 0.0
    %608 = vmatprep.subr.mxu0 0.0
    %609 = vmatpush1.msra.mxu0 0.0
    %610 = vmatprep.subr.mxu0 0.0
    %611 = vmatpush1.msra.mxu0 0.0
    %612 = vmatprep.subr.mxu0 0.0
    %613 = vmatpush1.msra.mxu0 0.0
    %614 = vmatprep.subr.mxu0 0.0
    %615 = vmatpush1.msra.mxu0 0.0
    %616 = vmatprep.subr.mxu0 0.0
    %617 = vmatpush1.msra.mxu0 0.0
    %618 = vmatprep.subr.mxu0 0.0
    %619 = vmatpush1.msra.mxu0 0.0
    %620 = vmatprep.subr.mxu0 0.0
    %621 = vmatpush1.msra.mxu0 0.0
    %622 = vmatprep.subr.mxu0 0.0
    %623 = vmatpush1.msra.mxu0 0.0
    %624 = vmatprep.subr.mxu0 0.0
    %625 = vmatpush1.msra.mxu0 0.0
    %626 = vmatprep.subr.mxu0 0.0
    %627 = vmatpush1.msra.mxu0 0.0
    %628 = vmatprep.subr.mxu0 0.0
    %629 = vmatpush1.msra.mxu0 0.0
    %630 = vmatprep.subr.mxu0 0.0
    %631 = vmatpush1.msra.mxu0 0.0
    %632 = vmatprep.subr.mxu0 0.0
    %633 = vmatpush1.msra.mxu0 0.0
    %634 = vmatprep.subr.mxu0 0.0
    %635 = vmatpush1.msra.mxu0 0.0
    %636 = vmatprep.subr.mxu0 0.0
    %637 = vmatpush1.msra.mxu0 0.0
    %638 = vmatprep.subr.mxu0 0.0
    %639 = vmatpush1.msra.mxu0 0.0
    %640 = vmatprep.mubr.f32.mxu0 0.0
    %641 = vmatmul.mubr.f32.gmra.mrb[0].mxu0 %v574
    %v642 = vpop.f32.mrb[0].mxu0
    %v643 = vadd.f32 0.0, %v642
    %v644 = vpop.f32.mrb[0].mxu0
    %v645 = vadd.f32 0.0, %v644
    %646 = vdwg.mxu0
    %v649 = vrot.slane %v643, 2
    %v650 = vrot.slane %v645, 2
    %v653 = vadd.f32 %v193, %v649
    %v654 = vadd.f32 %v195, %v650
    %v655 = vtanh.pop %v653
    %v656 = vtanh.pop %v654
    %v657 = vxor.u32 %v653, 2147483648
    %v658 = vxor.u32 %v654, 2147483648
    %v659 = vmul.f32 %v657, 1.442695
    %v660 = vpow.pop %v659
    %v661 = vmul.f32 %v658, 1.442695
    %v662 = vpow.pop %v661
    %v663 = vadd.f32 %v660, 1.0
    %v664 = vadd.f32 %v662, 1.0
    %v665 = vrcp.pop %v663
    %v666 = vmul.f32 1.0, %v665
    %v667 = vrcp.pop %v664
    %v668 = vmul.f32 1.0, %v667
    %v669 = vsel %vm84, %v655, %v666
    %v670 = vsel %vm85, %v656, %v668
    %v672 = vrot.slane %v558, 6
    %v674 = vmul.f32 %v669, %v672
    %v675 = vmul.f32 %v669, %v670
    %677 = vrot.lane.b32.xlu0 %v675, 64
    %v678 = vpop.permute.xlu0 %677
    %v680 = vadd.f32 %v674, %v678
    %v681 = vtanh.pop %v680
    %v682 = vmul.f32 %v670, %v681
    %684 = vrot.lane.b32.xlu0 %v682, 64
    %v685 = vpop.permute.xlu0 %684
    %vm687 = vcmask 261126
    %688 = vst.msk [vmem:[#allocation2] sm:$0xc0] %vm687, %v685
    %689 = vrot.lane.b32.xlu0 %v682, 32
    %v690 = vpop.permute.xlu0 %689
    %692 = vst.msk [vmem:[#allocation3 + $0x2] sm:$0xc0] %vm687, %v690
    %v693 = vrot.slane %v682, 6
    %694 = vrot.lane.b32.xlu0 %v693, 64
    %v695 = vpop.permute.xlu0 %694
    %v696 = vsel %vm119, %v695, 0
    %698 = vmatprep.subr.mxu0 %v204
    %699 = vmatpush1.msra.mxu0 %v203
    %700 = vmatprep.subr.mxu0 %v206
    %701 = vmatpush1.msra.mxu0 %v205
    %702 = vmatprep.subr.mxu0 %v208
    %703 = vmatpush1.msra.mxu0 %v207
    %704 = vmatprep.subr.mxu0 %v210
    %705 = vmatpush1.msra.mxu0 %v209
    %706 = vmatprep.subr.mxu0 %v212
    %707 = vmatpush1.msra.mxu0 %v211
    %708 = vmatprep.subr.mxu0 %v214
    %709 = vmatpush1.msra.mxu0 %v213
    %710 = vmatprep.subr.mxu0 %v216
    %711 = vmatpush1.msra.mxu0 %v215
    %712 = vmatprep.subr.mxu0 %v218
    %713 = vmatpush1.msra.mxu0 %v217
    %714 = vmatprep.subr.mxu0 0.0
    %715 = vmatpush1.msra.mxu0 0.0
    %716 = vmatprep.subr.mxu0 0.0
    %717 = vmatpush1.msra.mxu0 0.0
    %718 = vmatprep.subr.mxu0 0.0
    %719 = vmatpush1.msra.mxu0 0.0
    %720 = vmatprep.subr.mxu0 0.0
    %721 = vmatpush1.msra.mxu0 0.0
    %722 = vmatprep.subr.mxu0 0.0
    %723 = vmatpush1.msra.mxu0 0.0
    %724 = vmatprep.subr.mxu0 0.0
    %725 = vmatpush1.msra.mxu0 0.0
    %726 = vmatprep.subr.mxu0 0.0
    %727 = vmatpush1.msra.mxu0 0.0
    %728 = vmatprep.subr.mxu0 0.0
    %729 = vmatpush1.msra.mxu0 0.0
    %730 = vmatprep.subr.mxu0 0.0
    %731 = vmatpush1.msra.mxu0 0.0
    %732 = vmatprep.subr.mxu0 0.0
    %733 = vmatpush1.msra.mxu0 0.0
    %734 = vmatprep.subr.mxu0 0.0
    %735 = vmatpush1.msra.mxu0 0.0
    %736 = vmatprep.subr.mxu0 0.0
    %737 = vmatpush1.msra.mxu0 0.0
    %738 = vmatprep.subr.mxu0 0.0
    %739 = vmatpush1.msra.mxu0 0.0
    %740 = vmatprep.subr.mxu0 0.0
    %741 = vmatpush1.msra.mxu0 0.0
    %742 = vmatprep.subr.mxu0 0.0
    %743 = vmatpush1.msra.mxu0 0.0
    %744 = vmatprep.subr.mxu0 0.0
    %745 = vmatpush1.msra.mxu0 0.0
    %746 = vmatprep.subr.mxu0 0.0
    %747 = vmatpush1.msra.mxu0 0.0
    %748 = vmatprep.subr.mxu0 0.0
    %749 = vmatpush1.msra.mxu0 0.0
    %750 = vmatprep.subr.mxu0 0.0
    %751 = vmatpush1.msra.mxu0 0.0
    %752 = vmatprep.subr.mxu0 0.0
    %753 = vmatpush1.msra.mxu0 0.0
    %754 = vmatprep.subr.mxu0 0.0
    %755 = vmatpush1.msra.mxu0 0.0
    %756 = vmatprep.subr.mxu0 0.0
    %757 = vmatpush1.msra.mxu0 0.0
    %758 = vmatprep.subr.mxu0 0.0
    %759 = vmatpush1.msra.mxu0 0.0
    %760 = vmatprep.subr.mxu0 0.0
    %761 = vmatpush1.msra.mxu0 0.0
    %762 = vmatprep.mubr.f32.mxu0 0.0
    %763 = vmatmul.mubr.f32.gmra.mrb[0].mxu0 %v696
    %v764 = vpop.f32.mrb[0].mxu0
    %v765 = vadd.f32 0.0, %v764
    %v766 = vpop.f32.mrb[0].mxu0
    %v767 = vadd.f32 0.0, %v766
    %768 = vdwg.mxu0
    %v769 = vadd.f32 %v199, %v765
    %v770 = vadd.f32 %v201, %v767
    %v771 = vtanh.pop %v769
    %v772 = vtanh.pop %v770
    %v773 = vxor.u32 %v769, 2147483648
    %v774 = vxor.u32 %v770, 2147483648
    %v775 = vmul.f32 %v773, 1.442695
    %v776 = vpow.pop %v775
    %v777 = vmul.f32 %v774, 1.442695
    %v778 = vpow.pop %v777
    %v779 = vadd.f32 %v776, 1.0
    %v780 = vadd.f32 %v778, 1.0
    %v781 = vrcp.pop %v779
    %v782 = vmul.f32 1.0, %v781
    %v783 = vrcp.pop %v780
    %v784 = vmul.f32 1.0, %v783
    %v785 = vsel %vm84, %v771, %v782
    %v786 = vsel %vm85, %v772, %v784
    %v788 = vrot.slane %v680, 6
    %v790 = vmul.f32 %v785, %v788
    %v791 = vmul.f32 %v785, %v786
    %793 = vrot.lane.b32.xlu0 %v791, 64
    %v794 = vpop.permute.xlu0 %793
    %v796 = vadd.f32 %v790, %v794
    %v797 = vtanh.pop %v796
    %v798 = vmul.f32 %v786, %v797
    %800 = vrot.lane.b32.xlu0 %v798, 64
    %v801 = vpop.permute.xlu0 %800
    %803 = vst.msk [vmem:[#allocation2 + $0x8] sm:$0x3] %vm324, %v801
    %804 = vrot.lane.b32.xlu0 %v798, 32
    %v805 = vpop.permute.xlu0 %804
    %807 = vst.msk [vmem:[#allocation3 + $0x6] sm:$0x3] %vm324, %v805
    %v808 = vsel %vm119, %v801, 0
    %810 = vmatprep.subr.mxu0 %v204
    %811 = vmatpush1.msra.mxu0 %v203
    %812 = vmatprep.subr.mxu0 %v206
    %813 = vmatpush1.msra.mxu0 %v205
    %814 = vmatprep.subr.mxu0 %v208
    %815 = vmatpush1.msra.mxu0 %v207
    %816 = vmatprep.subr.mxu0 %v210
    %817 = vmatpush1.msra.mxu0 %v209
    %818 = vmatprep.subr.mxu0 %v212
    %819 = vmatpush1.msra.mxu0 %v211
    %820 = vmatprep.subr.mxu0 %v214
    %821 = vmatpush1.msra.mxu0 %v213
    %822 = vmatprep.subr.mxu0 %v216
    %823 = vmatpush1.msra.mxu0 %v215
    %824 = vmatprep.subr.mxu0 %v218
    %825 = vmatpush1.msra.mxu0 %v217
    %826 = vmatprep.subr.mxu0 0.0
    %827 = vmatpush1.msra.mxu0 0.0
    %828 = vmatprep.subr.mxu0 0.0
    %829 = vmatpush1.msra.mxu0 0.0
    %830 = vmatprep.subr.mxu0 0.0
    %831 = vmatpush1.msra.mxu0 0.0
    %832 = vmatprep.subr.mxu0 0.0
    %833 = vmatpush1.msra.mxu0 0.0
    %834 = vmatprep.subr.mxu0 0.0
    %835 = vmatpush1.msra.mxu0 0.0
    %836 = vmatprep.subr.mxu0 0.0
    %837 = vmatpush1.msra.mxu0 0.0
    %838 = vmatprep.subr.mxu0 0.0
    %839 = vmatpush1.msra.mxu0 0.0
    %840 = vmatprep.subr.mxu0 0.0
    %841 = vmatpush1.msra.mxu0 0.0
    %842 = vmatprep.subr.mxu0 0.0
    %843 = vmatpush1.msra.mxu0 0.0
    %844 = vmatprep.subr.mxu0 0.0
    %845 = vmatpush1.msra.mxu0 0.0
    %846 = vmatprep.subr.mxu0 0.0
    %847 = vmatpush1.msra.mxu0 0.0
    %848 = vmatprep.subr.mxu0 0.0
    %849 = vmatpush1.msra.mxu0 0.0
    %850 = vmatprep.subr.mxu0 0.0
    %851 = vmatpush1.msra.mxu0 0.0
    %852 = vmatprep.subr.mxu0 0.0
    %853 = vmatpush1.msra.mxu0 0.0
    %854 = vmatprep.subr.mxu0 0.0
    %855 = vmatpush1.msra.mxu0 0.0
    %856 = vmatprep.subr.mxu0 0.0
    %857 = vmatpush1.msra.mxu0 0.0
    %858 = vmatprep.subr.mxu0 0.0
    %859 = vmatpush1.msra.mxu0 0.0
    %860 = vmatprep.subr.mxu0 0.0
    %861 = vmatpush1.msra.mxu0 0.0
    %862 = vmatprep.subr.mxu0 0.0
    %863 = vmatpush1.msra.mxu0 0.0
    %864 = vmatprep.subr.mxu0 0.0
    %865 = vmatpush1.msra.mxu0 0.0
    %866 = vmatprep.subr.mxu0 0.0
    %867 = vmatpush1.msra.mxu0 0.0
    %868 = vmatprep.subr.mxu0 0.0
    %869 = vmatpush1.msra.mxu0 0.0
    %870 = vmatprep.subr.mxu0 0.0
    %871 = vmatpush1.msra.mxu0 0.0
    %872 = vmatprep.subr.mxu0 0.0
    %873 = vmatpush1.msra.mxu0 0.0
    %874 = vmatprep.mubr.f32.mxu0 0.0
    %875 = vmatmul.mubr.f32.gmra.mrb[0].mxu0 %v808
    %v876 = vpop.f32.mrb[0].mxu0
    %v877 = vadd.f32 0.0, %v876
    %v878 = vpop.f32.mrb[0].mxu0
    %v879 = vadd.f32 0.0, %v878
    %880 = vdwg.mxu0
    %v883 = vrot.slane %v877, 6
    %v884 = vrot.slane %v879, 6
    %v887 = vadd.f32 %v199, %v883
    %v888 = vadd.f32 %v201, %v884
    %v889 = vtanh.pop %v887
    %v890 = vtanh.pop %v888
    %v891 = vxor.u32 %v887, 2147483648
    %v892 = vxor.u32 %v888, 2147483648
    %v893 = vmul.f32 %v891, 1.442695
    %v894 = vpow.pop %v893
    %v895 = vmul.f32 %v892, 1.442695
    %v896 = vpow.pop %v895
    %v897 = vadd.f32 %v894, 1.0
    %v898 = vadd.f32 %v896, 1.0
    %v899 = vrcp.pop %v897
    %v900 = vmul.f32 1.0, %v899
    %v901 = vrcp.pop %v898
    %v902 = vmul.f32 1.0, %v901
    %v903 = vsel %vm84, %v889, %v900
    %v904 = vsel %vm85, %v890, %v902
    %v906 = vrot.slane %v796, 6
    %v908 = vmul.f32 %v903, %v906
    %v909 = vmul.f32 %v903, %v904
    %911 = vrot.lane.b32.xlu0 %v909, 64
    %v912 = vpop.permute.xlu0 %911
    %v914 = vadd.f32 %v908, %v912
    %v915 = vtanh.pop %v914
    %v916 = vmul.f32 %v904, %v915
    %918 = vrot.lane.b32.xlu0 %v916, 64
    %v919 = vpop.permute.xlu0 %918
    %921 = vst.msk [vmem:[#allocation2 + $0x8] sm:$0xc] %vm443, %v919
    %922 = vrot.lane.b32.xlu0 %v916, 32
    %v923 = vpop.permute.xlu0 %922
    %925 = vst.msk [vmem:[#allocation3 + $0x2] sm:$0xc] %vm443, %v923
    %v926 = vrot.slane %v916, 2
    %927 = vrot.lane.b32.xlu0 %v926, 64
    %v928 = vpop.permute.xlu0 %927
    %v929 = vsel %vm119, %v928, 0
    %931 = vmatprep.subr.mxu0 %v204
    %932 = vmatpush1.msra.mxu0 %v203
    %933 = vmatprep.subr.mxu0 %v206
    %934 = vmatpush1.msra.mxu0 %v205
    %935 = vmatprep.subr.mxu0 %v208
    %936 = vmatpush1.msra.mxu0 %v207
    %937 = vmatprep.subr.mxu0 %v210
    %938 = vmatpush1.msra.mxu0 %v209
    %939 = vmatprep.subr.mxu0 %v212
    %940 = vmatpush1.msra.mxu0 %v211
    %941 = vmatprep.subr.mxu0 %v214
    %942 = vmatpush1.msra.mxu0 %v213
    %943 = vmatprep.subr.mxu0 %v216
    %944 = vmatpush1.msra.mxu0 %v215
    %945 = vmatprep.subr.mxu0 %v218
    %946 = vmatpush1.msra.mxu0 %v217
    %947 = vmatprep.subr.mxu0 0.0
    %948 = vmatpush1.msra.mxu0 0.0
    %949 = vmatprep.subr.mxu0 0.0
    %950 = vmatpush1.msra.mxu0 0.0
    %951 = vmatprep.subr.mxu0 0.0
    %952 = vmatpush1.msra.mxu0 0.0
    %953 = vmatprep.subr.mxu0 0.0
    %954 = vmatpush1.msra.mxu0 0.0
    %955 = vmatprep.subr.mxu0 0.0
    %956 = vmatpush1.msra.mxu0 0.0
    %957 = vmatprep.subr.mxu0 0.0
    %958 = vmatpush1.msra.mxu0 0.0
    %959 = vmatprep.subr.mxu0 0.0
    %960 = vmatpush1.msra.mxu0 0.0
    %961 = vmatprep.subr.mxu0 0.0
    %962 = vmatpush1.msra.mxu0 0.0
    %963 = vmatprep.subr.mxu0 0.0
    %964 = vmatpush1.msra.mxu0 0.0
    %965 = vmatprep.subr.mxu0 0.0
    %966 = vmatpush1.msra.mxu0 0.0
    %967 = vmatprep.subr.mxu0 0.0
    %968 = vmatpush1.msra.mxu0 0.0
    %969 = vmatprep.subr.mxu0 0.0
    %970 = vmatpush1.msra.mxu0 0.0
    %971 = vmatprep.subr.mxu0 0.0
    %972 = vmatpush1.msra.mxu0 0.0
    %973 = vmatprep.subr.mxu0 0.0
    %974 = vmatpush1.msra.mxu0 0.0
    %975 = vmatprep.subr.mxu0 0.0
    %976 = vmatpush1.msra.mxu0 0.0
    %977 = vmatprep.subr.mxu0 0.0
    %978 = vmatpush1.msra.mxu0 0.0
    %979 = vmatprep.subr.mxu0 0.0
    %980 = vmatpush1.msra.mxu0 0.0
    %981 = vmatprep.subr.mxu0 0.0
    %982 = vmatpush1.msra.mxu0 0.0
    %983 = vmatprep.subr.mxu0 0.0
    %984 = vmatpush1.msra.mxu0 0.0
    %985 = vmatprep.subr.mxu0 0.0
    %986 = vmatpush1.msra.mxu0 0.0
    %987 = vmatprep.subr.mxu0 0.0
    %988 = vmatpush1.msra.mxu0 0.0
    %989 = vmatprep.subr.mxu0 0.0
    %990 = vmatpush1.msra.mxu0 0.0
    %991 = vmatprep.subr.mxu0 0.0
    %992 = vmatpush1.msra.mxu0 0.0
    %993 = vmatprep.subr.mxu0 0.0
    %994 = vmatpush1.msra.mxu0 0.0
    %995 = vmatprep.mubr.f32.mxu0 0.0
    %996 = vmatmul.mubr.f32.gmra.mrb[0].mxu0 %v929
    %v997 = vpop.f32.mrb[0].mxu0
    %v998 = vadd.f32 0.0, %v997
    %v999 = vpop.f32.mrb[0].mxu0
    %v1000 = vadd.f32 0.0, %v999
    %1001 = vdwg.mxu0
    %v1004 = vrot.slane %v998, 4
    %v1005 = vrot.slane %v1000, 4
    %v1008 = vadd.f32 %v199, %v1004
    %v1009 = vadd.f32 %v201, %v1005
    %v1010 = vtanh.pop %v1008
    %v1011 = vtanh.pop %v1009
    %v1012 = vxor.u32 %v1008, 2147483648
    %v1013 = vxor.u32 %v1009, 2147483648
    %v1014 = vmul.f32 %v1012, 1.442695
    %v1015 = vpow.pop %v1014
    %v1016 = vmul.f32 %v1013, 1.442695
    %v1017 = vpow.pop %v1016
    %v1018 = vadd.f32 %v1015, 1.0
    %v1019 = vadd.f32 %v1017, 1.0
    %v1020 = vrcp.pop %v1018
    %v1021 = vmul.f32 1.0, %v1020
    %v1022 = vrcp.pop %v1019
    %v1023 = vmul.f32 1.0, %v1022
    %v1024 = vsel %vm84, %v1010, %v1021
    %v1025 = vsel %vm85, %v1011, %v1023
    %v1027 = vrot.slane %v914, 6
    %v1029 = vmul.f32 %v1024, %v1027
    %v1030 = vmul.f32 %v1024, %v1025
    %1032 = vrot.lane.b32.xlu0 %v1030, 64
    %v1033 = vpop.permute.xlu0 %1032
    %v1035 = vadd.f32 %v1029, %v1033
    %v1036 = vtanh.pop %v1035
    %v1037 = vmul.f32 %v1025, %v1036
    %1039 = vrot.lane.b32.xlu0 %v1037, 64
    %v1040 = vpop.permute.xlu0 %1039
    %1042 = vst.msk [vmem:[#allocation2 + $0x8] sm:$0x30] %vm565, %v1040
    %1043 = vrot.lane.b32.xlu0 %v1037, 32
    %v1044 = vpop.permute.xlu0 %1043
    %1046 = vst.msk [vmem:[#allocation3 - $0x2] sm:$0x30] %vm565, %v1044
    %v1047 = vrot.slane %v1037, 4
    %1048 = vrot.lane.b32.xlu0 %v1047, 64
    %v1049 = vpop.permute.xlu0 %1048
    %v1050 = vsel %vm119, %v1049, 0
    %1052 = vmatprep.subr.mxu0 %v204
    %1053 = vmatpush1.msra.mxu0 %v203
    %1054 = vmatprep.subr.mxu0 %v206
    %1055 = vmatpush1.msra.mxu0 %v205
    %1056 = vmatprep.subr.mxu0 %v208
    %1057 = vmatpush1.msra.mxu0 %v207
    %1058 = vmatprep.subr.mxu0 %v210
    %1059 = vmatpush1.msra.mxu0 %v209
    %1060 = vmatprep.subr.mxu0 %v212
    %1061 = vmatpush1.msra.mxu0 %v211
    %1062 = vmatprep.subr.mxu0 %v214
    %1063 = vmatpush1.msra.mxu0 %v213
    %1064 = vmatprep.subr.mxu0 %v216
    %1065 = vmatpush1.msra.mxu0 %v215
    %1066 = vmatprep.subr.mxu0 %v218
    %1067 = vmatpush1.msra.mxu0 %v217
    %1068 = vmatprep.subr.mxu0 0.0
    %1069 = vmatpush1.msra.mxu0 0.0
    %1070 = vmatprep.subr.mxu0 0.0
    %1071 = vmatpush1.msra.mxu0 0.0
    %1072 = vmatprep.subr.mxu0 0.0
    %1073 = vmatpush1.msra.mxu0 0.0
    %1074 = vmatprep.subr.mxu0 0.0
    %1075 = vmatpush1.msra.mxu0 0.0
    %1076 = vmatprep.subr.mxu0 0.0
    %1077 = vmatpush1.msra.mxu0 0.0
    %1078 = vmatprep.subr.mxu0 0.0
    %1079 = vmatpush1.msra.mxu0 0.0
    %1080 = vmatprep.subr.mxu0 0.0
    %1081 = vmatpush1.msra.mxu0 0.0
    %1082 = vmatprep.subr.mxu0 0.0
    %1083 = vmatpush1.msra.mxu0 0.0
    %1084 = vmatprep.subr.mxu0 0.0
    %1085 = vmatpush1.msra.mxu0 0.0
    %1086 = vmatprep.subr.mxu0 0.0
    %1087 = vmatpush1.msra.mxu0 0.0
    %1088 = vmatprep.subr.mxu0 0.0
    %1089 = vmatpush1.msra.mxu0 0.0
    %1090 = vmatprep.subr.mxu0 0.0
    %1091 = vmatpush1.msra.mxu0 0.0
    %1092 = vmatprep.subr.mxu0 0.0
    %1093 = vmatpush1.msra.mxu0 0.0
    %1094 = vmatprep.subr.mxu0 0.0
    %1095 = vmatpush1.msra.mxu0 0.0
    %1096 = vmatprep.subr.mxu0 0.0
    %1097 = vmatpush1.msra.mxu0 0.0
    %1098 = vmatprep.subr.mxu0 0.0
    %1099 = vmatpush1.msra.mxu0 0.0
    %1100 = vmatprep.subr.mxu0 0.0
    %1101 = vmatpush1.msra.mxu0 0.0
    %1102 = vmatprep.subr.mxu0 0.0
    %1103 = vmatpush1.msra.mxu0 0.0
    %1104 = vmatprep.subr.mxu0 0.0
    %1105 = vmatpush1.msra.mxu0 0.0
    %1106 = vmatprep.subr.mxu0 0.0
    %1107 = vmatpush1.msra.mxu0 0.0
    %1108 = vmatprep.subr.mxu0 0.0
    %1109 = vmatpush1.msra.mxu0 0.0
    %1110 = vmatprep.subr.mxu0 0.0
    %1111 = vmatpush1.msra.mxu0 0.0
    %1112 = vmatprep.subr.mxu0 0.0
    %1113 = vmatpush1.msra.mxu0 0.0
    %1114 = vmatprep.subr.mxu0 0.0
    %1115 = vmatpush1.msra.mxu0 0.0
    %1116 = vmatprep.mubr.f32.mxu0 0.0
    %1117 = vmatmul.mubr.f32.gmra.mrb[0].mxu0 %v1050
    %v1118 = vpop.f32.mrb[0].mxu0
    %v1119 = vadd.f32 0.0, %v1118
    %v1120 = vpop.f32.mrb[0].mxu0
    %v1121 = vadd.f32 0.0, %v1120
    %1122 = vdwg.mxu0
    %v1125 = vrot.slane %v1119, 2
    %v1126 = vrot.slane %v1121, 2
    %v1129 = vadd.f32 %v199, %v1125
    %v1130 = vadd.f32 %v201, %v1126
    %v1131 = vtanh.pop %v1129
    %v1132 = vtanh.pop %v1130
    %v1133 = vxor.u32 %v1129, 2147483648
    %v1134 = vxor.u32 %v1130, 2147483648
    %v1135 = vmul.f32 %v1133, 1.442695
    %v1136 = vpow.pop %v1135
    %v1137 = vmul.f32 %v1134, 1.442695
    %v1138 = vpow.pop %v1137
    %v1139 = vadd.f32 %v1136, 1.0
    %v1140 = vadd.f32 %v1138, 1.0
    %v1141 = vrcp.pop %v1139
    %v1142 = vmul.f32 1.0, %v1141
    %v1143 = vrcp.pop %v1140
    %v1144 = vmul.f32 1.0, %v1143
    %v1145 = vsel %vm84, %v1131, %v1142
    %v1146 = vsel %vm85, %v1132, %v1144
    %v1148 = vrot.slane %v1035, 6
    %v1150 = vmul.f32 %v1145, %v1148
    %v1151 = vmul.f32 %v1145, %v1146
    %1153 = vrot.lane.b32.xlu0 %v1151, 64
    %v1154 = vpop.permute.xlu0 %1153
    %v1156 = vadd.f32 %v1150, %v1154
    %v1157 = vtanh.pop %v1156
    %v1158 = vmul.f32 %v1146, %v1157
    %1160 = vrot.lane.b32.xlu0 %v1158, 64
    %v1161 = vpop.permute.xlu0 %1160
    %1163 = vst.msk [vmem:[#allocation2 + $0x8] sm:$0xc0] %vm687, %v1161
    %1164 = vrot.lane.b32.xlu0 %v1158, 32
    %v1165 = vpop.permute.xlu0 %1164
    %1167 = vst.msk [vmem:[#allocation3 - $0x6] sm:$0xc0] %vm687, %v1165
    %v1168 = vld [vmem:[#allocation2] sm:$0xff]
    %v1169 = vld [vmem:[#allocation2 + $0x8] sm:$0xff]
    %v1170 = vld [vmem:[%s4] sm:$0xff]
    %v1171 = vld [vmem:[%s4 + $0x8] sm:$0xff]
    %v1172 = vld [vmem:[%s4 + $0x10] sm:$0xff]
    %v1173 = vld [vmem:[%s4 + $0x18] sm:$0xff]
    %v1174 = vld [vmem:[%s4 + $0x20] sm:$0xff]
    %v1175 = vld [vmem:[%s4 + $0x28] sm:$0xff]
    %v1176 = vld [vmem:[%s4 + $0x30] sm:$0xff]
    %v1177 = vld [vmem:[%s4 + $0x38] sm:$0xff]
    %v1178 = vld [vmem:[#allocation3] sm:$0xff]
    %v1179 = vld [vmem:[#allocation3 + $0x8] sm:$0xff]
    %v1180 = vld [vmem:[#allocation7] sm:$0xff]
    %v1181 = vld [vmem:[#allocation7 + $0x8] sm:$0xff]
    %v1182 = vld [vmem:[#allocation7 + $0x10] sm:$0xff]
    %v1183 = vld [vmem:[#allocation7 + $0x18] sm:$0xff]
    %v1184 = vld [vmem:[#allocation7 + $0x20] sm:$0xff]
    %v1185 = vld [vmem:[#allocation7 + $0x28] sm:$0xff]
    %v1186 = vld [vmem:[#allocation7 + $0x30] sm:$0xff]
    %v1187 = vld [vmem:[#allocation7 + $0x38] sm:$0xff]
    %vm1188 = vcmask 261120
    %v1190 = vsel %vm1188, %v1178, 0
    %v1193 = vsel %vm1188, %v1179, 0
    %1195 = vmatprep.subr.mxu0 %v1181
    %1196 = vmatpush1.msra.mxu0 %v1180
    %1197 = vmatprep.subr.mxu0 %v1183
    %1198 = vmatpush1.msra.mxu0 %v1182
    %1199 = vmatprep.subr.mxu0 %v1185
    %1200 = vmatpush1.msra.mxu0 %v1184
    %1201 = vmatprep.subr.mxu0 %v1187
    %1202 = vmatpush1.msra.mxu0 %v1186
    %1203 = vmatprep.subr.mxu0 0.0
    %1204 = vmatpush1.msra.mxu0 0.0
    %1205 = vmatprep.subr.mxu0 0.0
    %1206 = vmatpush1.msra.mxu0 0.0
    %1207 = vmatprep.subr.mxu0 0.0
    %1208 = vmatpush1.msra.mxu0 0.0
    %1209 = vmatprep.subr.mxu0 0.0
    %1210 = vmatpush1.msra.mxu0 0.0
    %1211 = vmatprep.subr.mxu0 0.0
    %1212 = vmatpush1.msra.mxu0 0.0
    %1213 = vmatprep.subr.mxu0 0.0
    %1214 = vmatpush1.msra.mxu0 0.0
    %1215 = vmatprep.subr.mxu0 0.0
    %1216 = vmatpush1.msra.mxu0 0.0
    %1217 = vmatprep.subr.mxu0 0.0
    %1218 = vmatpush1.msra.mxu0 0.0
    %1219 = vmatprep.subr.mxu0 0.0
    %1220 = vmatpush1.msra.mxu0 0.0
    %1221 = vmatprep.subr.mxu0 0.0
    %1222 = vmatpush1.msra.mxu0 0.0
    %1223 = vmatprep.subr.mxu0 0.0
    %1224 = vmatpush1.msra.mxu0 0.0
    %1225 = vmatprep.subr.mxu0 0.0
    %1226 = vmatpush1.msra.mxu0 0.0
    %1227 = vmatprep.subr.mxu0 0.0
    %1228 = vmatpush1.msra.mxu0 0.0
    %1229 = vmatprep.subr.mxu0 0.0
    %1230 = vmatpush1.msra.mxu0 0.0
    %1231 = vmatprep.subr.mxu0 0.0
    %1232 = vmatpush1.msra.mxu0 0.0
    %1233 = vmatprep.subr.mxu0 0.0
    %1234 = vmatpush1.msra.mxu0 0.0
    %1235 = vmatprep.subr.mxu0 0.0
    %1236 = vmatpush1.msra.mxu0 0.0
    %1237 = vmatprep.subr.mxu0 0.0
    %1238 = vmatpush1.msra.mxu0 0.0
    %1239 = vmatprep.subr.mxu0 0.0
    %1240 = vmatpush1.msra.mxu0 0.0
    %1241 = vmatprep.subr.mxu0 0.0
    %1242 = vmatpush1.msra.mxu0 0.0
    %1243 = vmatprep.subr.mxu0 0.0
    %1244 = vmatpush1.msra.mxu0 0.0
    %1245 = vmatprep.subr.mxu0 0.0
    %1246 = vmatpush1.msra.mxu0 0.0
    %1247 = vmatprep.subr.mxu0 0.0
    %1248 = vmatpush1.msra.mxu0 0.0
    %1249 = vmatprep.subr.mxu0 0.0
    %1250 = vmatpush1.msra.mxu0 0.0
    %1251 = vmatprep.subr.mxu0 0.0
    %1252 = vmatpush1.msra.mxu0 0.0
    %1253 = vmatprep.subr.mxu0 0.0
    %1254 = vmatpush1.msra.mxu0 0.0
    %1255 = vmatprep.subr.mxu0 0.0
    %1256 = vmatpush1.msra.mxu0 0.0
    %1257 = vmatprep.subr.mxu0 0.0
    %1258 = vmatpush1.msra.mxu0 0.0
    %1259 = vmatprep.mubr.f32.mxu0 0.0
    %1260 = vmatmul.mubr.f32.gmra.mrb[0].mxu0 %v1190
    %v1261 = vpop.f32.mrb[0].mxu0
    %v1262 = vadd.f32 0.0, %v1261
    %v1263 = vpop.f32.mrb[0].mxu0
    %1264 = vmatprep.mubr.f32.mxu0 0.0
    %1265 = vmatmul.mubr.f32.gmra.mrb[0].mxu0 %v1193
    %v1266 = vpop.f32.mrb[0].mxu0
    %v1267 = vadd.f32 0.0, %v1266
    %v1268 = vpop.f32.mrb[0].mxu0
    %v1269 = vadd.f32 0.0, %v1268
    %1270 = vdwg.mxu0
    %v1272 = vsel %vm1188, %v1168, 0
    %v1275 = vsel %vm1188, %v1169, 0
    %1277 = vmatprep.subr.mxu0 %v1171
    %1278 = vmatpush1.msra.mxu0 %v1170
    %1279 = vmatprep.subr.mxu0 %v1173
    %1280 = vmatpush1.msra.mxu0 %v1172
    %1281 = vmatprep.subr.mxu0 %v1175
    %1282 = vmatpush1.msra.mxu0 %v1174
    %1283 = vmatprep.subr.mxu0 %v1177
    %1284 = vmatpush1.msra.mxu0 %v1176
    %1285 = vmatprep.subr.mxu0 0.0
    %1286 = vmatpush1.msra.mxu0 0.0
    %1287 = vmatprep.subr.mxu0 0.0
    %1288 = vmatpush1.msra.mxu0 0.0
    %1289 = vmatprep.subr.mxu0 0.0
    %1290 = vmatpush1.msra.mxu0 0.0
    %1291 = vmatprep.subr.mxu0 0.0
    %1292 = vmatpush1.msra.mxu0 0.0
    %1293 = vmatprep.subr.mxu0 0.0
    %1294 = vmatpush1.msra.mxu0 0.0
    %1295 = vmatprep.subr.mxu0 0.0
    %1296 = vmatpush1.msra.mxu0 0.0
    %1297 = vmatprep.subr.mxu0 0.0
    %1298 = vmatpush1.msra.mxu0 0.0
    %1299 = vmatprep.subr.mxu0 0.0
    %1300 = vmatpush1.msra.mxu0 0.0
    %1301 = vmatprep.subr.mxu0 0.0
    %1302 = vmatpush1.msra.mxu0 0.0
    %1303 = vmatprep.subr.mxu0 0.0
    %1304 = vmatpush1.msra.mxu0 0.0
    %1305 = vmatprep.subr.mxu0 0.0
    %1306 = vmatpush1.msra.mxu0 0.0
    %1307 = vmatprep.subr.mxu0 0.0
    %1308 = vmatpush1.msra.mxu0 0.0
    %1309 = vmatprep.subr.mxu0 0.0
    %1310 = vmatpush1.msra.mxu0 0.0
    %1311 = vmatprep.subr.mxu0 0.0
    %1312 = vmatpush1.msra.mxu0 0.0
    %1313 = vmatprep.subr.mxu0 0.0
    %1314 = vmatpush1.msra.mxu0 0.0
    %1315 = vmatprep.subr.mxu0 0.0
    %1316 = vmatpush1.msra.mxu0 0.0
    %1317 = vmatprep.subr.mxu0 0.0
    %1318 = vmatpush1.msra.mxu0 0.0
    %1319 = vmatprep.subr.mxu0 0.0
    %1320 = vmatpush1.msra.mxu0 0.0
    %1321 = vmatprep.subr.mxu0 0.0
    %1322 = vmatpush1.msra.mxu0 0.0
    %1323 = vmatprep.subr.mxu0 0.0
    %1324 = vmatpush1.msra.mxu0 0.0
    %1325 = vmatprep.subr.mxu0 0.0
    %1326 = vmatpush1.msra.mxu0 0.0
    %1327 = vmatprep.subr.mxu0 0.0
    %1328 = vmatpush1.msra.mxu0 0.0
    %1329 = vmatprep.subr.mxu0 0.0
    %1330 = vmatpush1.msra.mxu0 0.0
    %1331 = vmatprep.subr.mxu0 0.0
    %1332 = vmatpush1.msra.mxu0 0.0
    %1333 = vmatprep.subr.mxu0 0.0
    %1334 = vmatpush1.msra.mxu0 0.0
    %1335 = vmatprep.subr.mxu0 0.0
    %1336 = vmatpush1.msra.mxu0 0.0
    %1337 = vmatprep.subr.mxu0 0.0
    %1338 = vmatpush1.msra.mxu0 0.0
    %1339 = vmatprep.subr.mxu0 0.0
    %1340 = vmatpush1.msra.mxu0 0.0
    %1341 = vmatprep.mubr.f32.mxu0 0.0
    %1342 = vmatmul.mubr.f32.gmra.mrb[0].mxu0 %v1272
    %v1343 = vpop.f32.mrb[0].mxu0
    %v1344 = vadd.f32 %v1262, %v1343
    %v1345 = vpop.f32.mrb[0].mxu0
    %1346 = vmatprep.mubr.f32.mxu0 0.0
    %1347 = vmatmul.mubr.f32.gmra.mrb[0].mxu0 %v1275
    %v1348 = vpop.f32.mrb[0].mxu0
    %v1349 = vadd.f32 %v1267, %v1348
    %v1350 = vpop.f32.mrb[0].mxu0
    %v1351 = vadd.f32 %v1269, %v1350
    %1352 = vdwg.mxu0
    %v1353 = vld [vmem:[%s6] sm:$0x3]
    %v1355 = vlaneseq
    %v1356 = vshrl.u32 %v1355, 7
    %v1357 = vsub.s32 0, %v1356
    %v1358 = vrot.slane %v1353, %v1357
    %v1359 = vlaneseq
    %v1360 = vshrl.u32 %v1359, 7
    %v1361 = vsub.s32 1, %v1360
    %v1362 = vrot.slane %v1353, %v1361
    %v1365 = vadd.f32 %v1344, %v1358
    %v1366 = vadd.f32 %v1349, %v1358
    %v1367 = vadd.f32 %v1351, %v1362
    %v1368 = vld [vmem:[#allocation9] sm:$0xff]
    %v1369 = vld [vmem:[#allocation9 + $0x8] sm:$0xff]
    %v1370 = vld [vmem:[#allocation9 + $0x10] sm:$0xff]
    %v1371 = vld [vmem:[#allocation9 + $0x18] sm:$0xff]
    %v1372 = vsel %vm1188, 0.0, 0
    %1374 = vmatprep.subr.mxu0 0.0
    %1375 = vmatpush1.msra.mxu0 %v1368
    %1376 = vmatprep.subr.mxu0 0.0
    %1377 = vmatpush1.msra.mxu0 %v1369
    %1378 = vmatprep.subr.mxu0 0.0
    %1379 = vmatpush1.msra.mxu0 %v1370
    %1380 = vmatprep.subr.mxu0 0.0
    %1381 = vmatpush1.msra.mxu0 %v1371
    %1382 = vmatprep.subr.mxu0 0.0
    %1383 = vmatpush1.msra.mxu0 0.0
    %1384 = vmatprep.subr.mxu0 0.0
    %1385 = vmatpush1.msra.mxu0 0.0
    %1386 = vmatprep.subr.mxu0 0.0
    %1387 = vmatpush1.msra.mxu0 0.0
    %1388 = vmatprep.subr.mxu0 0.0
    %1389 = vmatpush1.msra.mxu0 0.0
    %1390 = vmatprep.subr.mxu0 0.0
    %1391 = vmatpush1.msra.mxu0 0.0
    %1392 = vmatprep.subr.mxu0 0.0
    %1393 = vmatpush1.msra.mxu0 0.0
    %1394 = vmatprep.subr.mxu0 0.0
    %1395 = vmatpush1.msra.mxu0 0.0
    %1396 = vmatprep.subr.mxu0 0.0
    %1397 = vmatpush1.msra.mxu0 0.0
    %1398 = vmatprep.subr.mxu0 0.0
    %1399 = vmatpush1.msra.mxu0 0.0
    %1400 = vmatprep.subr.mxu0 0.0
    %1401 = vmatpush1.msra.mxu0 0.0
    %1402 = vmatprep.subr.mxu0 0.0
    %1403 = vmatpush1.msra.mxu0 0.0
    %1404 = vmatprep.subr.mxu0 0.0
    %1405 = vmatpush1.msra.mxu0 0.0
    %1406 = vmatprep.subr.mxu0 0.0
    %1407 = vmatpush1.msra.mxu0 0.0
    %1408 = vmatprep.subr.mxu0 0.0
    %1409 = vmatpush1.msra.mxu0 0.0
    %1410 = vmatprep.subr.mxu0 0.0
    %1411 = vmatpush1.msra.mxu0 0.0
    %1412 = vmatprep.subr.mxu0 0.0
    %1413 = vmatpush1.msra.mxu0 0.0
    %1414 = vmatprep.subr.mxu0 0.0
    %1415 = vmatpush1.msra.mxu0 0.0
    %1416 = vmatprep.subr.mxu0 0.0
    %1417 = vmatpush1.msra.mxu0 0.0
    %1418 = vmatprep.subr.mxu0 0.0
    %1419 = vmatpush1.msra.mxu0 0.0
    %1420 = vmatprep.subr.mxu0 0.0
    %1421 = vmatpush1.msra.mxu0 0.0
    %1422 = vmatprep.subr.mxu0 0.0
    %1423 = vmatpush1.msra.mxu0 0.0
    %1424 = vmatprep.subr.mxu0 0.0
    %1425 = vmatpush1.msra.mxu0 0.0
    %1426 = vmatprep.subr.mxu0 0.0
    %1427 = vmatpush1.msra.mxu0 0.0
    %1428 = vmatprep.subr.mxu0 0.0
    %1429 = vmatpush1.msra.mxu0 0.0
    %1430 = vmatprep.subr.mxu0 0.0
    %1431 = vmatpush1.msra.mxu0 0.0
    %1432 = vmatprep.subr.mxu0 0.0
    %1433 = vmatpush1.msra.mxu0 0.0
    %1434 = vmatprep.subr.mxu0 0.0
    %1435 = vmatpush1.msra.mxu0 0.0
    %1436 = vmatprep.subr.mxu0 0.0
    %1437 = vmatpush1.msra.mxu0 0.0
    %1438 = vmatprep.mubr.f32.mxu0 0.0
    %1439 = vmatmul.mubr.f32.gmra.mrb[0].mxu0 %v1372
    %v1440 = vpop.f32.mrb[0].mxu0
    %v1441 = vadd.f32 0.0, %v1440
    %v1442 = vpop.f32.mrb[0].mxu0
    %1443 = vdwg.mxu0
    %v1444 = vadd.f32 %v1365, %v1441
    %v1445 = vtanh.pop %v1444
    %v1446 = vxor.u32 %v1444, 2147483648
    %v1447 = vmul.f32 %v1446, 1.442695
    %v1448 = vpow.pop %v1447
    %v1449 = vadd.f32 %v1448, 1.0
    %v1450 = vrcp.pop %v1449
    %v1451 = vmul.f32 1.0, %v1450
    %v1452 = vsel %vm88, %v1445, %v1451
    %v1453 = vmul.f32 %v1452, 0.0
    %1455 = vrot.lane.b32.xlu0 %v1452, 64
    %v1456 = vpop.permute.xlu0 %1455
    %v1458 = vmul.f32 %v1452, %v1456
    %1460 = vrot.lane.b32.xlu0 %v1458, 32
    %v1461 = vpop.permute.xlu0 %1460
    %v1463 = vadd.f32 %v1453, %v1461
    %v1464 = vtanh.pop %v1463
    %1466 = vrot.lane.b32.xlu0 %v1464, 64
    %v1467 = vpop.permute.xlu0 %1466
    %v1469 = vmul.f32 %v1452, %v1467
    %1471 = vrot.lane.b32.xlu0 %v1469, 32
    %v1472 = vpop.permute.xlu0 %1471
    %v1473 = vsel %vm1188, %v1472, 0
    %1475 = vmatprep.subr.mxu0 0.0
    %1476 = vmatpush1.msra.mxu0 %v1368
    %1477 = vmatprep.subr.mxu0 0.0
    %1478 = vmatpush1.msra.mxu0 %v1369
    %1479 = vmatprep.subr.mxu0 0.0
    %1480 = vmatpush1.msra.mxu0 %v1370
    %1481 = vmatprep.subr.mxu0 0.0
    %1482 = vmatpush1.msra.mxu0 %v1371
    %1483 = vmatprep.subr.mxu0 0.0
    %1484 = vmatpush1.msra.mxu0 0.0
    %1485 = vmatprep.subr.mxu0 0.0
    %1486 = vmatpush1.msra.mxu0 0.0
    %1487 = vmatprep.subr.mxu0 0.0
    %1488 = vmatpush1.msra.mxu0 0.0
    %1489 = vmatprep.subr.mxu0 0.0
    %1490 = vmatpush1.msra.mxu0 0.0
    %1491 = vmatprep.subr.mxu0 0.0
    %1492 = vmatpush1.msra.mxu0 0.0
    %1493 = vmatprep.subr.mxu0 0.0
    %1494 = vmatpush1.msra.mxu0 0.0
    %1495 = vmatprep.subr.mxu0 0.0
    %1496 = vmatpush1.msra.mxu0 0.0
    %1497 = vmatprep.subr.mxu0 0.0
    %1498 = vmatpush1.msra.mxu0 0.0
    %1499 = vmatprep.subr.mxu0 0.0
    %1500 = vmatpush1.msra.mxu0 0.0
    %1501 = vmatprep.subr.mxu0 0.0
    %1502 = vmatpush1.msra.mxu0 0.0
    %1503 = vmatprep.subr.mxu0 0.0
    %1504 = vmatpush1.msra.mxu0 0.0
    %1505 = vmatprep.subr.mxu0 0.0
    %1506 = vmatpush1.msra.mxu0 0.0
    %1507 = vmatprep.subr.mxu0 0.0
    %1508 = vmatpush1.msra.mxu0 0.0
    %1509 = vmatprep.subr.mxu0 0.0
    %1510 = vmatpush1.msra.mxu0 0.0
    %1511 = vmatprep.subr.mxu0 0.0
    %1512 = vmatpush1.msra.mxu0 0.0
    %1513 = vmatprep.subr.mxu0 0.0
    %1514 = vmatpush1.msra.mxu0 0.0
    %1515 = vmatprep.subr.mxu0 0.0
    %1516 = vmatpush1.msra.mxu0 0.0
    %1517 = vmatprep.subr.mxu0 0.0
    %1518 = vmatpush1.msra.mxu0 0.0
    %1519 = vmatprep.subr.mxu0 0.0
    %1520 = vmatpush1.msra.mxu0 0.0
    %1521 = vmatprep.subr.mxu0 0.0
    %1522 = vmatpush1.msra.mxu0 0.0
    %1523 = vmatprep.subr.mxu0 0.0
    %1524 = vmatpush1.msra.mxu0 0.0
    %1525 = vmatprep.subr.mxu0 0.0
    %1526 = vmatpush1.msra.mxu0 0.0
    %1527 = vmatprep.subr.mxu0 0.0
    %1528 = vmatpush1.msra.mxu0 0.0
    %1529 = vmatprep.subr.mxu0 0.0
    %1530 = vmatpush1.msra.mxu0 0.0
    %1531 = vmatprep.subr.mxu0 0.0
    %1532 = vmatpush1.msra.mxu0 0.0
    %1533 = vmatprep.subr.mxu0 0.0
    %1534 = vmatpush1.msra.mxu0 0.0
    %1535 = vmatprep.subr.mxu0 0.0
    %1536 = vmatpush1.msra.mxu0 0.0
    %1537 = vmatprep.subr.mxu0 0.0
    %1538 = vmatpush1.msra.mxu0 0.0
    %1539 = vmatprep.mubr.f32.mxu0 0.0
    %1540 = vmatmul.mubr.f32.gmra.mrb[0].mxu0 %v1473
    %v1541 = vpop.f32.mrb[0].mxu0
    %v1542 = vadd.f32 0.0, %v1541
    %v1543 = vpop.f32.mrb[0].mxu0
    %1544 = vdwg.mxu0
    %v1546 = vrot.slane %v1542, 6
    %v1548 = vadd.f32 %v1365, %v1546
    %v1549 = vtanh.pop %v1548
    %v1550 = vxor.u32 %v1548, 2147483648
    %v1551 = vmul.f32 %v1550, 1.442695
    %v1552 = vpow.pop %v1551
    %v1553 = vadd.f32 %v1552, 1.0
    %v1554 = vrcp.pop %v1553
    %v1555 = vmul.f32 1.0, %v1554
    %v1556 = vsel %vm88, %v1549, %v1555
    %v1558 = vrot.slane %v1463, 6
    %v1560 = vmul.f32 %v1556, %v1558
    %1562 = vrot.lane.b32.xlu0 %v1556, 64
    %v1563 = vpop.permute.xlu0 %1562
    %v1565 = vmul.f32 %v1556, %v1563
    %1567 = vrot.lane.b32.xlu0 %v1565, 32
    %v1568 = vpop.permute.xlu0 %1567
    %v1570 = vadd.f32 %v1560, %v1568
    %v1571 = vtanh.pop %v1570
    %1573 = vrot.lane.b32.xlu0 %v1571, 64
    %v1574 = vpop.permute.xlu0 %1573
    %v1576 = vmul.f32 %v1556, %v1574
    %v1578 = vrot.slane %v1576, 2
    %1579 = vrot.lane.b32.xlu0 %v1578, 32
    %v1580 = vpop.permute.xlu0 %1579
    %v1581 = vsel %vm1188, %v1580, 0
    %1583 = vmatprep.subr.mxu0 0.0
    %1584 = vmatpush1.msra.mxu0 %v1368
    %1585 = vmatprep.subr.mxu0 0.0
    %1586 = vmatpush1.msra.mxu0 %v1369
    %1587 = vmatprep.subr.mxu0 0.0
    %1588 = vmatpush1.msra.mxu0 %v1370
    %1589 = vmatprep.subr.mxu0 0.0
    %1590 = vmatpush1.msra.mxu0 %v1371
    %1591 = vmatprep.subr.mxu0 0.0
    %1592 = vmatpush1.msra.mxu0 0.0
    %1593 = vmatprep.subr.mxu0 0.0
    %1594 = vmatpush1.msra.mxu0 0.0
    %1595 = vmatprep.subr.mxu0 0.0
    %1596 = vmatpush1.msra.mxu0 0.0
    %1597 = vmatprep.subr.mxu0 0.0
    %1598 = vmatpush1.msra.mxu0 0.0
    %1599 = vmatprep.subr.mxu0 0.0
    %1600 = vmatpush1.msra.mxu0 0.0
    %1601 = vmatprep.subr.mxu0 0.0
    %1602 = vmatpush1.msra.mxu0 0.0
    %1603 = vmatprep.subr.mxu0 0.0
    %1604 = vmatpush1.msra.mxu0 0.0
    %1605 = vmatprep.subr.mxu0 0.0
    %1606 = vmatpush1.msra.mxu0 0.0
    %1607 = vmatprep.subr.mxu0 0.0
    %1608 = vmatpush1.msra.mxu0 0.0
    %1609 = vmatprep.subr.mxu0 0.0
    %1610 = vmatpush1.msra.mxu0 0.0
    %1611 = vmatprep.subr.mxu0 0.0
    %1612 = vmatpush1.msra.mxu0 0.0
    %1613 = vmatprep.subr.mxu0 0.0
    %1614 = vmatpush1.msra.mxu0 0.0
    %1615 = vmatprep.subr.mxu0 0.0
    %1616 = vmatpush1.msra.mxu0 0.0
    %1617 = vmatprep.subr.mxu0 0.0
    %1618 = vmatpush1.msra.mxu0 0.0
    %1619 = vmatprep.subr.mxu0 0.0
    %1620 = vmatpush1.msra.mxu0 0.0
    %1621 = vmatprep.subr.mxu0 0.0
    %1622 = vmatpush1.msra.mxu0 0.0
    %1623 = vmatprep.subr.mxu0 0.0
    %1624 = vmatpush1.msra.mxu0 0.0
    %1625 = vmatprep.subr.mxu0 0.0
    %1626 = vmatpush1.msra.mxu0 0.0
    %1627 = vmatprep.subr.mxu0 0.0
    %1628 = vmatpush1.msra.mxu0 0.0
    %1629 = vmatprep.subr.mxu0 0.0
    %1630 = vmatpush1.msra.mxu0 0.0
    %1631 = vmatprep.subr.mxu0 0.0
    %1632 = vmatpush1.msra.mxu0 0.0
    %1633 = vmatprep.subr.mxu0 0.0
    %1634 = vmatpush1.msra.mxu0 0.0
    %1635 = vmatprep.subr.mxu0 0.0
    %1636 = vmatpush1.msra.mxu0 0.0
    %1637 = vmatprep.subr.mxu0 0.0
    %1638 = vmatpush1.msra.mxu0 0.0
    %1639 = vmatprep.subr.mxu0 0.0
    %1640 = vmatpush1.msra.mxu0 0.0
    %1641 = vmatprep.subr.mxu0 0.0
    %1642 = vmatpush1.msra.mxu0 0.0
    %1643 = vmatprep.subr.mxu0 0.0
    %1644 = vmatpush1.msra.mxu0 0.0
    %1645 = vmatprep.subr.mxu0 0.0
    %1646 = vmatpush1.msra.mxu0 0.0
    %1647 = vmatprep.mubr.f32.mxu0 0.0
    %1648 = vmatmul.mubr.f32.gmra.mrb[0].mxu0 %v1581
    %v1649 = vpop.f32.mrb[0].mxu0
    %v1650 = vadd.f32 0.0, %v1649
    %v1651 = vpop.f32.mrb[0].mxu0
    %1652 = vdwg.mxu0
    %v1654 = vrot.slane %v1650, 4
    %v1656 = vadd.f32 %v1365, %v1654
    %v1657 = vtanh.pop %v1656
    %v1658 = vxor.u32 %v1656, 2147483648
    %v1659 = vmul.f32 %v1658, 1.442695
    %v1660 = vpow.pop %v1659
    %v1661 = vadd.f32 %v1660, 1.0
    %v1662 = vrcp.pop %v1661
    %v1663 = vmul.f32 1.0, %v1662
    %v1664 = vsel %vm88, %v1657, %v1663
    %v1666 = vrot.slane %v1570, 6
    %v1668 = vmul.f32 %v1664, %v1666
    %1670 = vrot.lane.b32.xlu0 %v1664, 64
    %v1671 = vpop.permute.xlu0 %1670
    %v1673 = vmul.f32 %v1664, %v1671
    %1675 = vrot.lane.b32.xlu0 %v1673, 32
    %v1676 = vpop.permute.xlu0 %1675
    %v1678 = vadd.f32 %v1668, %v1676
    %v1679 = vtanh.pop %v1678
    %1681 = vrot.lane.b32.xlu0 %v1679, 64
    %v1682 = vpop.permute.xlu0 %1681
    %v1684 = vmul.f32 %v1664, %v1682
    %v1686 = vrot.slane %v1684, 4
    %1687 = vrot.lane.b32.xlu0 %v1686, 32
    %v1688 = vpop.permute.xlu0 %1687
    %v1689 = vsel %vm1188, %v1688, 0
    %1691 = vmatprep.subr.mxu0 0.0
    %1692 = vmatpush1.msra.mxu0 %v1368
    %1693 = vmatprep.subr.mxu0 0.0
    %1694 = vmatpush1.msra.mxu0 %v1369
    %1695 = vmatprep.subr.mxu0 0.0
    %1696 = vmatpush1.msra.mxu0 %v1370
    %1697 = vmatprep.subr.mxu0 0.0
    %1698 = vmatpush1.msra.mxu0 %v1371
    %1699 = vmatprep.subr.mxu0 0.0
    %1700 = vmatpush1.msra.mxu0 0.0
    %1701 = vmatprep.subr.mxu0 0.0
    %1702 = vmatpush1.msra.mxu0 0.0
    %1703 = vmatprep.subr.mxu0 0.0
    %1704 = vmatpush1.msra.mxu0 0.0
    %1705 = vmatprep.subr.mxu0 0.0
    %1706 = vmatpush1.msra.mxu0 0.0
    %1707 = vmatprep.subr.mxu0 0.0
    %1708 = vmatpush1.msra.mxu0 0.0
    %1709 = vmatprep.subr.mxu0 0.0
    %1710 = vmatpush1.msra.mxu0 0.0
    %1711 = vmatprep.subr.mxu0 0.0
    %1712 = vmatpush1.msra.mxu0 0.0
    %1713 = vmatprep.subr.mxu0 0.0
    %1714 = vmatpush1.msra.mxu0 0.0
    %1715 = vmatprep.subr.mxu0 0.0
    %1716 = vmatpush1.msra.mxu0 0.0
    %1717 = vmatprep.subr.mxu0 0.0
    %1718 = vmatpush1.msra.mxu0 0.0
    %1719 = vmatprep.subr.mxu0 0.0
    %1720 = vmatpush1.msra.mxu0 0.0
    %1721 = vmatprep.subr.mxu0 0.0
    %1722 = vmatpush1.msra.mxu0 0.0
    %1723 = vmatprep.subr.mxu0 0.0
    %1724 = vmatpush1.msra.mxu0 0.0
    %1725 = vmatprep.subr.mxu0 0.0
    %1726 = vmatpush1.msra.mxu0 0.0
    %1727 = vmatprep.subr.mxu0 0.0
    %1728 = vmatpush1.msra.mxu0 0.0
    %1729 = vmatprep.subr.mxu0 0.0
    %1730 = vmatpush1.msra.mxu0 0.0
    %1731 = vmatprep.subr.mxu0 0.0
    %1732 = vmatpush1.msra.mxu0 0.0
    %1733 = vmatprep.subr.mxu0 0.0
    %1734 = vmatpush1.msra.mxu0 0.0
    %1735 = vmatprep.subr.mxu0 0.0
    %1736 = vmatpush1.msra.mxu0 0.0
    %1737 = vmatprep.subr.mxu0 0.0
    %1738 = vmatpush1.msra.mxu0 0.0
    %1739 = vmatprep.subr.mxu0 0.0
    %1740 = vmatpush1.msra.mxu0 0.0
    %1741 = vmatprep.subr.mxu0 0.0
    %1742 = vmatpush1.msra.mxu0 0.0
    %1743 = vmatprep.subr.mxu0 0.0
    %1744 = vmatpush1.msra.mxu0 0.0
    %1745 = vmatprep.subr.mxu0 0.0
    %1746 = vmatpush1.msra.mxu0 0.0
    %1747 = vmatprep.subr.mxu0 0.0
    %1748 = vmatpush1.msra.mxu0 0.0
    %1749 = vmatprep.subr.mxu0 0.0
    %1750 = vmatpush1.msra.mxu0 0.0
    %1751 = vmatprep.subr.mxu0 0.0
    %1752 = vmatpush1.msra.mxu0 0.0
    %1753 = vmatprep.subr.mxu0 0.0
    %1754 = vmatpush1.msra.mxu0 0.0
    %1755 = vmatprep.mubr.f32.mxu0 0.0
    %1756 = vmatmul.mubr.f32.gmra.mrb[0].mxu0 %v1689
    %v1757 = vpop.f32.mrb[0].mxu0
    %v1758 = vadd.f32 0.0, %v1757
    %v1759 = vpop.f32.mrb[0].mxu0
    %1760 = vdwg.mxu0
    %v1762 = vrot.slane %v1758, 2
    %v1764 = vadd.f32 %v1365, %v1762
    %v1765 = vtanh.pop %v1764
    %v1766 = vxor.u32 %v1764, 2147483648
    %v1767 = vmul.f32 %v1766, 1.442695
    %v1768 = vpow.pop %v1767
    %v1769 = vadd.f32 %v1768, 1.0
    %v1770 = vrcp.pop %v1769
    %v1771 = vmul.f32 1.0, %v1770
    %v1772 = vsel %vm88, %v1765, %v1771
    %v1774 = vrot.slane %v1678, 6
    %v1776 = vmul.f32 %v1772, %v1774
    %1778 = vrot.lane.b32.xlu0 %v1772, 64
    %v1779 = vpop.permute.xlu0 %1778
    %v1781 = vmul.f32 %v1772, %v1779
    %1783 = vrot.lane.b32.xlu0 %v1781, 32
    %v1784 = vpop.permute.xlu0 %1783
    %v1786 = vadd.f32 %v1776, %v1784
    %v1787 = vtanh.pop %v1786
    %1789 = vrot.lane.b32.xlu0 %v1787, 64
    %v1790 = vpop.permute.xlu0 %1789
    %v1792 = vmul.f32 %v1772, %v1790
    %v1794 = vrot.slane %v1792, 6
    %1795 = vrot.lane.b32.xlu0 %v1794, 32
    %v1796 = vpop.permute.xlu0 %1795
    %v1797 = vsel %vm1188, %v1796, 0
    %1799 = vmatprep.subr.mxu0 0.0
    %1800 = vmatpush1.msra.mxu0 %v1368
    %1801 = vmatprep.subr.mxu0 0.0
    %1802 = vmatpush1.msra.mxu0 %v1369
    %1803 = vmatprep.subr.mxu0 0.0
    %1804 = vmatpush1.msra.mxu0 %v1370
    %1805 = vmatprep.subr.mxu0 0.0
    %1806 = vmatpush1.msra.mxu0 %v1371
    %1807 = vmatprep.subr.mxu0 0.0
    %1808 = vmatpush1.msra.mxu0 0.0
    %1809 = vmatprep.subr.mxu0 0.0
    %1810 = vmatpush1.msra.mxu0 0.0
    %1811 = vmatprep.subr.mxu0 0.0
    %1812 = vmatpush1.msra.mxu0 0.0
    %1813 = vmatprep.subr.mxu0 0.0
    %1814 = vmatpush1.msra.mxu0 0.0
    %1815 = vmatprep.subr.mxu0 0.0
    %1816 = vmatpush1.msra.mxu0 0.0
    %1817 = vmatprep.subr.mxu0 0.0
    %1818 = vmatpush1.msra.mxu0 0.0
    %1819 = vmatprep.subr.mxu0 0.0
    %1820 = vmatpush1.msra.mxu0 0.0
    %1821 = vmatprep.subr.mxu0 0.0
    %1822 = vmatpush1.msra.mxu0 0.0
    %1823 = vmatprep.subr.mxu0 0.0
    %1824 = vmatpush1.msra.mxu0 0.0
    %1825 = vmatprep.subr.mxu0 0.0
    %1826 = vmatpush1.msra.mxu0 0.0
    %1827 = vmatprep.subr.mxu0 0.0
    %1828 = vmatpush1.msra.mxu0 0.0
    %1829 = vmatprep.subr.mxu0 0.0
    %1830 = vmatpush1.msra.mxu0 0.0
    %1831 = vmatprep.subr.mxu0 0.0
    %1832 = vmatpush1.msra.mxu0 0.0
    %1833 = vmatprep.subr.mxu0 0.0
    %1834 = vmatpush1.msra.mxu0 0.0
    %1835 = vmatprep.subr.mxu0 0.0
    %1836 = vmatpush1.msra.mxu0 0.0
    %1837 = vmatprep.subr.mxu0 0.0
    %1838 = vmatpush1.msra.mxu0 0.0
    %1839 = vmatprep.subr.mxu0 0.0
    %1840 = vmatpush1.msra.mxu0 0.0
    %1841 = vmatprep.subr.mxu0 0.0
    %1842 = vmatpush1.msra.mxu0 0.0
    %1843 = vmatprep.subr.mxu0 0.0
    %1844 = vmatpush1.msra.mxu0 0.0
    %1845 = vmatprep.subr.mxu0 0.0
    %1846 = vmatpush1.msra.mxu0 0.0
    %1847 = vmatprep.subr.mxu0 0.0
    %1848 = vmatpush1.msra.mxu0 0.0
    %1849 = vmatprep.subr.mxu0 0.0
    %1850 = vmatpush1.msra.mxu0 0.0
    %1851 = vmatprep.subr.mxu0 0.0
    %1852 = vmatpush1.msra.mxu0 0.0
    %1853 = vmatprep.subr.mxu0 0.0
    %1854 = vmatpush1.msra.mxu0 0.0
    %1855 = vmatprep.subr.mxu0 0.0
    %1856 = vmatpush1.msra.mxu0 0.0
    %1857 = vmatprep.subr.mxu0 0.0
    %1858 = vmatpush1.msra.mxu0 0.0
    %1859 = vmatprep.subr.mxu0 0.0
    %1860 = vmatpush1.msra.mxu0 0.0
    %1861 = vmatprep.subr.mxu0 0.0
    %1862 = vmatpush1.msra.mxu0 0.0
    %1863 = vmatprep.mubr.f32.mxu0 0.0
    %1864 = vmatmul.mubr.f32.gmra.mrb[0].mxu0 %v1797
    %v1865 = vpop.f32.mrb[0].mxu0
    %v1866 = vadd.f32 0.0, %v1865
    %v1867 = vpop.f32.mrb[0].mxu0
    %1868 = vdwg.mxu0
    %v1869 = vadd.f32 %v1366, %v1866
    %v1870 = vtanh.pop %v1869
    %v1871 = vxor.u32 %v1869, 2147483648
    %v1872 = vmul.f32 %v1871, 1.442695
    %v1873 = vpow.pop %v1872
    %v1874 = vadd.f32 %v1873, 1.0
    %v1875 = vrcp.pop %v1874
    %v1876 = vmul.f32 1.0, %v1875
    %v1877 = vsel %vm88, %v1870, %v1876
    %v1879 = vrot.slane %v1786, 6
    %v1881 = vmul.f32 %v1877, %v1879
    %1883 = vrot.lane.b32.xlu0 %v1877, 64
    %v1884 = vpop.permute.xlu0 %1883
    %v1886 = vmul.f32 %v1877, %v1884
    %1888 = vrot.lane.b32.xlu0 %v1886, 32
    %v1889 = vpop.permute.xlu0 %1888
    %v1891 = vadd.f32 %v1881, %v1889
    %v1892 = vtanh.pop %v1891
    %1894 = vrot.lane.b32.xlu0 %v1892, 64
    %v1895 = vpop.permute.xlu0 %1894
    %v1897 = vmul.f32 %v1877, %v1895
    %1899 = vrot.lane.b32.xlu0 %v1897, 32
    %v1900 = vpop.permute.xlu0 %1899
    %v1901 = vsel %vm1188, %v1900, 0
    %1903 = vmatprep.subr.mxu0 0.0
    %1904 = vmatpush1.msra.mxu0 %v1368
    %1905 = vmatprep.subr.mxu0 0.0
    %1906 = vmatpush1.msra.mxu0 %v1369
    %1907 = vmatprep.subr.mxu0 0.0
    %1908 = vmatpush1.msra.mxu0 %v1370
    %1909 = vmatprep.subr.mxu0 0.0
    %1910 = vmatpush1.msra.mxu0 %v1371
    %1911 = vmatprep.subr.mxu0 0.0
    %1912 = vmatpush1.msra.mxu0 0.0
    %1913 = vmatprep.subr.mxu0 0.0
    %1914 = vmatpush1.msra.mxu0 0.0
    %1915 = vmatprep.subr.mxu0 0.0
    %1916 = vmatpush1.msra.mxu0 0.0
    %1917 = vmatprep.subr.mxu0 0.0
    %1918 = vmatpush1.msra.mxu0 0.0
    %1919 = vmatprep.subr.mxu0 0.0
    %1920 = vmatpush1.msra.mxu0 0.0
    %1921 = vmatprep.subr.mxu0 0.0
    %1922 = vmatpush1.msra.mxu0 0.0
    %1923 = vmatprep.subr.mxu0 0.0
    %1924 = vmatpush1.msra.mxu0 0.0
    %1925 = vmatprep.subr.mxu0 0.0
    %1926 = vmatpush1.msra.mxu0 0.0
    %1927 = vmatprep.subr.mxu0 0.0
    %1928 = vmatpush1.msra.mxu0 0.0
    %1929 = vmatprep.subr.mxu0 0.0
    %1930 = vmatpush1.msra.mxu0 0.0
    %1931 = vmatprep.subr.mxu0 0.0
    %1932 = vmatpush1.msra.mxu0 0.0
    %1933 = vmatprep.subr.mxu0 0.0
    %1934 = vmatpush1.msra.mxu0 0.0
    %1935 = vmatprep.subr.mxu0 0.0
    %1936 = vmatpush1.msra.mxu0 0.0
    %1937 = vmatprep.subr.mxu0 0.0
    %1938 = vmatpush1.msra.mxu0 0.0
    %1939 = vmatprep.subr.mxu0 0.0
    %1940 = vmatpush1.msra.mxu0 0.0
    %1941 = vmatprep.subr.mxu0 0.0
    %1942 = vmatpush1.msra.mxu0 0.0
    %1943 = vmatprep.subr.mxu0 0.0
    %1944 = vmatpush1.msra.mxu0 0.0
    %1945 = vmatprep.subr.mxu0 0.0
    %1946 = vmatpush1.msra.mxu0 0.0
    %1947 = vmatprep.subr.mxu0 0.0
    %1948 = vmatpush1.msra.mxu0 0.0
    %1949 = vmatprep.subr.mxu0 0.0
    %1950 = vmatpush1.msra.mxu0 0.0
    %1951 = vmatprep.subr.mxu0 0.0
    %1952 = vmatpush1.msra.mxu0 0.0
    %1953 = vmatprep.subr.mxu0 0.0
    %1954 = vmatpush1.msra.mxu0 0.0
    %1955 = vmatprep.subr.mxu0 0.0
    %1956 = vmatpush1.msra.mxu0 0.0
    %1957 = vmatprep.subr.mxu0 0.0
    %1958 = vmatpush1.msra.mxu0 0.0
    %1959 = vmatprep.subr.mxu0 0.0
    %1960 = vmatpush1.msra.mxu0 0.0
    %1961 = vmatprep.subr.mxu0 0.0
    %1962 = vmatpush1.msra.mxu0 0.0
    %1963 = vmatprep.subr.mxu0 0.0
    %1964 = vmatpush1.msra.mxu0 0.0
    %1965 = vmatprep.subr.mxu0 0.0
    %1966 = vmatpush1.msra.mxu0 0.0
    %1967 = vmatprep.mubr.f32.mxu0 0.0
    %1968 = vmatmul.mubr.f32.gmra.mrb[0].mxu0 %v1901
    %v1969 = vpop.f32.mrb[0].mxu0
    %v1970 = vadd.f32 0.0, %v1969
    %v1971 = vpop.f32.mrb[0].mxu0
    %1972 = vdwg.mxu0
    %v1974 = vrot.slane %v1970, 6
    %v1976 = vadd.f32 %v1366, %v1974
    %v1977 = vtanh.pop %v1976
    %v1978 = vxor.u32 %v1976, 2147483648
    %v1979 = vmul.f32 %v1978, 1.442695
    %v1980 = vpow.pop %v1979
    %v1981 = vadd.f32 %v1980, 1.0
    %v1982 = vrcp.pop %v1981
    %v1983 = vmul.f32 1.0, %v1982
    %v1984 = vsel %vm88, %v1977, %v1983
    %v1986 = vrot.slane %v1891, 6
    %v1988 = vmul.f32 %v1984, %v1986
    %1990 = vrot.lane.b32.xlu0 %v1984, 64
    %v1991 = vpop.permute.xlu0 %1990
    %v1993 = vmul.f32 %v1984, %v1991
    %1995 = vrot.lane.b32.xlu0 %v1993, 32
    %v1996 = vpop.permute.xlu0 %1995
    %v1998 = vadd.f32 %v1988, %v1996
    %v1999 = vtanh.pop %v1998
    %2001 = vrot.lane.b32.xlu0 %v1999, 64
    %v2002 = vpop.permute.xlu0 %2001
    %v2004 = vmul.f32 %v1984, %v2002
    %v2006 = vrot.slane %v2004, 2
    %2007 = vrot.lane.b32.xlu0 %v2006, 32
    %v2008 = vpop.permute.xlu0 %2007
    %v2009 = vsel %vm1188, %v2008, 0
    %2011 = vmatprep.subr.mxu0 0.0
    %2012 = vmatpush1.msra.mxu0 %v1368
    %2013 = vmatprep.subr.mxu0 0.0
    %2014 = vmatpush1.msra.mxu0 %v1369
    %2015 = vmatprep.subr.mxu0 0.0
    %2016 = vmatpush1.msra.mxu0 %v1370
    %2017 = vmatprep.subr.mxu0 0.0
    %2018 = vmatpush1.msra.mxu0 %v1371
    %2019 = vmatprep.subr.mxu0 0.0
    %2020 = vmatpush1.msra.mxu0 0.0
    %2021 = vmatprep.subr.mxu0 0.0
    %2022 = vmatpush1.msra.mxu0 0.0
    %2023 = vmatprep.subr.mxu0 0.0
    %2024 = vmatpush1.msra.mxu0 0.0
    %2025 = vmatprep.subr.mxu0 0.0
    %2026 = vmatpush1.msra.mxu0 0.0
    %2027 = vmatprep.subr.mxu0 0.0
    %2028 = vmatpush1.msra.mxu0 0.0
    %2029 = vmatprep.subr.mxu0 0.0
    %2030 = vmatpush1.msra.mxu0 0.0
    %2031 = vmatprep.subr.mxu0 0.0
    %2032 = vmatpush1.msra.mxu0 0.0
    %2033 = vmatprep.subr.mxu0 0.0
    %2034 = vmatpush1.msra.mxu0 0.0
    %2035 = vmatprep.subr.mxu0 0.0
    %2036 = vmatpush1.msra.mxu0 0.0
    %2037 = vmatprep.subr.mxu0 0.0
    %2038 = vmatpush1.msra.mxu0 0.0
    %2039 = vmatprep.subr.mxu0 0.0
    %2040 = vmatpush1.msra.mxu0 0.0
    %2041 = vmatprep.subr.mxu0 0.0
    %2042 = vmatpush1.msra.mxu0 0.0
    %2043 = vmatprep.subr.mxu0 0.0
    %2044 = vmatpush1.msra.mxu0 0.0
    %2045 = vmatprep.subr.mxu0 0.0
    %2046 = vmatpush1.msra.mxu0 0.0
    %2047 = vmatprep.subr.mxu0 0.0
    %2048 = vmatpush1.msra.mxu0 0.0
    %2049 = vmatprep.subr.mxu0 0.0
    %2050 = vmatpush1.msra.mxu0 0.0
    %2051 = vmatprep.subr.mxu0 0.0
    %2052 = vmatpush1.msra.mxu0 0.0
    %2053 = vmatprep.subr.mxu0 0.0
    %2054 = vmatpush1.msra.mxu0 0.0
    %2055 = vmatprep.subr.mxu0 0.0
    %2056 = vmatpush1.msra.mxu0 0.0
    %2057 = vmatprep.subr.mxu0 0.0
    %2058 = vmatpush1.msra.mxu0 0.0
    %2059 = vmatprep.subr.mxu0 0.0
    %2060 = vmatpush1.msra.mxu0 0.0
    %2061 = vmatprep.subr.mxu0 0.0
    %2062 = vmatpush1.msra.mxu0 0.0
    %2063 = vmatprep.subr.mxu0 0.0
    %2064 = vmatpush1.msra.mxu0 0.0
    %2065 = vmatprep.subr.mxu0 0.0
    %2066 = vmatpush1.msra.mxu0 0.0
    %2067 = vmatprep.subr.mxu0 0.0
    %2068 = vmatpush1.msra.mxu0 0.0
    %2069 = vmatprep.subr.mxu0 0.0
    %2070 = vmatpush1.msra.mxu0 0.0
    %2071 = vmatprep.subr.mxu0 0.0
    %2072 = vmatpush1.msra.mxu0 0.0
    %2073 = vmatprep.subr.mxu0 0.0
    %2074 = vmatpush1.msra.mxu0 0.0
    %2075 = vmatprep.mubr.f32.mxu0 0.0
    %2076 = vmatmul.mubr.f32.gmra.mrb[0].mxu0 %v2009
    %v2077 = vpop.f32.mrb[0].mxu0
    %v2078 = vadd.f32 0.0, %v2077
    %v2079 = vpop.f32.mrb[0].mxu0
    %2080 = vdwg.mxu0
    %v2082 = vrot.slane %v2078, 4
    %v2084 = vadd.f32 %v1366, %v2082
    %v2085 = vtanh.pop %v2084
    %v2086 = vxor.u32 %v2084, 2147483648
    %v2087 = vmul.f32 %v2086, 1.442695
    %v2088 = vpow.pop %v2087
    %v2089 = vadd.f32 %v2088, 1.0
    %v2090 = vrcp.pop %v2089
    %v2091 = vmul.f32 1.0, %v2090
    %v2092 = vsel %vm88, %v2085, %v2091
    %v2094 = vrot.slane %v1998, 6
    %v2096 = vmul.f32 %v2092, %v2094
    %2098 = vrot.lane.b32.xlu0 %v2092, 64
    %v2099 = vpop.permute.xlu0 %2098
    %v2101 = vmul.f32 %v2092, %v2099
    %2103 = vrot.lane.b32.xlu0 %v2101, 32
    %v2104 = vpop.permute.xlu0 %2103
    %v2106 = vadd.f32 %v2096, %v2104
    %v2107 = vtanh.pop %v2106
    %2109 = vrot.lane.b32.xlu0 %v2107, 64
    %v2110 = vpop.permute.xlu0 %2109
    %v2112 = vmul.f32 %v2092, %v2110
    %v2114 = vrot.slane %v2112, 4
    %2115 = vrot.lane.b32.xlu0 %v2114, 32
    %v2116 = vpop.permute.xlu0 %2115
    %v2117 = vsel %vm1188, %v2116, 0
    %2119 = vmatprep.subr.mxu0 0.0
    %2120 = vmatpush1.msra.mxu0 %v1368
    %2121 = vmatprep.subr.mxu0 0.0
    %2122 = vmatpush1.msra.mxu0 %v1369
    %2123 = vmatprep.subr.mxu0 0.0
    %2124 = vmatpush1.msra.mxu0 %v1370
    %2125 = vmatprep.subr.mxu0 0.0
    %2126 = vmatpush1.msra.mxu0 %v1371
    %2127 = vmatprep.subr.mxu0 0.0
    %2128 = vmatpush1.msra.mxu0 0.0
    %2129 = vmatprep.subr.mxu0 0.0
    %2130 = vmatpush1.msra.mxu0 0.0
    %2131 = vmatprep.subr.mxu0 0.0
    %2132 = vmatpush1.msra.mxu0 0.0
    %2133 = vmatprep.subr.mxu0 0.0
    %2134 = vmatpush1.msra.mxu0 0.0
    %2135 = vmatprep.subr.mxu0 0.0
    %2136 = vmatpush1.msra.mxu0 0.0
    %2137 = vmatprep.subr.mxu0 0.0
    %2138 = vmatpush1.msra.mxu0 0.0
    %2139 = vmatprep.subr.mxu0 0.0
    %2140 = vmatpush1.msra.mxu0 0.0
    %2141 = vmatprep.subr.mxu0 0.0
    %2142 = vmatpush1.msra.mxu0 0.0
    %2143 = vmatprep.subr.mxu0 0.0
    %2144 = vmatpush1.msra.mxu0 0.0
    %2145 = vmatprep.subr.mxu0 0.0
    %2146 = vmatpush1.msra.mxu0 0.0
    %2147 = vmatprep.subr.mxu0 0.0
    %2148 = vmatpush1.msra.mxu0 0.0
    %2149 = vmatprep.subr.mxu0 0.0
    %2150 = vmatpush1.msra.mxu0 0.0
    %2151 = vmatprep.subr.mxu0 0.0
    %2152 = vmatpush1.msra.mxu0 0.0
    %2153 = vmatprep.subr.mxu0 0.0
    %2154 = vmatpush1.msra.mxu0 0.0
    %2155 = vmatprep.subr.mxu0 0.0
    %2156 = vmatpush1.msra.mxu0 0.0
    %2157 = vmatprep.subr.mxu0 0.0
    %2158 = vmatpush1.msra.mxu0 0.0
    %2159 = vmatprep.subr.mxu0 0.0
    %2160 = vmatpush1.msra.mxu0 0.0
    %2161 = vmatprep.subr.mxu0 0.0
    %2162 = vmatpush1.msra.mxu0 0.0
    %2163 = vmatprep.subr.mxu0 0.0
    %2164 = vmatpush1.msra.mxu0 0.0
    %2165 = vmatprep.subr.mxu0 0.0
    %2166 = vmatpush1.msra.mxu0 0.0
    %2167 = vmatprep.subr.mxu0 0.0
    %2168 = vmatpush1.msra.mxu0 0.0
    %2169 = vmatprep.subr.mxu0 0.0
    %2170 = vmatpush1.msra.mxu0 0.0
    %2171 = vmatprep.subr.mxu0 0.0
    %2172 = vmatpush1.msra.mxu0 0.0
    %2173 = vmatprep.subr.mxu0 0.0
    %2174 = vmatpush1.msra.mxu0 0.0
    %2175 = vmatprep.subr.mxu0 0.0
    %2176 = vmatpush1.msra.mxu0 0.0
    %2177 = vmatprep.subr.mxu0 0.0
    %2178 = vmatpush1.msra.mxu0 0.0
    %2179 = vmatprep.subr.mxu0 0.0
    %2180 = vmatpush1.msra.mxu0 0.0
    %2181 = vmatprep.subr.mxu0 0.0
    %2182 = vmatpush1.msra.mxu0 0.0
    %2183 = vmatprep.mubr.f32.mxu0 0.0
    %2184 = vmatmul.mubr.f32.gmra.mrb[0].mxu0 %v2117
    %v2185 = vpop.f32.mrb[0].mxu0
    %v2186 = vadd.f32 0.0, %v2185
    %v2187 = vpop.f32.mrb[0].mxu0
    %2188 = vdwg.mxu0
    %v2190 = vrot.slane %v2186, 2
    %v2192 = vadd.f32 %v1366, %v2190
    %v2193 = vtanh.pop %v2192
    %v2194 = vxor.u32 %v2192, 2147483648
    %v2195 = vmul.f32 %v2194, 1.442695
    %v2196 = vpow.pop %v2195
    %v2197 = vadd.f32 %v2196, 1.0
    %v2198 = vrcp.pop %v2197
    %v2199 = vmul.f32 1.0, %v2198
    %v2200 = vsel %vm88, %v2193, %v2199
    %v2202 = vrot.slane %v2106, 6
    %v2204 = vmul.f32 %v2200, %v2202
    %2206 = vrot.lane.b32.xlu0 %v2200, 64
    %v2207 = vpop.permute.xlu0 %2206
    %v2209 = vmul.f32 %v2200, %v2207
    %2211 = vrot.lane.b32.xlu0 %v2209, 32
    %v2212 = vpop.permute.xlu0 %2211
    %v2214 = vadd.f32 %v2204, %v2212
    %v2215 = vtanh.pop %v2214
    %2217 = vrot.lane.b32.xlu0 %v2215, 64
    %v2218 = vpop.permute.xlu0 %2217
    %v2220 = vmul.f32 %v2200, %v2218
    %v2221 = vtanh.pop %v1367
    %v2222 = vxor.u32 %v1367, 2147483648
    %v2223 = vmul.f32 %v2222, 1.442695
    %v2224 = vpow.pop %v2223
    %v2225 = vadd.f32 %v2224, 1.0
    %v2226 = vrcp.pop %v2225
    %v2227 = vmul.f32 1.0, %v2226
    %v2228 = vsel %vm88, %v2221, %v2227
    %v2229 = vmul.f32 %v2228, 0.0
    %2231 = vrot.lane.b32.xlu0 %v2228, 64
    %v2232 = vpop.permute.xlu0 %2231
    %v2234 = vmul.f32 %v2228, %v2232
    %2236 = vrot.lane.b32.xlu0 %v2234, 32
    %v2237 = vpop.permute.xlu0 %2236
    %v2239 = vadd.f32 %v2229, %v2237
    %v2240 = vtanh.pop %v2239
    %2242 = vrot.lane.b32.xlu0 %v2240, 64
    %v2243 = vpop.permute.xlu0 %2242
    %v2245 = vmul.f32 %v2228, %v2243
    %v2246 = vld [vmem:[%s8] sm:$0xff]
    %v2247 = vld [vmem:[%s8 + $0x8] sm:$0xff]
    %v2248 = vld [vmem:[%s8 + $0x10] sm:$0xff]
    %v2249 = vld [vmem:[%s8 + $0x18] sm:$0xff]
    %v2250 = vld [vmem:[%s8 + $0x20] sm:$0xff]
    %v2251 = vld [vmem:[%s8 + $0x28] sm:$0xff]
    %v2252 = vld [vmem:[%s8 + $0x30] sm:$0xff]
    %v2253 = vld [vmem:[%s8 + $0x38] sm:$0xff]
    %v2254 = vtanh.pop %v2220
    %v2255 = vtanh.pop %v2245
    %v2257 = vrot.slane %v2255, 6
    %2258 = vrot.lane.b32.xlu0 %v2257, 32
    %v2259 = vpop.permute.xlu0 %2258
    %v2260 = vsel %vm1188, %v2259, 0
    %2262 = vmatprep.subr.mxu0 0.0
    %2263 = vmatpush1.msra.mxu0 %v2250
    %2264 = vmatprep.subr.mxu0 0.0
    %2265 = vmatpush1.msra.mxu0 %v2251
    %2266 = vmatprep.subr.mxu0 0.0
    %2267 = vmatpush1.msra.mxu0 %v2252
    %2268 = vmatprep.subr.mxu0 0.0
    %2269 = vmatpush1.msra.mxu0 %v2253
    %2270 = vmatprep.subr.mxu0 0.0
    %2271 = vmatpush1.msra.mxu0 0.0
    %2272 = vmatprep.subr.mxu0 0.0
    %2273 = vmatpush1.msra.mxu0 0.0
    %2274 = vmatprep.subr.mxu0 0.0
    %2275 = vmatpush1.msra.mxu0 0.0
    %2276 = vmatprep.subr.mxu0 0.0
    %2277 = vmatpush1.msra.mxu0 0.0
    %2278 = vmatprep.subr.mxu0 0.0
    %2279 = vmatpush1.msra.mxu0 0.0
    %2280 = vmatprep.subr.mxu0 0.0
    %2281 = vmatpush1.msra.mxu0 0.0
    %2282 = vmatprep.subr.mxu0 0.0
    %2283 = vmatpush1.msra.mxu0 0.0
    %2284 = vmatprep.subr.mxu0 0.0
    %2285 = vmatpush1.msra.mxu0 0.0
    %2286 = vmatprep.subr.mxu0 0.0
    %2287 = vmatpush1.msra.mxu0 0.0
    %2288 = vmatprep.subr.mxu0 0.0
    %2289 = vmatpush1.msra.mxu0 0.0
    %2290 = vmatprep.subr.mxu0 0.0
    %2291 = vmatpush1.msra.mxu0 0.0
    %2292 = vmatprep.subr.mxu0 0.0
    %2293 = vmatpush1.msra.mxu0 0.0
    %2294 = vmatprep.subr.mxu0 0.0
    %2295 = vmatpush1.msra.mxu0 0.0
    %2296 = vmatprep.subr.mxu0 0.0
    %2297 = vmatpush1.msra.mxu0 0.0
    %2298 = vmatprep.subr.mxu0 0.0
    %2299 = vmatpush1.msra.mxu0 0.0
    %2300 = vmatprep.subr.mxu0 0.0
    %2301 = vmatpush1.msra.mxu0 0.0
    %2302 = vmatprep.subr.mxu0 0.0
    %2303 = vmatpush1.msra.mxu0 0.0
    %2304 = vmatprep.subr.mxu0 0.0
    %2305 = vmatpush1.msra.mxu0 0.0
    %2306 = vmatprep.subr.mxu0 0.0
    %2307 = vmatpush1.msra.mxu0 0.0
    %2308 = vmatprep.subr.mxu0 0.0
    %2309 = vmatpush1.msra.mxu0 0.0
    %2310 = vmatprep.subr.mxu0 0.0
    %2311 = vmatpush1.msra.mxu0 0.0
    %2312 = vmatprep.subr.mxu0 0.0
    %2313 = vmatpush1.msra.mxu0 0.0
    %2314 = vmatprep.subr.mxu0 0.0
    %2315 = vmatpush1.msra.mxu0 0.0
    %2316 = vmatprep.subr.mxu0 0.0
    %2317 = vmatpush1.msra.mxu0 0.0
    %2318 = vmatprep.subr.mxu0 0.0
    %2319 = vmatpush1.msra.mxu0 0.0
    %2320 = vmatprep.subr.mxu0 0.0
    %2321 = vmatpush1.msra.mxu0 0.0
    %2322 = vmatprep.subr.mxu0 0.0
    %2323 = vmatpush1.msra.mxu0 0.0
    %2324 = vmatprep.subr.mxu0 0.0
    %2325 = vmatpush1.msra.mxu0 0.0
    %2326 = vmatprep.mubr.f32.mxu0 0.0
    %2327 = vmatmul.mubr.f32.gmra.mrb[0].mxu0 %v2260
    %v2328 = vpop.f32.mrb[0].mxu0
    %v2329 = vadd.f32 0.0, %v2328
    %v2330 = vpop.f32.mrb[0].mxu0
    %2331 = vdwg.mxu0
    %v2333 = vrot.slane %v2254, 6
    %2334 = vrot.lane.b32.xlu0 %v2333, 32
    %v2335 = vpop.permute.xlu0 %2334
    %v2336 = vsel %vm1188, %v2335, 0
    %2338 = vmatprep.subr.mxu0 0.0
    %2339 = vmatpush1.msra.mxu0 %v2246
    %2340 = vmatprep.subr.mxu0 0.0
    %2341 = vmatpush1.msra.mxu0 %v2247
    %2342 = vmatprep.subr.mxu0 0.0
    %2343 = vmatpush1.msra.mxu0 %v2248
    %2344 = vmatprep.subr.mxu0 0.0
    %2345 = vmatpush1.msra.mxu0 %v2249
    %2346 = vmatprep.subr.mxu0 0.0
    %2347 = vmatpush1.msra.mxu0 0.0
    %2348 = vmatprep.subr.mxu0 0.0
    %2349 = vmatpush1.msra.mxu0 0.0
    %2350 = vmatprep.subr.mxu0 0.0
    %2351 = vmatpush1.msra.mxu0 0.0
    %2352 = vmatprep.subr.mxu0 0.0
    %2353 = vmatpush1.msra.mxu0 0.0
    %2354 = vmatprep.subr.mxu0 0.0
    %2355 = vmatpush1.msra.mxu0 0.0
    %2356 = vmatprep.subr.mxu0 0.0
    %2357 = vmatpush1.msra.mxu0 0.0
    %2358 = vmatprep.subr.mxu0 0.0
    %2359 = vmatpush1.msra.mxu0 0.0
    %2360 = vmatprep.subr.mxu0 0.0
    %2361 = vmatpush1.msra.mxu0 0.0
    %2362 = vmatprep.subr.mxu0 0.0
    %2363 = vmatpush1.msra.mxu0 0.0
    %2364 = vmatprep.subr.mxu0 0.0
    %2365 = vmatpush1.msra.mxu0 0.0
    %2366 = vmatprep.subr.mxu0 0.0
    %2367 = vmatpush1.msra.mxu0 0.0
    %2368 = vmatprep.subr.mxu0 0.0
    %2369 = vmatpush1.msra.mxu0 0.0
    %2370 = vmatprep.subr.mxu0 0.0
    %2371 = vmatpush1.msra.mxu0 0.0
    %2372 = vmatprep.subr.mxu0 0.0
    %2373 = vmatpush1.msra.mxu0 0.0
    %2374 = vmatprep.subr.mxu0 0.0
    %2375 = vmatpush1.msra.mxu0 0.0
    %2376 = vmatprep.subr.mxu0 0.0
    %2377 = vmatpush1.msra.mxu0 0.0
    %2378 = vmatprep.subr.mxu0 0.0
    %2379 = vmatpush1.msra.mxu0 0.0
    %2380 = vmatprep.subr.mxu0 0.0
    %2381 = vmatpush1.msra.mxu0 0.0
    %2382 = vmatprep.subr.mxu0 0.0
    %2383 = vmatpush1.msra.mxu0 0.0
    %2384 = vmatprep.subr.mxu0 0.0
    %2385 = vmatpush1.msra.mxu0 0.0
    %2386 = vmatprep.subr.mxu0 0.0
    %2387 = vmatpush1.msra.mxu0 0.0
    %2388 = vmatprep.subr.mxu0 0.0
    %2389 = vmatpush1.msra.mxu0 0.0
    %2390 = vmatprep.subr.mxu0 0.0
    %2391 = vmatpush1.msra.mxu0 0.0
    %2392 = vmatprep.subr.mxu0 0.0
    %2393 = vmatpush1.msra.mxu0 0.0
    %2394 = vmatprep.subr.mxu0 0.0
    %2395 = vmatpush1.msra.mxu0 0.0
    %2396 = vmatprep.subr.mxu0 0.0
    %2397 = vmatpush1.msra.mxu0 0.0
    %2398 = vmatprep.subr.mxu0 0.0
    %2399 = vmatpush1.msra.mxu0 0.0
    %2400 = vmatprep.subr.mxu0 0.0
    %2401 = vmatpush1.msra.mxu0 0.0
    %2402 = vmatprep.mubr.f32.mxu0 0.0
    %2403 = vmatmul.mubr.f32.gmra.mrb[0].mxu0 %v2336
    %v2404 = vpop.f32.mrb[0].mxu0
    %v2405 = vadd.f32 %v2329, %v2404
    %v2406 = vpop.f32.mrb[0].mxu0
    %2407 = vdwg.mxu0
    %v2408 = vld [vmem:[%s9] sm:$0x1]
    %v2410 = vlaneseq
    %v2411 = vshrl.u32 %v2410, 7
    %v2412 = vsub.s32 0, %v2411
    %v2413 = vrot.slane %v2408, %v2412
    %v2415 = vadd.f32 %v2405, %v2413
    %vm2416 = vcmask 25600
    %2417 = vst.msk [vmem:[#allocation10] sm:$0x3] %vm2416, %v2415
    // Predicated region
    $region54: #{text_rnn_forward.1} parent=1 // pred_check
      _
    $region55: #{text_rnn_forward.1} parent=1 // pred_check_branch
      %2419 = sbr.rel (0) target = $region57
    $region56: #{text_rnn_forward.1} parent=1 // pred_region
      %s2421 = ssub.s32 32, 32
      %2422 = vsyncadd [#allocation6], %s2421
      %s2424 = sshll.u32 [#allocation10], 4
      %s2425 = int_to_ptr.vmem [resolvable:$true] %s2424
      %2427 = dma.vmem_to_hbm [thread:$0]  %s2425, 32, %s10, [#allocation6]
    $region57: #{text_rnn_forward.1} parent=1 // pred_fallthru
      _
    // Predicated region
    $region58: #{text_rnn_forward.1} parent=1 // pred_check
      _
    $region59: #{text_rnn_forward.1} parent=1 // pred_check_branch
      %2429 = sbr.rel (0) target = $region61
    $region60: #{text_rnn_forward.1} parent=1 // pred_region
      %2430 = dma.done [#allocation6], 32
    $region61: #{text_rnn_forward.1} parent=1 // pred_fallthru
      _
    %2431 = vsyncpa [#allocation5], 1
    %2432 = vsyncpa [#allocation8], 1
    %2433 = vsyncpa [#allocation6], 1

</llo_original>
